<compile_context>
chip_gen: v5e
topology: v5e:2x2
jax: 0.10.0
libtpu: 0.0.40
codegen_flags: <defaults>
</compile_context>

<pallas_src>
import functools

import jax
import jax.numpy as jnp
from jax.experimental import pallas as pl
from jax.experimental.pallas import tpu as pltpu

LANE = 128
EPS = 1e-5


def _round_up(x, n):
    return ((x + n - 1) // n) * n


def _tpu_vmem_bytes():
    try:
        return int(pltpu.get_tpu_info().vmem_capacity_bytes)
    except Exception:
        return 64 * 1024 * 1024


_VMEM_BYTES = _tpu_vmem_bytes()
# Scoped VMEM we request: generous on 128-MiB parts (v5e/v6e), capped on v7x.
_VMEM_LIMIT = min(_VMEM_BYTES // 2, 64 * 1024 * 1024)
# Row tile for the flattened (M, C) kernels.
ROW_TILE = 2048 if _VMEM_BYTES >= 96 * 1024 * 1024 else 1024


# ----------------------------------------------------------------------------
# Tiling heuristics
# ----------------------------------------------------------------------------
def _fits_strip(th, w, cin, cout, budget):
    weights = 9 * cin * cout * 2 * 2                  # bf16 taps, double buffered
    scratch = (th + 2) * (w + 2) * cin * 4            # f32 assembly scratch
    views = (th + 2) * (w + 2) * cin * 2 * 4          # bf16 copy + shifted views
    xio = th * w * cin * (2 * 2 + 4)                  # bf16 x (x2) + f32 affine temp
    oio = th * w * cout * (4 + 2 * 2)                 # f32 acc + bf16 out (x2)
    halo = 2 * w * cin * (2 * 2 + 4)
    return weights + scratch + views + xio + oio + halo <= budget


def _pick_strip_rows(h, w, cin, cout, strip_rows=None):
    """Largest divisor of H whose strip working set fits the VMEM budget."""
    if strip_rows is not None and h % strip_rows == 0 and (strip_rows * w) % 8 == 0:
        return strip_rows
    budget = (_VMEM_LIMIT * 3) // 5
    legal = [t for t in range(1, h + 1) if h % t == 0 and (t * w) % 8 == 0]
    if not legal:
        return h                                       # full-extent blocks: always layout-legal
    best = legal[0]
    for t in legal:
        if _fits_strip(t, w, cin, cout, budget):
            best = t
    return best


def _pick_row_tile(m):
    """Largest divisor of M that is a multiple of 8 and <= ROW_TILE (no HBM pad)."""
    best = 0
    for t in range(8, min(m, ROW_TILE) + 1, 8):
        if m % t == 0:
            best = t
    if best:
        return best, m
    tm = min(ROW_TILE, _round_up(m, 8))
    return tm, _round_up(m, tm)


# ----------------------------------------------------------------------------
# Pallas kernels
# ----------------------------------------------------------------------------
def _conv3x3_kernel(x_ref, top_ref, bot_ref, s_ref, b_ref, w_ref,
                    o_ref, sum_ref, sq_ref, pad_ref, *, th, ww, relu):
    """[BN-apply(+ReLU) prologue] -> 3x3 conv over one H strip -> [partial stats].

    x_ref   : (TH, W, Cin)   raw (pre-BN) activation strip, bf16
    top_ref : (1, W, Cin)    row above the strip (clamped at the image border)
    bot_ref : (1, W, Cin)    row below the strip (clamped at the image border)
    s_ref, b_ref : (1, Cin)  previous layer's BN affine (or identity)
    w_ref   : (9, Cin, Cout) bf16 weight taps, t = kh*3 + kw
    o_ref   : (TH*W, Cout)   raw conv output, bf16
    sum_ref, sq_ref : (1, Cout) per-strip partial sums (f32)
    pad_ref : VMEM (TH+2, W+2, Cin) f32 scratch, fully rewritten every step
    """
    cin = x_ref.shape[-1]
    cout = o_ref.shape[-1]
    ih = pl.program_id(1)
    n_strips = pl.num_programs(1)

    s = s_ref[...]
    b = b_ref[...]

    def prologue(v):
        a = v.astype(jnp.float32) * s + b
        if relu:
            a = jnp.maximum(a, 0.0)
        return a

    a_mid = prologue(x_ref[...])                               # (TH, W, Cin) f32
    top_ok = (ih > 0).astype(jnp.float32)                      # image-border halos -> 0
    bot_ok = (ih < n_strips - 1).astype(jnp.float32)
    a_top = prologue(top_ref[...]) * top_ok                    # (1, W, Cin)
    a_bot = prologue(bot_ref[...]) * bot_ok

    # Assemble the spatially padded conv input (zeros in the conv domain) in VMEM.
    zcol = jnp.zeros((th + 2, 1, cin), jnp.float32)
    pad_ref[:, 0:1, :] = zcol
    pad_ref[:, ww + 1:ww + 2, :] = zcol
    pad_ref[0:1, 1:ww + 1, :] = a_top
    pad_ref[1:th + 1, 1:ww + 1, :] = a_mid
    pad_ref[th + 1:th + 2, 1:ww + 1, :] = a_bot

    ap = pad_ref[...].astype(jnp.bfloat16)                     # (TH+2, W+2, Cin)

    acc = jnp.zeros((th * ww, cout), jnp.float32)
    for kw in range(3):                                        # 3 W-shifted views only
        s_kw = ap[:, kw:kw + ww, :]
        for kh in range(3):                                    # cheap leading-dim slices
            patch = s_kw[kh:kh + th].reshape(th * ww, cin)
            acc = acc + jnp.dot(patch, w_ref[kh * 3 + kw],
                                preferred_element_type=jnp.float32)

    o_ref[...] = acc.astype(o_ref.dtype)
    sum_ref[...] = jnp.sum(acc, axis=0, keepdims=True)
    sq_ref[...] = jnp.sum(acc * acc, axis=0, keepdims=True)


def fused_conv3x3(x, scale, bias, w9, *, relu, strip_rows=None):
    """x: (N, H, W, Cin) bf16 (unpadded) -> ((N, H*W, Cout) bf16, partial stats)."""
    n, h, w, cin = x.shape
    cout = w9.shape[-1]
    th = _pick_strip_rows(h, w, cin, cout, strip_rows)
    ns = h // th
    kernel = functools.partial(_conv3x3_kernel, th=th, ww=w, relu=relu)
    out, ssum, ssq = pl.pallas_call(
        kernel,
        out_shape=(jax.ShapeDtypeStruct((n, h * w, cout), jnp.bfloat16),
                   jax.ShapeDtypeStruct((n * ns, 1, cout), jnp.float32),
                   jax.ShapeDtypeStruct((n * ns, 1, cout), jnp.float32)),
        grid=(n, ns),
        in_specs=[
            pl.BlockSpec((None, th, w, cin), lambda bb, ii: (bb, ii, 0, 0)),
            pl.BlockSpec((None, 1, w, cin),
                         lambda bb, ii: (bb, jnp.maximum(ii * th - 1, 0), 0, 0)),
            pl.BlockSpec((None, 1, w, cin),
                         lambda bb, ii: (bb, jnp.minimum((ii + 1) * th, h - 1), 0, 0)),
            pl.BlockSpec((1, cin), lambda bb, ii: (0, 0)),
            pl.BlockSpec((1, cin), lambda bb, ii: (0, 0)),
            pl.BlockSpec((9, cin, cout), lambda bb, ii: (0, 0, 0)),
        ],
        out_specs=(
            pl.BlockSpec((None, th * w, cout), lambda bb, ii: (bb, ii, 0)),
            pl.BlockSpec((None, 1, cout), lambda bb, ii: (bb * ns + ii, 0, 0)),
            pl.BlockSpec((None, 1, cout), lambda bb, ii: (bb * ns + ii, 0, 0)),
        ),
        scratch_shapes=[pltpu.VMEM((th + 2, w + 2, cin), jnp.float32)],
        compiler_params=pltpu.CompilerParams(
            dimension_semantics=("parallel", "parallel"),
            vmem_limit_bytes=_VMEM_LIMIT),
    )(x, x, x, scale, bias, w9)
    return out, (ssum, ssq)


def _conv1x1_kernel(x_ref, s_ref, b_ref, w_ref, o_ref, sum_ref, sq_ref, *,
                    relu, tm, m_real, masked):
    a = x_ref[...].astype(jnp.float32) * s_ref[...] + b_ref[...]
    if relu:
        a = jnp.maximum(a, 0.0)
    if masked:   # padded tail rows -> zero so stats / dot stay exact
        row = (jax.lax.broadcasted_iota(jnp.int32, (tm, 1), 0)
               + pl.program_id(0) * tm)
        a = jnp.where(row < m_real, a, 0.0)
    acc = jnp.dot(a.astype(jnp.bfloat16), w_ref[...],
                  preferred_element_type=jnp.float32)
    o_ref[...] = acc.astype(o_ref.dtype)
    sum_ref[...] = jnp.sum(acc, axis=0, keepdims=True)
    sq_ref[...] = jnp.sum(acc * acc, axis=0, keepdims=True)


def _conv1x1_lat_kernel(x_ref, s_ref, b_ref, w_ref, y_ref, wy_ref,
                        o_ref, sum_ref, sq_ref, *, relu, tm, m_real, masked):
    a = x_ref[...].astype(jnp.float32) * s_ref[...] + b_ref[...]
    if relu:
        a = jnp.maximum(a, 0.0)
    if masked:
        row = (jax.lax.broadcasted_iota(jnp.int32, (tm, 1), 0)
               + pl.program_id(0) * tm)
        a = jnp.where(row < m_real, a, 0.0)
    acc = jnp.dot(a.astype(jnp.bfloat16), w_ref[...],
                  preferred_element_type=jnp.float32)
    acc = acc + jnp.dot(y_ref[...].astype(jnp.bfloat16), wy_ref[...],
                        preferred_element_type=jnp.float32)
    o_ref[...] = acc.astype(o_ref.dtype)
    sum_ref[...] = jnp.sum(acc, axis=0, keepdims=True)
    sq_ref[...] = jnp.sum(acc * acc, axis=0, keepdims=True)


def fused_conv1x1(x, scale, bias, wmat, *, relu, lateral=None):
    """x: (M, Cin) bf16, wmat: (Cin, Cout) bf16 -> ((M, Cout) bf16, partial stats).

    `lateral=(y, wy)` adds a second (un-normalized) operand without an HBM concat.
    """
    m, cin = x.shape
    cout = wmat.shape[-1]
    tm, mp = _pick_row_tile(m)
    masked = mp != m
    if masked:
        x = jnp.pad(x, ((0, mp - m), (0, 0)))
    nblk = mp // tm
    args = [x, scale, bias, wmat]
    in_specs = [pl.BlockSpec((tm, cin), lambda i: (i, 0)),
                pl.BlockSpec((1, cin), lambda i: (0, 0)),
                pl.BlockSpec((1, cin), lambda i: (0, 0)),
                pl.BlockSpec((cin, cout), lambda i: (0, 0))]
    if lateral is not None:
        ylat, wlat = lateral
        clat = ylat.shape[-1]
        if masked:
            ylat = jnp.pad(ylat, ((0, mp - m), (0, 0)))
        args += [ylat, wlat]
        in_specs += [pl.BlockSpec((tm, clat), lambda i: (i, 0)),
                     pl.BlockSpec((clat, cout), lambda i: (0, 0))]
        kernel = functools.partial(_conv1x1_lat_kernel, relu=relu, tm=tm,
                                   m_real=m, masked=masked)
    else:
        kernel = functools.partial(_conv1x1_kernel, relu=relu, tm=tm,
                                   m_real=m, masked=masked)
    out, ssum, ssq = pl.pallas_call(
        kernel,
        out_shape=(jax.ShapeDtypeStruct((mp, cout), jnp.bfloat16),
                   jax.ShapeDtypeStruct((nblk, 1, cout), jnp.float32),
                   jax.ShapeDtypeStruct((nblk, 1, cout), jnp.float32)),
        grid=(nblk,),
        in_specs=in_specs,
        out_specs=(pl.BlockSpec((tm, cout), lambda i: (i, 0)),
                   pl.BlockSpec((None, 1, cout), lambda i: (i, 0, 0)),
                   pl.BlockSpec((None, 1, cout), lambda i: (i, 0, 0))),
        compiler_params=pltpu.CompilerParams(
            dimension_semantics=("parallel",),
            vmem_limit_bytes=_VMEM_LIMIT),
    )(*args)
    return out[:m], (ssum, ssq)


def _bn_relu_kernel(x_ref, s_ref, b_ref, o_ref):
    y = x_ref[...].astype(jnp.float32) * s_ref[...] + b_ref[...]
    o_ref[...] = jnp.maximum(y, 0.0)


def _bn_res_relu_kernel(x_ref, s_ref, b_ref, r_ref, rs_ref, rb_ref, o_ref):
    y = (x_ref[...].astype(jnp.float32) * s_ref[...] + b_ref[...]
         + r_ref[...].astype(jnp.float32) * rs_ref[...] + rb_ref[...])
    o_ref[...] = jnp.maximum(y, 0.0)


def fused_bn_relu(x, scale, bias, residual=None):
    """out = relu(scale*x + bias [+ rs*res_raw + rb]) over (M, C) row tiles."""
    m, c = x.shape
    tm, mp = _pick_row_tile(m)
    if mp != m:
        x = jnp.pad(x, ((0, mp - m), (0, 0)))   # tail rows are sliced off below
    row_spec = pl.BlockSpec((tm, c), lambda i: (i, 0))
    vec_spec = pl.BlockSpec((1, c), lambda i: (0, 0))
    if residual is None:
        kernel = _bn_relu_kernel
        args = (x, scale, bias)
        in_specs = [row_spec, vec_spec, vec_spec]
    else:
        res, rs, rb = residual
        if mp != m:
            res = jnp.pad(res, ((0, mp - m), (0, 0)))
        kernel = _bn_res_relu_kernel
        args = (x, scale, bias, res, rs, rb)
        in_specs = [row_spec, vec_spec, vec_spec, row_spec, vec_spec, vec_spec]
    out = pl.pallas_call(
        kernel,
        out_shape=jax.ShapeDtypeStruct((mp, c), jnp.float32),
        grid=(mp // tm,),
        in_specs=in_specs,
        out_specs=row_spec,
        compiler_params=pltpu.CompilerParams(
            dimension_semantics=("parallel",),
            vmem_limit_bytes=_VMEM_LIMIT),
    )(*args)
    return out[:m]


# ----------------------------------------------------------------------------
# Glue (plain JAX): layout conversion, bilinear upsample, BN parameter math
# ----------------------------------------------------------------------------
def upsample_bilinear_x2(x):
    """Bilinear x2, align_corners=True (matches the PyTorch module)."""
    # TODO(synk): bilinear resize stays in XLA glue (gather-heavy, no clean tile map).
    def interp(x, axis, in_size):
        out_size = 2 * in_size
        pos = jnp.arange(out_size, dtype=jnp.float32) * (in_size - 1) / (out_size - 1)
        lo = jnp.floor(pos).astype(jnp.int32)
        hi = jnp.minimum(lo + 1, in_size - 1)
        w = (pos - lo.astype(jnp.float32)).astype(x.dtype)
        shape = [1] * x.ndim
        shape[axis] = out_size
        w = w.reshape(shape)
        return jnp.take(x, lo, axis=axis) * (1.0 - w) + jnp.take(x, hi, axis=axis) * w

    n, h, w, c = x.shape
    x = interp(x, 1, h)
    x = interp(x, 2, w)
    return x


def _pad_vec(v, cp):
    return jnp.pad(v.astype(jnp.float32), (0, cp - v.shape[0]))


def _prep_w3x3(w_oihw, cin_p, cout_p):
    o, i = w_oihw.shape[0], w_oihw.shape[1]
    w = jnp.transpose(w_oihw, (2, 3, 1, 0)).reshape(9, i, o)
    w = jnp.pad(w, ((0, 0), (0, cin_p - i), (0, cout_p - o)))
    return w.astype(jnp.bfloat16)


def _prep_w1x1(w_oihw, cin_p, cout_p):
    o, i = w_oihw.shape[0], w_oihw.shape[1]
    w = jnp.transpose(w_oihw, (2, 3, 1, 0)).reshape(i, o)
    w = jnp.pad(w, ((0, cin_p - i), (0, cout_p - o)))
    return w.astype(jnp.bfloat16)


def _bn_scale_bias(stats, m_total, gamma_pad, beta_pad, eps=EPS):
    """Per-channel affine from per-block partial sum / sum-of-squares."""
    ssum, ssq = stats
    ssum = jnp.sum(ssum.reshape(-1, ssum.shape[-1]), axis=0)
    ssq = jnp.sum(ssq.reshape(-1, ssq.shape[-1]), axis=0)
    mean = ssum / m_total
    var = jnp.maximum(ssq / m_total - mean * mean, 0.0)   # cancellation guard
    scale = gamma_pad / jnp.sqrt(var + eps)
    bias = beta_pad - mean * scale
    return scale.reshape(1, -1), bias.reshape(1, -1)


# ----------------------------------------------------------------------------
# Module: parameters + forward
# ----------------------------------------------------------------------------
def init_params(key, dim_in, dim_out, dim_lat=0, gain=0.02):
    ks = 3 if dim_in == dim_out else 1
    dim_cat = dim_out + dim_lat
    dim_med = int(dim_cat / 2)
    keys = jax.random.split(key, 10)

    def conv_w(k, o, i, kh, kw):
        return (gain * jax.random.normal(k, (o, i, kh, kw))).astype(jnp.float32)

    def bn_p(k, c):
        return (1.0 + gain * jax.random.normal(k, (c,)).astype(jnp.float32),
                jnp.zeros((c,), jnp.float32))

    return {
        "ks": ks,
        "smooth_w1": conv_w(keys[0], dim_out, dim_in, ks, ks),
        "smooth_bn1": bn_p(keys[1], dim_out),
        "smooth_w2": conv_w(keys[2], dim_out, dim_out, 3, 3),
        "smooth_bn2": bn_p(keys[3], dim_out),
        "conv1_w": conv_w(keys[4], dim_med, dim_cat, 1, 1),
        "bn1": bn_p(keys[5], dim_med),
        "conv2_w": conv_w(keys[6], dim_med, dim_med, 3, 3),
        "bn2": bn_p(keys[7], dim_med),
        "conv3_w": conv_w(keys[8], dim_out, dim_med, 1, 1),
        "bn3": bn_p(keys[9], dim_out),
    }


def conc_up_residual_bottleneck(params, x_nchw, y_nchw=None, upsample=True,
                                strip_rows=None):
    x = jnp.transpose(x_nchw, (0, 2, 3, 1)).astype(jnp.float32)    # NCHW -> NHWC
    if upsample:
        x = upsample_bilinear_x2(x)
    n, h, w, c_in = x.shape
    m = n * h * w

    c_out = params["smooth_w1"].shape[0]
    c_med = params["conv1_w"].shape[0]
    c_cat = params["conv1_w"].shape[1]
    c_lat = c_cat - c_out

    cin_p = _round_up(c_in, LANE)
    cout_p = _round_up(c_out, LANE)
    cmed_p = _round_up(c_med, LANE)
    clat_p = _round_up(c_lat, LANE) if c_lat > 0 else 0

    ident_s = jnp.ones((1, cin_p), jnp.float32)
    ident_b = jnp.zeros((1, cin_p), jnp.float32)
    xp = jnp.pad(x, ((0, 0), (0, 0), (0, 0), (0, cin_p - c_in))).astype(jnp.bfloat16)

    # ---- smooth: conv(ks) -> BN -> ReLU -> conv3x3 -> BN -------------------
    if params["ks"] == 3:
        w_s1 = _prep_w3x3(params["smooth_w1"], cin_p, cout_p)
        h1, st1 = fused_conv3x3(xp, ident_s, ident_b, w_s1, relu=False,
                                strip_rows=strip_rows)
        h1 = h1.reshape(n, h, w, cout_p)
    else:
        w_s1 = _prep_w1x1(params["smooth_w1"], cin_p, cout_p)
        h1_flat, st1 = fused_conv1x1(xp.reshape(m, cin_p), ident_s, ident_b,
                                     w_s1, relu=False)
        h1 = h1_flat.reshape(n, h, w, cout_p)
    g, b = params["smooth_bn1"]
    sc1, bi1 = _bn_scale_bias(st1, m, _pad_vec(g, cout_p), _pad_vec(b, cout_p))

    w_s2 = _prep_w3x3(params["smooth_w2"], cout_p, cout_p)
    h2, st2 = fused_conv3x3(h1, sc1, bi1, w_s2, relu=True, strip_rows=strip_rows)
    h2_flat = h2.reshape(m, cout_p)                     # bf16, reused as residual
    g, b = params["smooth_bn2"]
    sc2, bi2 = _bn_scale_bias(st2, m, _pad_vec(g, cout_p), _pad_vec(b, cout_p))
    # residual = sc2 * h2 + bi2, recomputed inside the final fused kernel.

    # ---- bottleneck conv1 (1x1): BN_s2 prologue + separate lateral operand --
    w1mat = jnp.transpose(params["conv1_w"], (2, 3, 1, 0)).reshape(c_cat, c_med)
    w1_main = jnp.pad(w1mat[:c_out],
                      ((0, cout_p - c_out), (0, cmed_p - c_med))).astype(jnp.bfloat16)
    if y_nchw is not None:
        yh = jnp.transpose(y_nchw, (0, 2, 3, 1)).astype(jnp.float32)
        yp = jnp.pad(yh, ((0, 0), (0, 0), (0, 0), (0, clat_p - c_lat)))
        yp = yp.reshape(m, clat_p).astype(jnp.bfloat16)
        w1_lat = jnp.pad(w1mat[c_out:],
                         ((0, clat_p - c_lat), (0, cmed_p - c_med))).astype(jnp.bfloat16)
        h3_flat, st3 = fused_conv1x1(h2_flat, sc2, bi2, w1_main, relu=False,
                                     lateral=(yp, w1_lat))
    else:
        h3_flat, st3 = fused_conv1x1(h2_flat, sc2, bi2, w1_main, relu=False)
    g, b = params["bn1"]
    sc3, bi3 = _bn_scale_bias(st3, m, _pad_vec(g, cmed_p), _pad_vec(b, cmed_p))

    # ---- bottleneck conv2 (3x3), prologue BN1 + ReLU ------------------------
    w2p = _prep_w3x3(params["conv2_w"], cmed_p, cmed_p)
    h4, st4 = fused_conv3x3(h3_flat.reshape(n, h, w, cmed_p), sc3, bi3, w2p,
                            relu=True, strip_rows=strip_rows)
    h4_flat = h4.reshape(m, cmed_p)
    g, b = params["bn2"]
    sc4, bi4 = _bn_scale_bias(st4, m, _pad_vec(g, cmed_p), _pad_vec(b, cmed_p))

    # ---- bottleneck conv3 (1x1), prologue BN2 + ReLU ------------------------
    w3p = _prep_w1x1(params["conv3_w"], cmed_p, cout_p)
    h5_flat, st5 = fused_conv1x1(h4_flat, sc4, bi4, w3p, relu=True)
    g, b = params["bn3"]
    sc5, bi5 = _bn_scale_bias(st5, m, _pad_vec(g, cout_p), _pad_vec(b, cout_p))

    # ---- final BN3 (+ residual if upsample) + ReLU --------------------------
    residual = (h2_flat, sc2, bi2) if upsample else None
    out_flat = fused_bn_relu(h5_flat, sc5, bi5, residual=residual)
    out = out_flat.reshape(n, h, w, cout_p)[..., :c_out]
    return jnp.transpose(out, (0, 3, 1, 2))                        # NHWC -> NCHW


# ----------------------------------------------------------------------------
# Pure-XLA reference (mirrors the kernel path's bf16 casts) for correctness
# ----------------------------------------------------------------------------
def _ref_forward(params, x_nchw, y_nchw=None, upsample=True, eps=EPS):
    def conv(a, w_oihw, pad):
        w = jnp.transpose(w_oihw, (2, 3, 1, 0)).astype(jnp.bfloat16)
        return jax.lax.conv_general_dilated(
            a.astype(jnp.bfloat16), w, (1, 1), [(pad, pad), (pad, pad)],
            dimension_numbers=("NHWC", "HWIO", "NHWC"),
            preferred_element_type=jnp.float32)

    def bn_affine(hh, gamma, beta):
        mu = jnp.mean(hh, axis=(0, 1, 2))
        var = jnp.maximum(jnp.mean(hh * hh, axis=(0, 1, 2)) - mu * mu, 0.0)
        scale = gamma / jnp.sqrt(var + eps)
        return scale, beta - mu * scale

    def rnd(hh):   # intermediates are stored in bf16 by the kernel path
        return hh.astype(jnp.bfloat16).astype(jnp.float32)

    x = jnp.transpose(x_nchw, (0, 2, 3, 1)).astype(jnp.float32)
    if upsample:
        x = upsample_bilinear_x2(x)

    pad0 = 1 if params["ks"] == 3 else 0
    h1 = conv(x, params["smooth_w1"], pad0)
    s1, b1 = bn_affine(h1, *params["smooth_bn1"])
    a1 = jnp.maximum(rnd(h1) * s1 + b1, 0.0)

    h2 = conv(a1, params["smooth_w2"], 1)
    s2, b2 = bn_affine(h2, *params["smooth_bn2"])
    a2 = rnd(h2) * s2 + b2
    residual = a2

    cat = a2 if y_nchw is None else jnp.concatenate(
        [a2, jnp.transpose(y_nchw, (0, 2, 3, 1)).astype(jnp.float32)], axis=-1)
    h3 = conv(cat, params["conv1_w"], 0)
    s3, b3 = bn_affine(h3, *params["bn1"])
    a3 = jnp.maximum(rnd(h3) * s3 + b3, 0.0)

    h4 = conv(a3, params["conv2_w"], 1)
    s4, b4 = bn_affine(h4, *params["bn2"])
    a4 = jnp.maximum(rnd(h4) * s4 + b4, 0.0)

    h5 = conv(a4, params["conv3_w"], 0)
    s5, b5 = bn_affine(h5, *params["bn3"])
    out = rnd(h5) * s5 + b5
    if upsample:
        out = out + residual
    out = jnp.maximum(out, 0.0)
    return jnp.transpose(out, (0, 3, 1, 2))


# ----------------------------------------------------------------------------
if __name__ == "__main__":
    key = jax.random.PRNGKey(0)
    kp, kx, ky = jax.random.split(key, 3)

    # dim_in == dim_out == 4 (-> 3x3 smooth conv), lateral dim_lat == 4, x2 upsample 8 -> 16
    dim_in, dim_out, dim_lat = 4, 4, 4
    params = init_params(kp, dim_in, dim_out, dim_lat)

    x = jax.random.normal(kx, (2, dim_in, 8, 8), jnp.float32)      # NCHW, like PyTorch
    y = jax.random.normal(ky, (2, dim_lat, 16, 16), jnp.float32)   # lateral input

    out = jax.block_until_ready(conc_up_residual_bottleneck(params, x, y, upsample=True))
    assert out.shape == (2, dim_out, 16, 16), out.shape

    ref = jax.block_until_ready(_ref_forward(params, x, y, upsample=True))
    # Both paths use bf16 MXU inputs / bf16 intermediates with f32 accumulation;
    # tolerance covers rounding / accumulation-order differences.
    err = float(jnp.max(jnp.abs(out - ref)))
    assert jnp.allclose(out, ref, rtol=2e-2, atol=2e-2), err

    # Exercise the multi-strip (halo) path of the 3x3 kernel explicitly.
    out_strips = jax.block_until_ready(
        conc_up_residual_bottleneck(params, x, y, upsample=True, strip_rows=4))
    err_s = float(jnp.max(jnp.abs(out_strips - ref)))
    assert jnp.allclose(out_strips, ref, rtol=2e-2, atol=2e-2), err_s

    print("KERNEL_OK")
</pallas_src>

<mosaic_0001>
module attributes {stable_mosaic.version = 11 : i64} {
  func.func @_conv3x3_kernel(%arg0: i32, %arg1: i32, %arg2: memref<1x16x16x128xbf16, #tpu.memory_space<vmem>>, %arg3: memref<1x1x16x128xbf16, #tpu.memory_space<vmem>>, %arg4: memref<1x1x16x128xbf16, #tpu.memory_space<vmem>>, %arg5: memref<1x128xf32, #tpu.memory_space<vmem>>, %arg6: memref<1x128xf32, #tpu.memory_space<vmem>>, %arg7: memref<9x128x128xbf16, #tpu.memory_space<vmem>>, %arg8: memref<1x256x128xbf16, #tpu.memory_space<vmem>>, %arg9: memref<1x1x128xf32, #tpu.memory_space<vmem>>, %arg10: memref<1x1x128xf32, #tpu.memory_space<vmem>>, %arg11: memref<18x18x128xf32, #tpu.memory_space<vmem>>) attributes {dimension_semantics = [#tpu.dimension_semantics<parallel>, #tpu.dimension_semantics<parallel>], iteration_bounds = array<i64: 2, 1>, scalar_prefetch = 0 : i64, scratch_operands = 1 : i64, tpu.core_type = #tpu.core_type<tc>, window_params = [{transform_indices = @transform_0, window_bounds = array<i64: 1, 16, 16, 128>}, {transform_indices = @transform_1, window_bounds = array<i64: 1, 1, 16, 128>}, {transform_indices = @transform_2, window_bounds = array<i64: 1, 1, 16, 128>}, {pipeline_mode = #tpu.pipeline_mode<synchronous>, transform_indices = @transform_3, window_bounds = array<i64: 1, 128>}, {pipeline_mode = #tpu.pipeline_mode<synchronous>, transform_indices = @transform_4, window_bounds = array<i64: 1, 128>}, {pipeline_mode = #tpu.pipeline_mode<synchronous>, transform_indices = @transform_5, window_bounds = array<i64: 9, 128, 128>}, {transform_indices = @transform_6, window_bounds = array<i64: 1, 256, 128>}, {transform_indices = @transform_7, window_bounds = array<i64: 1, 1, 128>}, {transform_indices = @transform_8, window_bounds = array<i64: 1, 1, 128>}]} {
    %c0 = arith.constant 0 : index
    %c0_0 = arith.constant 0 : index
    %0 = vector.load %arg5[%c0, %c0_0] : memref<1x128xf32, #tpu.memory_space<vmem>>, vector<1x128xf32>
    %c0_1 = arith.constant 0 : index
    %c0_2 = arith.constant 0 : index
    %1 = vector.load %arg6[%c0_1, %c0_2] : memref<1x128xf32, #tpu.memory_space<vmem>>, vector<1x128xf32>
    %c0_3 = arith.constant 0 : index
    %c0_4 = arith.constant 0 : index
    %c0_5 = arith.constant 0 : index
    %c0_6 = arith.constant 0 : index
    %2 = vector.load %arg2[%c0_3, %c0_4, %c0_5, %c0_6] : memref<1x16x16x128xbf16, #tpu.memory_space<vmem>>, vector<1x16x16x128xbf16>
    %3 = vector.shape_cast %2 : vector<1x16x16x128xbf16> to vector<16x16x128xbf16>
    %4 = arith.extf %3 : vector<16x16x128xbf16> to vector<16x16x128xf32>
    %5 = vector.shape_cast %0 : vector<1x128xf32> to vector<1x1x128xf32>
    %6 = vector.broadcast %5 : vector<1x1x128xf32> to vector<16x16x128xf32>
    %7 = arith.mulf %4, %6 : vector<16x16x128xf32>
    %8 = vector.shape_cast %1 : vector<1x128xf32> to vector<1x1x128xf32>
    %9 = vector.broadcast %8 : vector<1x1x128xf32> to vector<16x16x128xf32>
    %10 = arith.addf %7, %9 : vector<16x16x128xf32>
    %c0_i32 = arith.constant 0 : i32
    %11 = arith.cmpi sgt, %arg1, %c0_i32 : i32
    %12 = arith.extui %11 : i1 to i32
    %13 = arith.sitofp %12 : i32 to f32
    %c0_i32_7 = arith.constant 0 : i32
    %14 = arith.cmpi slt, %arg1, %c0_i32_7 : i32
    %15 = arith.extui %14 : i1 to i32
    %16 = arith.sitofp %15 : i32 to f32
    %c0_8 = arith.constant 0 : index
    %c0_9 = arith.constant 0 : index
    %c0_10 = arith.constant 0 : index
    %c0_11 = arith.constant 0 : index
    %17 = vector.load %arg3[%c0_8, %c0_9, %c0_10, %c0_11] : memref<1x1x16x128xbf16, #tpu.memory_space<vmem>>, vector<1x1x16x128xbf16>
    %18 = vector.shape_cast %17 : vector<1x1x16x128xbf16> to vector<1x16x128xbf16>
    %19 = arith.extf %18 : vector<1x16x128xbf16> to vector<1x16x128xf32>
    %20 = vector.shape_cast %0 : vector<1x128xf32> to vector<1x1x128xf32>
    %21 = vector.broadcast %20 : vector<1x1x128xf32> to vector<1x16x128xf32>
    %22 = arith.mulf %19, %21 : vector<1x16x128xf32>
    %23 = vector.shape_cast %1 : vector<1x128xf32> to vector<1x1x128xf32>
    %24 = vector.broadcast %23 : vector<1x1x128xf32> to vector<1x16x128xf32>
    %25 = arith.addf %22, %24 : vector<1x16x128xf32>
    %26 = vector.broadcast %13 : f32 to vector<1x16x128xf32>
    %27 = arith.mulf %25, %26 : vector<1x16x128xf32>
    %c0_12 = arith.constant 0 : index
    %c0_13 = arith.constant 0 : index
    %c0_14 = arith.constant 0 : index
    %c0_15 = arith.constant 0 : index
    %28 = vector.load %arg4[%c0_12, %c0_13, %c0_14, %c0_15] : memref<1x1x16x128xbf16, #tpu.memory_space<vmem>>, vector<1x1x16x128xbf16>
    %29 = vector.shape_cast %28 : vector<1x1x16x128xbf16> to vector<1x16x128xbf16>
    %30 = arith.extf %29 : vector<1x16x128xbf16> to vector<1x16x128xf32>
    %31 = vector.shape_cast %0 : vector<1x128xf32> to vector<1x1x128xf32>
    %32 = vector.broadcast %31 : vector<1x1x128xf32> to vector<1x16x128xf32>
    %33 = arith.mulf %30, %32 : vector<1x16x128xf32>
    %34 = vector.shape_cast %1 : vector<1x128xf32> to vector<1x1x128xf32>
    %35 = vector.broadcast %34 : vector<1x1x128xf32> to vector<1x16x128xf32>
    %36 = arith.addf %33, %35 : vector<1x16x128xf32>
    %37 = vector.broadcast %16 : f32 to vector<1x16x128xf32>
    %38 = arith.mulf %36, %37 : vector<1x16x128xf32>
    %cst = arith.constant 0.000000e+00 : f32
    %39 = vector.broadcast %cst : f32 to vector<18x1x128xf32>
    %c0_16 = arith.constant 0 : index
    %c0_17 = arith.constant 0 : index
    %c0_18 = arith.constant 0 : index
    %40 = vector.load %arg11[%c0_16, %c0_17, %c0_18] : memref<18x18x128xf32, #tpu.memory_space<vmem>>, vector<18x1x128xf32>
    tpu.vector_store %arg11[%c0_16, %c0_17, %c0_18], %39 {strides = array<i32>} : memref<18x18x128xf32, #tpu.memory_space<vmem>>, vector<18x1x128xf32>,
    %c0_19 = arith.constant 0 : index
    %c17 = arith.constant 17 : index
    %c0_20 = arith.constant 0 : index
    %41 = vector.load %arg11[%c0_19, %c17, %c0_20] : memref<18x18x128xf32, #tpu.memory_space<vmem>>, vector<18x1x128xf32>
    tpu.vector_store %arg11[%c0_19, %c17, %c0_20], %39 {strides = array<i32>} : memref<18x18x128xf32, #tpu.memory_space<vmem>>, vector<18x1x128xf32>,
    %c0_21 = arith.constant 0 : index
    %c1 = arith.constant 1 : index
    %c0_22 = arith.constant 0 : index
    %42 = vector.load %arg11[%c0_21, %c1, %c0_22] : memref<18x18x128xf32, #tpu.memory_space<vmem>>, vector<1x16x128xf32>
    tpu.vector_store %arg11[%c0_21, %c1, %c0_22], %27 {strides = array<i32>} : memref<18x18x128xf32, #tpu.memory_space<vmem>>, vector<1x16x128xf32>,
    %c1_23 = arith.constant 1 : index
    %c1_24 = arith.constant 1 : index
    %c0_25 = arith.constant 0 : index
    %43 = vector.load %arg11[%c1_23, %c1_24, %c0_25] : memref<18x18x128xf32, #tpu.memory_space<vmem>>, vector<16x16x128xf32>
    tpu.vector_store %arg11[%c1_23, %c1_24, %c0_25], %10 {strides = array<i32>} : memref<18x18x128xf32, #tpu.memory_space<vmem>>, vector<16x16x128xf32>,
    %c17_26 = arith.constant 17 : index
    %c1_27 = arith.constant 1 : index
    %c0_28 = arith.constant 0 : index
    %44 = vector.load %arg11[%c17_26, %c1_27, %c0_28] : memref<18x18x128xf32, #tpu.memory_space<vmem>>, vector<1x16x128xf32>
    tpu.vector_store %arg11[%c17_26, %c1_27, %c0_28], %38 {strides = array<i32>} : memref<18x18x128xf32, #tpu.memory_space<vmem>>, vector<1x16x128xf32>,
    %c0_29 = arith.constant 0 : index
    %c0_30 = arith.constant 0 : index
    %c0_31 = arith.constant 0 : index
    %45 = vector.load %arg11[%c0_29, %c0_30, %c0_31] : memref<18x18x128xf32, #tpu.memory_space<vmem>>, vector<18x18x128xf32>
    %46 = arith.truncf %45 : vector<18x18x128xf32> to vector<18x18x128xbf16>
    %cst_32 = arith.constant 0.000000e+00 : f32
    %47 = vector.broadcast %cst_32 : f32 to vector<256x128xf32>
    %48 = vector.extract_strided_slice %46 {offsets = [0, 0, 0], sizes = [18, 16, 128], strides = [1, 1, 1]} : vector<18x18x128xbf16> to vector<18x16x128xbf16>
    %49 = vector.extract_strided_slice %48 {offsets = [0, 0, 0], sizes = [16, 16, 128], strides = [1, 1, 1]} : vector<18x16x128xbf16> to vector<16x16x128xbf16>
    %50 = vector.shape_cast %49 : vector<16x16x128xbf16> to vector<256x128xbf16>
    %c0_33 = arith.constant 0 : index
    %c0_34 = arith.constant 0 : index
    %c0_35 = arith.constant 0 : index
    %51 = vector.load %arg7[%c0_33, %c0_34, %c0_35] : memref<9x128x128xbf16, #tpu.memory_space<vmem>>, vector<1x128x128xbf16>
    %52 = vector.shape_cast %51 : vector<1x128x128xbf16> to vector<128x128xbf16>
    %cst_36 = arith.constant dense<0.000000e+00> : vector<256x128xf32>
    %53 = tpu.matmul %50, %52, %cst_36 {dimension_numbers = #tpu.dot_dimension_numbers<[1], [0], [0], [1], [0, 0, 1, 1], [], []>} : vector<256x128xbf16>, vector<128x128xbf16>, vector<256x128xf32> -> vector<256x128xf32>
    %54 = arith.addf %47, %53 : vector<256x128xf32>
    %55 = vector.extract_strided_slice %48 {offsets = [1, 0, 0], sizes = [16, 16, 128], strides = [1, 1, 1]} : vector<18x16x128xbf16> to vector<16x16x128xbf16>
    %56 = vector.shape_cast %55 : vector<16x16x128xbf16> to vector<256x128xbf16>
    %c3 = arith.constant 3 : index
    %c0_37 = arith.constant 0 : index
    %c0_38 = arith.constant 0 : index
    %57 = vector.load %arg7[%c3, %c0_37, %c0_38] : memref<9x128x128xbf16, #tpu.memory_space<vmem>>, vector<1x128x128xbf16>
    %58 = vector.shape_cast %57 : vector<1x128x128xbf16> to vector<128x128xbf16>
    %cst_39 = arith.constant dense<0.000000e+00> : vector<256x128xf32>
    %59 = tpu.matmul %56, %58, %cst_39 {dimension_numbers = #tpu.dot_dimension_numbers<[1], [0], [0], [1], [0, 0, 1, 1], [], []>} : vector<256x128xbf16>, vector<128x128xbf16>, vector<256x128xf32> -> vector<256x128xf32>
    %60 = arith.addf %54, %59 : vector<256x128xf32>
    %61 = vector.extract_strided_slice %48 {offsets = [2, 0, 0], sizes = [16, 16, 128], strides = [1, 1, 1]} : vector<18x16x128xbf16> to vector<16x16x128xbf16>
    %62 = vector.shape_cast %61 : vector<16x16x128xbf16> to vector<256x128xbf16>
    %c6 = arith.constant 6 : index
    %c0_40 = arith.constant 0 : index
    %c0_41 = arith.constant 0 : index
    %63 = vector.load %arg7[%c6, %c0_40, %c0_41] : memref<9x128x128xbf16, #tpu.memory_space<vmem>>, vector<1x128x128xbf16>
    %64 = vector.shape_cast %63 : vector<1x128x128xbf16> to vector<128x128xbf16>
    %cst_42 = arith.constant dense<0.000000e+00> : vector<256x128xf32>
    %65 = tpu.matmul %62, %64, %cst_42 {dimension_numbers = #tpu.dot_dimension_numbers<[1], [0], [0], [1], [0, 0, 1, 1], [], []>} : vector<256x128xbf16>, vector<128x128xbf16>, vector<256x128xf32> -> vector<256x128xf32>
    %66 = arith.addf %60, %65 : vector<256x128xf32>
    %67 = vector.extract_strided_slice %46 {offsets = [0, 1, 0], sizes = [18, 16, 128], strides = [1, 1, 1]} : vector<18x18x128xbf16> to vector<18x16x128xbf16>
    %68 = vector.extract_strided_slice %67 {offsets = [0, 0, 0], sizes = [16, 16, 128], strides = [1, 1, 1]} : vector<18x16x128xbf16> to vector<16x16x128xbf16>
    %69 = vector.shape_cast %68 : vector<16x16x128xbf16> to vector<256x128xbf16>
    %c1_43 = arith.constant 1 : index
    %c0_44 = arith.constant 0 : index
    %c0_45 = arith.constant 0 : index
    %70 = vector.load %arg7[%c1_43, %c0_44, %c0_45] : memref<9x128x128xbf16, #tpu.memory_space<vmem>>, vector<1x128x128xbf16>
    %71 = vector.shape_cast %70 : vector<1x128x128xbf16> to vector<128x128xbf16>
    %cst_46 = arith.constant dense<0.000000e+00> : vector<256x128xf32>
    %72 = tpu.matmul %69, %71, %cst_46 {dimension_numbers = #tpu.dot_dimension_numbers<[1], [0], [0], [1], [0, 0, 1, 1], [], []>} : vector<256x128xbf16>, vector<128x128xbf16>, vector<256x128xf32> -> vector<256x128xf32>
    %73 = arith.addf %66, %72 : vector<256x128xf32>
    %74 = vector.extract_strided_slice %67 {offsets = [1, 0, 0], sizes = [16, 16, 128], strides = [1, 1, 1]} : vector<18x16x128xbf16> to vector<16x16x128xbf16>
    %75 = vector.shape_cast %74 : vector<16x16x128xbf16> to vector<256x128xbf16>
    %c4 = arith.constant 4 : index
    %c0_47 = arith.constant 0 : index
    %c0_48 = arith.constant 0 : index
    %76 = vector.load %arg7[%c4, %c0_47, %c0_48] : memref<9x128x128xbf16, #tpu.memory_space<vmem>>, vector<1x128x128xbf16>
    %77 = vector.shape_cast %76 : vector<1x128x128xbf16> to vector<128x128xbf16>
    %cst_49 = arith.constant dense<0.000000e+00> : vector<256x128xf32>
    %78 = tpu.matmul %75, %77, %cst_49 {dimension_numbers = #tpu.dot_dimension_numbers<[1], [0], [0], [1], [0, 0, 1, 1], [], []>} : vector<256x128xbf16>, vector<128x128xbf16>, vector<256x128xf32> -> vector<256x128xf32>
    %79 = arith.addf %73, %78 : vector<256x128xf32>
    %80 = vector.extract_strided_slice %67 {offsets = [2, 0, 0], sizes = [16, 16, 128], strides = [1, 1, 1]} : vector<18x16x128xbf16> to vector<16x16x128xbf16>
    %81 = vector.shape_cast %80 : vector<16x16x128xbf16> to vector<256x128xbf16>
    %c7 = arith.constant 7 : index
    %c0_50 = arith.constant 0 : index
    %c0_51 = arith.constant 0 : index
    %82 = vector.load %arg7[%c7, %c0_50, %c0_51] : memref<9x128x128xbf16, #tpu.memory_space<vmem>>, vector<1x128x128xbf16>
    %83 = vector.shape_cast %82 : vector<1x128x128xbf16> to vector<128x128xbf16>
    %cst_52 = arith.constant dense<0.000000e+00> : vector<256x128xf32>
    %84 = tpu.matmul %81, %83, %cst_52 {dimension_numbers = #tpu.dot_dimension_numbers<[1], [0], [0], [1], [0, 0, 1, 1], [], []>} : vector<256x128xbf16>, vector<128x128xbf16>, vector<256x128xf32> -> vector<256x128xf32>
    %85 = arith.addf %79, %84 : vector<256x128xf32>
    %86 = vector.extract_strided_slice %46 {offsets = [0, 2, 0], sizes = [18, 16, 128], strides = [1, 1, 1]} : vector<18x18x128xbf16> to vector<18x16x128xbf16>
    %87 = vector.extract_strided_slice %86 {offsets = [0, 0, 0], sizes = [16, 16, 128], strides = [1, 1, 1]} : vector<18x16x128xbf16> to vector<16x16x128xbf16>
    %88 = vector.shape_cast %87 : vector<16x16x128xbf16> to vector<256x128xbf16>
    %c2 = arith.constant 2 : index
    %c0_53 = arith.constant 0 : index
    %c0_54 = arith.constant 0 : index
    %89 = vector.load %arg7[%c2, %c0_53, %c0_54] : memref<9x128x128xbf16, #tpu.memory_space<vmem>>, vector<1x128x128xbf16>
    %90 = vector.shape_cast %89 : vector<1x128x128xbf16> to vector<128x128xbf16>
    %cst_55 = arith.constant dense<0.000000e+00> : vector<256x128xf32>
    %91 = tpu.matmul %88, %90, %cst_55 {dimension_numbers = #tpu.dot_dimension_numbers<[1], [0], [0], [1], [0, 0, 1, 1], [], []>} : vector<256x128xbf16>, vector<128x128xbf16>, vector<256x128xf32> -> vector<256x128xf32>
    %92 = arith.addf %85, %91 : vector<256x128xf32>
    %93 = vector.extract_strided_slice %86 {offsets = [1, 0, 0], sizes = [16, 16, 128], strides = [1, 1, 1]} : vector<18x16x128xbf16> to vector<16x16x128xbf16>
    %94 = vector.shape_cast %93 : vector<16x16x128xbf16> to vector<256x128xbf16>
    %c5 = arith.constant 5 : index
    %c0_56 = arith.constant 0 : index
    %c0_57 = arith.constant 0 : index
    %95 = vector.load %arg7[%c5, %c0_56, %c0_57] : memref<9x128x128xbf16, #tpu.memory_space<vmem>>, vector<1x128x128xbf16>
    %96 = vector.shape_cast %95 : vector<1x128x128xbf16> to vector<128x128xbf16>
    %cst_58 = arith.constant dense<0.000000e+00> : vector<256x128xf32>
    %97 = tpu.matmul %94, %96, %cst_58 {dimension_numbers = #tpu.dot_dimension_numbers<[1], [0], [0], [1], [0, 0, 1, 1], [], []>} : vector<256x128xbf16>, vector<128x128xbf16>, vector<256x128xf32> -> vector<256x128xf32>
    %98 = arith.addf %92, %97 : vector<256x128xf32>
    %99 = vector.extract_strided_slice %86 {offsets = [2, 0, 0], sizes = [16, 16, 128], strides = [1, 1, 1]} : vector<18x16x128xbf16> to vector<16x16x128xbf16>
    %100 = vector.shape_cast %99 : vector<16x16x128xbf16> to vector<256x128xbf16>
    %c8 = arith.constant 8 : index
    %c0_59 = arith.constant 0 : index
    %c0_60 = arith.constant 0 : index
    %101 = vector.load %arg7[%c8, %c0_59, %c0_60] : memref<9x128x128xbf16, #tpu.memory_space<vmem>>, vector<1x128x128xbf16>
    %102 = vector.shape_cast %101 : vector<1x128x128xbf16> to vector<128x128xbf16>
    %cst_61 = arith.constant dense<0.000000e+00> : vector<256x128xf32>
    %103 = tpu.matmul %100, %102, %cst_61 {dimension_numbers = #tpu.dot_dimension_numbers<[1], [0], [0], [1], [0, 0, 1, 1], [], []>} : vector<256x128xbf16>, vector<128x128xbf16>, vector<256x128xf32> -> vector<256x128xf32>
    %104 = arith.addf %98, %103 : vector<256x128xf32>
    %105 = arith.truncf %104 : vector<256x128xf32> to vector<256x128xbf16>
    %c0_62 = arith.constant 0 : index
    %c0_63 = arith.constant 0 : index
    %c0_64 = arith.constant 0 : index
    %106 = vector.load %arg8[%c0_62, %c0_63, %c0_64] : memref<1x256x128xbf16, #tpu.memory_space<vmem>>, vector<1x256x128xbf16>
    %107 = vector.shape_cast %106 : vector<1x256x128xbf16> to vector<256x128xbf16>
    %108 = vector.shape_cast %105 : vector<256x128xbf16> to vector<1x256x128xbf16>
    tpu.vector_store %arg8[%c0_62, %c0_63, %c0_64], %108 {strides = array<i32>} : memref<1x256x128xbf16, #tpu.memory_space<vmem>>, vector<1x256x128xbf16>,
    %cst_65 = arith.constant dense<0.000000e+00> : vector<128xf32>
    %109 = vector.multi_reduction <add>, %104, %cst_65 [0] : vector<256x128xf32> to vector<128xf32>
    %110 = vector.shape_cast %109 : vector<128xf32> to vector<1x128xf32>
    %c0_66 = arith.constant 0 : index
    %c0_67 = arith.constant 0 : index
    %c0_68 = arith.constant 0 : index
    %111 = vector.load %arg9[%c0_66, %c0_67, %c0_68] : memref<1x1x128xf32, #tpu.memory_space<vmem>>, vector<1x1x128xf32>
    %112 = vector.shape_cast %111 : vector<1x1x128xf32> to vector<1x128xf32>
    %113 = vector.shape_cast %110 : vector<1x128xf32> to vector<1x1x128xf32>
    tpu.vector_store %arg9[%c0_66, %c0_67, %c0_68], %113 {strides = array<i32>} : memref<1x1x128xf32, #tpu.memory_space<vmem>>, vector<1x1x128xf32>,
    %114 = arith.mulf %104, %104 : vector<256x128xf32>
    %cst_69 = arith.constant dense<0.000000e+00> : vector<128xf32>
    %115 = vector.multi_reduction <add>, %114, %cst_69 [0] : vector<256x128xf32> to vector<128xf32>
    %116 = vector.shape_cast %115 : vector<128xf32> to vector<1x128xf32>
    %c0_70 = arith.constant 0 : index
    %c0_71 = arith.constant 0 : index
    %c0_72 = arith.constant 0 : index
    %117 = vector.load %arg10[%c0_70, %c0_71, %c0_72] : memref<1x1x128xf32, #tpu.memory_space<vmem>>, vector<1x1x128xf32>
    %118 = vector.shape_cast %117 : vector<1x1x128xf32> to vector<1x128xf32>
    %119 = vector.shape_cast %116 : vector<1x128xf32> to vector<1x1x128xf32>
    tpu.vector_store %arg10[%c0_70, %c0_71, %c0_72], %119 {strides = array<i32>} : memref<1x1x128xf32, #tpu.memory_space<vmem>>, vector<1x1x128xf32>,
    return
  }
  func.func @transform_0(%arg0: i32, %arg1: i32) -> (i32, i32, i32, i32) {
    %c0_i32 = arith.constant 0 : i32
    %c0_i32_0 = arith.constant 0 : i32
    %c0_i32_1 = arith.constant 0 : i32
    return %arg0, %arg1, %c0_i32, %c0_i32_0 : i32, i32, i32, i32
  }
  func.func @transform_1(%arg0: i32, %arg1: i32) -> (i32, i32, i32, i32) {
    %c16_i32 = arith.constant 16 : i32
    %0 = arith.muli %arg1, %c16_i32 : i32
    %c1_i32 = arith.constant 1 : i32
    %1 = arith.subi %0, %c1_i32 : i32
    %c0_i32 = arith.constant 0 : i32
    %2 = arith.maxsi %1, %c0_i32 : i32
    %c0_i32_0 = arith.constant 0 : i32
    %c0_i32_1 = arith.constant 0 : i32
    %c0_i32_2 = arith.constant 0 : i32
    return %arg0, %2, %c0_i32_0, %c0_i32_1 : i32, i32, i32, i32
  }
  func.func @transform_2(%arg0: i32, %arg1: i32) -> (i32, i32, i32, i32) {
    %c1_i32 = arith.constant 1 : i32
    %0 = arith.addi %arg1, %c1_i32 : i32
    %c16_i32 = arith.constant 16 : i32
    %1 = arith.muli %0, %c16_i32 : i32
    %c15_i32 = arith.constant 15 : i32
    %2 = arith.minsi %1, %c15_i32 : i32
    %c0_i32 = arith.constant 0 : i32
    %c0_i32_0 = arith.constant 0 : i32
    %c0_i32_1 = arith.constant 0 : i32
    return %arg0, %2, %c0_i32, %c0_i32_0 : i32, i32, i32, i32
  }
  func.func @transform_3(%arg0: i32, %arg1: i32) -> (i32, i32) {
    %c0_i32 = arith.constant 0 : i32
    %c0_i32_0 = arith.constant 0 : i32
    %c0_i32_1 = arith.constant 0 : i32
    return %c0_i32, %c0_i32_0 : i32, i32
  }
  func.func @transform_4(%arg0: i32, %arg1: i32) -> (i32, i32) {
    %c0_i32 = arith.constant 0 : i32
    %c0_i32_0 = arith.constant 0 : i32
    %c0_i32_1 = arith.constant 0 : i32
    return %c0_i32, %c0_i32_0 : i32, i32
  }
  func.func @transform_5(%arg0: i32, %arg1: i32) -> (i32, i32, i32) {
    %c0_i32 = arith.constant 0 : i32
    %c0_i32_0 = arith.constant 0 : i32
    %c0_i32_1 = arith.constant 0 : i32
    %c0_i32_2 = arith.constant 0 : i32
    return %c0_i32, %c0_i32_0, %c0_i32_1 : i32, i32, i32
  }
  func.func @transform_6(%arg0: i32, %arg1: i32) -> (i32, i32, i32) {
    %c0_i32 = arith.constant 0 : i32
    %c0_i32_0 = arith.constant 0 : i32
    return %arg0, %arg1, %c0_i32 : i32, i32, i32
  }
  func.func @transform_7(%arg0: i32, %arg1: i32) -> (i32, i32, i32) {
    %c1_i32 = arith.constant 1 : i32
    %0 = arith.muli %arg0, %c1_i32 : i32
    %1 = arith.addi %0, %arg1 : i32
    %c0_i32 = arith.constant 0 : i32
    %c0_i32_0 = arith.constant 0 : i32
    %c0_i32_1 = arith.constant 0 : i32
    return %1, %c0_i32, %c0_i32_0 : i32, i32, i32
  }
  func.func @transform_8(%arg0: i32, %arg1: i32) -> (i32, i32, i32) {
    %c1_i32 = arith.constant 1 : i32
    %0 = arith.muli %arg0, %c1_i32 : i32
    %1 = arith.addi %0, %arg1 : i32
    %c0_i32 = arith.constant 0 : i32
    %c0_i32_0 = arith.constant 0 : i32
    %c0_i32_1 = arith.constant 0 : i32
    return %1, %c0_i32, %c0_i32_0 : i32, i32, i32
  }
}

</mosaic_0001>

<llo_original>
// kernel: tpu_custom_call.1
$region0: #{tpu_custom_call.1}
  #allocation0 [shape = 'u32[]', space=smem, size = 0x4, offset = 0x4, fixed_abs, tag = 'smem constant byte address 0x4 - core index']
  #allocation1 [shape = 'u32[72,128]{1,0:T(1,128)}', space=vmem, size = 0x9000, scoped, tag = 'internal scratch']
  #allocation2 [shape = 'f32[18,18,128]{2,1,0:T(8,128)}', space=vmem, size = 0x36000, scoped, tag = 'scratch operand']
  %s0 = inlined_call_operand.hbm [shape: bf16[2,16,16,128], index: 0, kind: input, shape index: {}]
  %s1 = inlined_call_operand.hbm [shape: bf16[2,16,16,128], index: 1, kind: input, shape index: {}]
  %s2 = inlined_call_operand.hbm [shape: bf16[2,16,16,128], index: 2, kind: input, shape index: {}]
  %s3 = inlined_call_operand.vmem [shape: f32[1,128], index: 3, kind: input, shape index: {}]
  %s4 = inlined_call_operand.vmem [shape: f32[1,128], index: 4, kind: input, shape index: {}]
  %s5 = inlined_call_operand.hbm [shape: bf16[9,128,128], index: 5, kind: input, shape index: {}]
  %s6 = inlined_call_operand.hbm [shape: bf16[2,256,128], index: 6, kind: output, shape index: {0}]
  %s7 = inlined_call_operand.hbm [shape: f32[2,1,128], index: 7, kind: output, shape index: {1}]
  %s8 = inlined_call_operand.hbm [shape: f32[2,1,128], index: 8, kind: output, shape index: {2}]
  %9 = xla_tuple %s6, %s7, %s8
  %s10 = sld [smem:[#allocation0]]
  $region89: #{tpu_custom_call.1} parent=0
    _
  %s12 = ssub.s32 1, %s10
  %s13 = scalar_select 0, %s12, %s10
  $region1: #{tpu_custom_call.1} parent=0
    #allocation3 [shape = 'u8[131072]{0}', space=vmem, size = 0x20000, scoped, tag = 'input window, operand 0']
    #allocation4 [shape = 's32[2]{0}', space=sflag, size = 0x8, scoped, tag = 'scoped memory for tpu_custom_call.1']
    #allocation5 [shape = 's32[2]{0}', space=sflag, size = 0x8, scoped, tag = 'scoped memory for tpu_custom_call.1']
    #allocation6 [shape = 'u8[8192]{0}', space=vmem, size = 0x2000, scoped, tag = 'input window, operand 1']
    #allocation7 [shape = 's32[2]{0}', space=sflag, size = 0x8, scoped, tag = 'scoped memory for tpu_custom_call.1']
    #allocation8 [shape = 'u8[8192]{0}', space=vmem, size = 0x2000, scoped, tag = 'input window, operand 2']
    #allocation9 [shape = 'u8[294912]{0}', space=vmem, size = 0x48000, scoped, tag = 'input window, operand 5, single buffered']
    #allocation10 [shape = 's32[1]{0}', space=sflag, size = 0x4, scoped, tag = 'scoped memory for tpu_custom_call.1']
    #allocation11 [shape = 'u8[131072]{0}', space=vmem, size = 0x20000, scoped, tag = 'output window, operand 0']
    #allocation12 [shape = 'u8[1024]{0}', space=vmem, size = 0x400, scoped, tag = 'output window, operand 1']
    #allocation13 [shape = 's32[2]{0}', space=sflag, size = 0x8, scoped, tag = 'scoped memory for tpu_custom_call.1']
    #allocation14 [shape = 'u8[1024]{0}', space=vmem, size = 0x400, scoped, tag = 'output window, operand 2']
    %14 = vsyncpa [#allocation4], 0
    %s15 = scalar_lea.sflag [#allocation4], 1
    %16 = vsyncpa %s15, 0
    %17 = vsyncpa [#allocation7], 0
    %s18 = scalar_lea.sflag [#allocation7], 1
    %19 = vsyncpa %s18, 0
    %20 = vsyncpa [#allocation10], 0
    %21 = vsyncpa [#allocation5], 0
    %s22 = scalar_lea.sflag [#allocation5], 1
    %23 = vsyncpa %s22, 0
    %24 = vsyncpa [#allocation13], 0
    %s25 = scalar_lea.sflag [#allocation13], 1
    %26 = vsyncpa %s25, 0
    loop: start=0, step=1, limit=4
    $region2: #{tpu_custom_call.1} parent=1 // loop_pre_header
      _
    $region3: #{tpu_custom_call.1} parent=1 // loop_header
      %s28 = sphi 0, %s32
      %p29 = scmp.ge.s32.totalorder %s28, 4
      %s35 = sphi 0, %s47
      %s36 = sphi 0, %s43
      %s37 = sphi 0, %s35
      %s38 = sphi 0, %s36
      %s39 = sphi 0, %s37
      %s40 = sphi 0, %s38
      %s52 = sphi 0, %s54
      %s55 = sphi 0, %s52
      %s56 = sphi 0, %s55
      %s72 = sphi 0, %s56
      %s88 = sphi 0, %s90
      %s91 = sphi 0, %s88
      %s92 = sphi 0, %s91
      %s108 = sphi 0, %s92
      %s124 = sphi 0, %s126
      %s127 = sphi 0, %s124
      %s128 = sphi 0, %s127
      %s144 = sphi 0, %s128
      %s148 = sphi 0, %s148
      %s150 = sphi 0, %s148
      %s151 = sphi 0, %s150
      %s165 = sphi 0, %s151
      %s169 = sphi 0, %s169
      %s171 = sphi 0, %s169
      %s172 = sphi 0, %s171
      %s186 = sphi 0, %s172
      %s190 = sphi 0, %s190
      %s192 = sphi 0, %s190
      %s193 = sphi 0, %s192
      %s207 = sphi 0, %s193
      %s215 = sphi 0, %s217
      %s218 = sphi 0, %s215
      %s219 = sphi 0, %s218
      %s235 = sphi 0, %s219
      %s243 = sphi 0, %s245
      %s246 = sphi 0, %s243
      %s247 = sphi 0, %s246
      %s263 = sphi 0, %s247
      %s271 = sphi 0, %s273
      %s274 = sphi 0, %s271
      %s275 = sphi 0, %s274
      %s291 = sphi 0, %s275
    $region4: #{tpu_custom_call.1} parent=1 // loop_header_branch
      %31 = sbr.rel (%p29) target = $region8
    $region5: #{tpu_custom_call.1} parent=1 // loop_body
      %s33 = ssub.s32 %s28, 1
      %s34 = ssub.s32 %s28, 2
      %s41 = sadd.s32 1, %s36
      %p42 = scmp.ge.s32.totalorder %s41, 1
      %s43 = scalar_select %p42, 0, %s41
      %s44 = sadd.s32 1, %s35
      %s45 = scalar_select %p42, %s44, %s35
      %p46 = scmp.ge.s32.totalorder %s45, 2
      %s47 = scalar_select %p46, 0, %s45
      %s48 = ssub.s32 %s35, %s47
      %s49 = ssub.s32 %s36, %s43
      %s50 = sor.u32 %s48, %s49
      %p51 = scmp.eq.s32.totalorder %s50, 0
      %s53 = sadd.s32 %s52, 1
      %s54 = scalar_select %p51, %s52, %s53
      %p57 = pneg %p51
      %p58 = scmp.eq.s32.totalorder %s28, 1
      %p59 = por %p57, %p58
      %p60 = scmp.ne.s32.totalorder %s52, %s55
      %p61 = scmp.eq.s32.totalorder %s28, 0
      %p62 = por %p60, %p61
      %p63 = scmp.ne.s32.totalorder %s52, %s55
      %p64 = scmp.eq.s32.totalorder %s33, 1
      %p65 = por %p63, %p64
      %p66 = scmp.ne.s32.totalorder %s55, %s56
      %p67 = scmp.eq.s32.totalorder %s33, 0
      %p68 = por %p66, %p67
      %p69 = scmp.ne.s32.totalorder %s55, %s56
      %p70 = scmp.eq.s32.totalorder %s34, 1
      %p71 = por %p69, %p70
      %p73 = scmp.ne.s32.totalorder %s56, %s72
      %p74 = scmp.eq.s32.totalorder %s34, 0
      %p75 = por %p73, %p74
      %s76 = smul.u32 %s36, 16
      %s77 = ssub.s32 %s76, 1
      %p78 = scmp.gt.s32.totalorder %s77, 0
      %s79 = scalar_select %p78, %s77, 0
      %s80 = smul.u32 %s43, 16
      %s81 = ssub.s32 %s80, 1
      %p82 = scmp.gt.s32.totalorder %s81, 0
      %s83 = scalar_select %p82, %s81, 0
      %s84 = ssub.s32 %s35, %s47
      %s85 = ssub.s32 %s79, %s83
      %s86 = sor.u32 %s84, %s85
      %p87 = scmp.eq.s32.totalorder %s86, 0
      %s89 = sadd.s32 %s88, 1
      %s90 = scalar_select %p87, %s88, %s89
      %p93 = pneg %p87
      %p94 = scmp.eq.s32.totalorder %s28, 1
      %p95 = por %p93, %p94
      %p96 = scmp.ne.s32.totalorder %s88, %s91
      %p97 = scmp.eq.s32.totalorder %s28, 0
      %p98 = por %p96, %p97
      %p99 = scmp.ne.s32.totalorder %s88, %s91
      %p100 = scmp.eq.s32.totalorder %s33, 1
      %p101 = por %p99, %p100
      %p102 = scmp.ne.s32.totalorder %s91, %s92
      %p103 = scmp.eq.s32.totalorder %s33, 0
      %p104 = por %p102, %p103
      %p105 = scmp.ne.s32.totalorder %s91, %s92
      %p106 = scmp.eq.s32.totalorder %s34, 1
      %p107 = por %p105, %p106
      %p109 = scmp.ne.s32.totalorder %s92, %s108
      %p110 = scmp.eq.s32.totalorder %s34, 0
      %p111 = por %p109, %p110
      %s112 = sadd.s32 %s36, 1
      %s113 = smul.u32 %s112, 16
      %p114 = scmp.lt.s32.totalorder %s113, 15
      %s115 = scalar_select %p114, %s113, 15
      %s116 = sadd.s32 %s43, 1
      %s117 = smul.u32 %s116, 16
      %p118 = scmp.lt.s32.totalorder %s117, 15
      %s119 = scalar_select %p118, %s117, 15
      %s120 = ssub.s32 %s35, %s47
      %s121 = ssub.s32 %s115, %s119
      %s122 = sor.u32 %s120, %s121
      %p123 = scmp.eq.s32.totalorder %s122, 0
      %s125 = sadd.s32 %s124, 1
      %s126 = scalar_select %p123, %s124, %s125
      %p129 = pneg %p123
      %p130 = scmp.eq.s32.totalorder %s28, 1
      %p131 = por %p129, %p130
      %p132 = scmp.ne.s32.totalorder %s124, %s127
      %p133 = scmp.eq.s32.totalorder %s28, 0
      %p134 = por %p132, %p133
      %p135 = scmp.ne.s32.totalorder %s124, %s127
      %p136 = scmp.eq.s32.totalorder %s33, 1
      %p137 = por %p135, %p136
      %p138 = scmp.ne.s32.totalorder %s127, %s128
      %p139 = scmp.eq.s32.totalorder %s33, 0
      %p140 = por %p138, %p139
      %p141 = scmp.ne.s32.totalorder %s127, %s128
      %p142 = scmp.eq.s32.totalorder %s34, 1
      %p143 = por %p141, %p142
      %p145 = scmp.ne.s32.totalorder %s128, %s144
      %p146 = scmp.eq.s32.totalorder %s34, 0
      %p147 = por %p145, %p146
      %s149 = sadd.s32 %s148, 1
      %p152 = scmp.eq.s32.totalorder %s28, 1
      %p153 = scmp.ne.s32.totalorder %s148, %s150
      %p154 = scmp.eq.s32.totalorder %s28, 0
      %p155 = por %p153, %p154
      %p156 = scmp.ne.s32.totalorder %s148, %s150
      %p157 = scmp.eq.s32.totalorder %s33, 1
      %p158 = por %p156, %p157
      %p159 = scmp.ne.s32.totalorder %s150, %s151
      %p160 = scmp.eq.s32.totalorder %s33, 0
      %p161 = por %p159, %p160
      %p162 = scmp.ne.s32.totalorder %s150, %s151
      %p163 = scmp.eq.s32.totalorder %s34, 1
      %p164 = por %p162, %p163
      %p166 = scmp.ne.s32.totalorder %s151, %s165
      %p167 = scmp.eq.s32.totalorder %s34, 0
      %p168 = por %p166, %p167
      %s170 = sadd.s32 %s169, 1
      %p173 = scmp.eq.s32.totalorder %s28, 1
      %p174 = scmp.ne.s32.totalorder %s169, %s171
      %p175 = scmp.eq.s32.totalorder %s28, 0
      %p176 = por %p174, %p175
      %p177 = scmp.ne.s32.totalorder %s169, %s171
      %p178 = scmp.eq.s32.totalorder %s33, 1
      %p179 = por %p177, %p178
      %p180 = scmp.ne.s32.totalorder %s171, %s172
      %p181 = scmp.eq.s32.totalorder %s33, 0
      %p182 = por %p180, %p181
      %p183 = scmp.ne.s32.totalorder %s171, %s172
      %p184 = scmp.eq.s32.totalorder %s34, 1
      %p185 = por %p183, %p184
      %p187 = scmp.ne.s32.totalorder %s172, %s186
      %p188 = scmp.eq.s32.totalorder %s34, 0
      %p189 = por %p187, %p188
      %s191 = sadd.s32 %s190, 1
      %p194 = scmp.eq.s32.totalorder %s28, 1
      %p195 = scmp.ne.s32.totalorder %s190, %s192
      %p196 = scmp.eq.s32.totalorder %s28, 0
      %p197 = por %p195, %p196
      %p198 = scmp.ne.s32.totalorder %s190, %s192
      %p199 = scmp.eq.s32.totalorder %s33, 1
      %p200 = por %p198, %p199
      %p201 = scmp.ne.s32.totalorder %s192, %s193
      %p202 = scmp.eq.s32.totalorder %s33, 0
      %p203 = por %p201, %p202
      %p204 = scmp.ne.s32.totalorder %s192, %s193
      %p205 = scmp.eq.s32.totalorder %s34, 1
      %p206 = por %p204, %p205
      %p208 = scmp.ne.s32.totalorder %s193, %s207
      %p209 = scmp.eq.s32.totalorder %s34, 0
      %p210 = por %p208, %p209
      %s211 = ssub.s32 %s35, %s47
      %s212 = ssub.s32 %s36, %s43
      %s213 = sor.u32 %s211, %s212
      %p214 = scmp.eq.s32.totalorder %s213, 0
      %s216 = sadd.s32 %s215, 1
      %s217 = scalar_select %p214, %s215, %s216
      %p220 = pneg %p214
      %p221 = scmp.eq.s32.totalorder %s28, 1
      %p222 = por %p220, %p221
      %p223 = scmp.ne.s32.totalorder %s215, %s218
      %p224 = scmp.eq.s32.totalorder %s28, 0
      %p225 = por %p223, %p224
      %p226 = scmp.ne.s32.totalorder %s215, %s218
      %p227 = scmp.eq.s32.totalorder %s33, 1
      %p228 = por %p226, %p227
      %p229 = scmp.ne.s32.totalorder %s218, %s219
      %p230 = scmp.eq.s32.totalorder %s33, 0
      %p231 = por %p229, %p230
      %p232 = scmp.ne.s32.totalorder %s218, %s219
      %p233 = scmp.eq.s32.totalorder %s34, 1
      %p234 = por %p232, %p233
      %p236 = scmp.ne.s32.totalorder %s219, %s235
      %p237 = scmp.eq.s32.totalorder %s34, 0
      %p238 = por %p236, %p237
      %s239 = sadd.s32 %s35, %s36
      %s240 = sadd.s32 %s47, %s43
      %s241 = ssub.s32 %s239, %s240
      %p242 = scmp.eq.s32.totalorder %s241, 0
      %s244 = sadd.s32 %s243, 1
      %s245 = scalar_select %p242, %s243, %s244
      %p248 = pneg %p242
      %p249 = scmp.eq.s32.totalorder %s28, 1
      %p250 = por %p248, %p249
      %p251 = scmp.ne.s32.totalorder %s243, %s246
      %p252 = scmp.eq.s32.totalorder %s28, 0
      %p253 = por %p251, %p252
      %p254 = scmp.ne.s32.totalorder %s243, %s246
      %p255 = scmp.eq.s32.totalorder %s33, 1
      %p256 = por %p254, %p255
      %p257 = scmp.ne.s32.totalorder %s246, %s247
      %p258 = scmp.eq.s32.totalorder %s33, 0
      %p259 = por %p257, %p258
      %p260 = scmp.ne.s32.totalorder %s246, %s247
      %p261 = scmp.eq.s32.totalorder %s34, 1
      %p262 = por %p260, %p261
      %p264 = scmp.ne.s32.totalorder %s247, %s263
      %p265 = scmp.eq.s32.totalorder %s34, 0
      %p266 = por %p264, %p265
      %s267 = sadd.s32 %s35, %s36
      %s268 = sadd.s32 %s47, %s43
      %s269 = ssub.s32 %s267, %s268
      %p270 = scmp.eq.s32.totalorder %s269, 0
      %s272 = sadd.s32 %s271, 1
      %s273 = scalar_select %p270, %s271, %s272
      %p276 = pneg %p270
      %p277 = scmp.eq.s32.totalorder %s28, 1
      %p278 = por %p276, %p277
      %p279 = scmp.ne.s32.totalorder %s271, %s274
      %p280 = scmp.eq.s32.totalorder %s28, 0
      %p281 = por %p279, %p280
      %p282 = scmp.ne.s32.totalorder %s271, %s274
      %p283 = scmp.eq.s32.totalorder %s33, 1
      %p284 = por %p282, %p283
      %p285 = scmp.ne.s32.totalorder %s274, %s275
      %p286 = scmp.eq.s32.totalorder %s33, 0
      %p287 = por %p285, %p286
      %p288 = scmp.ne.s32.totalorder %s274, %s275
      %p289 = scmp.eq.s32.totalorder %s34, 1
      %p290 = por %p288, %p289
      %p292 = scmp.ne.s32.totalorder %s275, %s291
      %p293 = scmp.eq.s32.totalorder %s34, 0
      %p294 = por %p292, %p293
      %p295 = scmp.le.s32.totalorder 1, %s28
      %p296 = scmp.lt.s32.totalorder %s28, 3
      %p297 = pnand %p295, %p296
      %p298 = pneg %p297
      // Predicated region
      $region9: #{tpu_custom_call.1} parent=5 // pred_check
        _
      $region10: #{tpu_custom_call.1} parent=5 // pred_check_branch
        %300 = sbr.rel (%p297) target = $region12
      $region11: #{tpu_custom_call.1} parent=5 // pred_region
        %s301 = ssub.s32 %s28, 1
        // Predicated region
        $region13: #{tpu_custom_call.1} parent=11 // pred_check
          %p302 = pneg %p161
        $region14: #{tpu_custom_call.1} parent=11 // pred_check_branch
          %304 = sbr.rel (%p302) target = $region16
        $region15: #{tpu_custom_call.1} parent=11 // pred_region
          _
        $region16: #{tpu_custom_call.1} parent=11 // pred_fallthru
          _
        // Predicated region
        $region17: #{tpu_custom_call.1} parent=11 // pred_check
          %p305 = pneg %p182
        $region18: #{tpu_custom_call.1} parent=11 // pred_check_branch
          %307 = sbr.rel (%p305) target = $region20
        $region19: #{tpu_custom_call.1} parent=11 // pred_region
          _
        $region20: #{tpu_custom_call.1} parent=11 // pred_fallthru
          _
        // Predicated region
        $region21: #{tpu_custom_call.1} parent=11 // pred_check
          %p308 = pneg %p203
        $region22: #{tpu_custom_call.1} parent=11 // pred_check_branch
          %310 = sbr.rel (%p308) target = $region24
        $region23: #{tpu_custom_call.1} parent=11 // pred_region
          %312 = vsyncadd [#allocation10], 0
          %s313 = sshll.u32 %s5, 4
          %s314 = int_to_ptr.hbm [resolvable:$true] %s313
          %s315 = sshll.u32 [#allocation9], 4
          %s316 = int_to_ptr.vmem [resolvable:$true] %s315
          %321 = dma.hbm_to_vmem [thread:$0]  %s314, 9216, %s316, [#allocation10], 64, 64, 4
        $region24: #{tpu_custom_call.1} parent=11 // pred_fallthru
          _
      $region12: #{tpu_custom_call.1} parent=5 // pred_fallthru
        _
      %p322 = scmp.lt.s32.totalorder %s28, 2
      // Predicated region
      $region25: #{tpu_custom_call.1} parent=5 // pred_check
        %p323 = pneg %p322
      $region26: #{tpu_custom_call.1} parent=5 // pred_check_branch
        %325 = sbr.rel (%p323) target = $region28
      $region27: #{tpu_custom_call.1} parent=5 // pred_region
        // Predicated region
        $region29: #{tpu_custom_call.1} parent=27 // pred_check
          %p326 = pneg %p62
        $region30: #{tpu_custom_call.1} parent=27 // pred_check_branch
          %328 = sbr.rel (%p326) target = $region32
        $region31: #{tpu_custom_call.1} parent=27 // pred_region
          %s329 = sand.u32 %s52, 1
          %s330 = scalar_lea.sflag [#allocation4], %s329
          %s331 = sand.u32 %s52, 1
          %s332 = smul.addr %s331, 128
          %s333 = scalar_lea.vmem [#allocation3], %s332
          %s334 = smul.u32 16, %s36
          %336 = vsyncadd %s330, 0
          %s337 = smul.addr %s334, 2
          %s338 = smul.addr %s35, 32
          %s339 = sadd.s32 %s337, %s338
          %s340 = smul.addr %s339, 4
          %s341 = scalar_lea.hbm %s0, %s340
          %s342 = sshll.u32 %s341, 4
          %s343 = int_to_ptr.hbm [resolvable:$true] %s342
          %s344 = sshll.u32 %s333, 4
          %s345 = int_to_ptr.vmem [resolvable:$true] %s344
          %350 = dma.hbm_to_vmem [thread:$0]  %s343, 2048, %s345, %s330, 64, 64, 4
        $region32: #{tpu_custom_call.1} parent=27 // pred_fallthru
          _
        // Predicated region
        $region33: #{tpu_custom_call.1} parent=27 // pred_check
          %p351 = pneg %p98
        $region34: #{tpu_custom_call.1} parent=27 // pred_check_branch
          %353 = sbr.rel (%p351) target = $region36
        $region35: #{tpu_custom_call.1} parent=27 // pred_region
          %s354 = sand.u32 %s28, 1
          %s355 = scalar_lea.sflag [#allocation7], %s354
          %s356 = sand.u32 %s88, 1
          %s357 = smul.addr %s356, 8
          %s358 = scalar_lea.vmem [#allocation6], %s357
          %s359 = smul.u32 %s36, 16
          %s360 = ssub.s32 %s359, 1
          %p361 = scmp.gt.s32.totalorder %s360, 0
          %s362 = scalar_select %p361, %s360, 0
          %364 = vsyncadd %s355, 0
          %s365 = smul.addr %s362, 2
          %s366 = smul.addr %s35, 32
          %s367 = sadd.s32 %s365, %s366
          %s368 = smul.addr %s367, 4
          %s369 = scalar_lea.hbm %s1, %s368
          %s370 = sshll.u32 %s369, 4
          %s371 = int_to_ptr.hbm [resolvable:$true] %s370
          %s372 = sshll.u32 %s358, 4
          %s373 = int_to_ptr.vmem [resolvable:$true] %s372
          %378 = dma.hbm_to_vmem [thread:$0]  %s371, 128, %s373, %s355, 64, 64, 4
        $region36: #{tpu_custom_call.1} parent=27 // pred_fallthru
          _
        // Predicated region
        $region37: #{tpu_custom_call.1} parent=27 // pred_check
          %p379 = pneg %p134
        $region38: #{tpu_custom_call.1} parent=27 // pred_check_branch
          %381 = sbr.rel (%p379) target = $region40
        $region39: #{tpu_custom_call.1} parent=27 // pred_region
          %s382 = sand.u32 %s28, 1
          %s383 = scalar_lea.sflag [#allocation7], %s382
          %s384 = sand.u32 %s124, 1
          %s385 = smul.addr %s384, 8
          %s386 = scalar_lea.vmem [#allocation8], %s385
          %s387 = sadd.s32 %s36, 1
          %s388 = smul.u32 %s387, 16
          %p389 = scmp.lt.s32.totalorder %s388, 15
          %s390 = scalar_select %p389, %s388, 15
          %392 = vsyncadd %s383, 0
          %s393 = smul.addr %s390, 2
          %s394 = smul.addr %s35, 32
          %s395 = sadd.s32 %s393, %s394
          %s396 = smul.addr %s395, 4
          %s397 = scalar_lea.hbm %s2, %s396
          %s398 = sshll.u32 %s397, 4
          %s399 = int_to_ptr.hbm [resolvable:$true] %s398
          %s400 = sshll.u32 %s386, 4
          %s401 = int_to_ptr.vmem [resolvable:$true] %s400
          %406 = dma.hbm_to_vmem [thread:$0]  %s399, 128, %s401, %s383, 64, 64, 4
        $region40: #{tpu_custom_call.1} parent=27 // pred_fallthru
          _
      $region28: #{tpu_custom_call.1} parent=5 // pred_fallthru
        _
      %p407 = scmp.le.s32.totalorder 1, %s28
      %p408 = scmp.lt.s32.totalorder %s28, 3
      %p409 = pnand %p407, %p408
      %p410 = pneg %p409
      // Predicated region
      $region41: #{tpu_custom_call.1} parent=5 // pred_check
        _
      $region42: #{tpu_custom_call.1} parent=5 // pred_check_branch
        %412 = sbr.rel (%p409) target = $region44
      $region43: #{tpu_custom_call.1} parent=5 // pred_region
        %s413 = ssub.s32 %s28, 1
        %s414 = sand.u32 %s55, 1
        %s415 = scalar_lea.sflag [#allocation4], %s414
        %s416 = sand.u32 %s55, 1
        %s417 = smul.addr %s416, 128
        %s418 = scalar_lea.vmem [#allocation3], %s417
        // Predicated region
        $region45: #{tpu_custom_call.1} parent=43 // pred_check
          %p419 = pneg %p68
        $region46: #{tpu_custom_call.1} parent=43 // pred_check_branch
          %421 = sbr.rel (%p419) target = $region48
        $region47: #{tpu_custom_call.1} parent=43 // pred_region
          %423 = dma.done %s415, 2048
        $region48: #{tpu_custom_call.1} parent=43 // pred_fallthru
          _
        %s424 = sand.u32 %s33, 1
        %s425 = scalar_lea.sflag [#allocation7], %s424
        %s426 = sand.u32 %s91, 1
        %s427 = smul.addr %s426, 8
        %s428 = scalar_lea.vmem [#allocation6], %s427
        // Predicated region
        $region49: #{tpu_custom_call.1} parent=43 // pred_check
          %p429 = pneg %p104
        $region50: #{tpu_custom_call.1} parent=43 // pred_check_branch
          %431 = sbr.rel (%p429) target = $region52
        $region51: #{tpu_custom_call.1} parent=43 // pred_region
          %433 = dma.done %s425, 128
        $region52: #{tpu_custom_call.1} parent=43 // pred_fallthru
          _
        %s434 = sand.u32 %s33, 1
        %s435 = scalar_lea.sflag [#allocation7], %s434
        %s436 = sand.u32 %s127, 1
        %s437 = smul.addr %s436, 8
        %s438 = scalar_lea.vmem [#allocation8], %s437
        // Predicated region
        $region53: #{tpu_custom_call.1} parent=43 // pred_check
          %p439 = pneg %p140
        $region54: #{tpu_custom_call.1} parent=43 // pred_check_branch
          %441 = sbr.rel (%p439) target = $region56
        $region55: #{tpu_custom_call.1} parent=43 // pred_region
          %443 = dma.done %s435, 128
        $region56: #{tpu_custom_call.1} parent=43 // pred_fallthru
          _
        // Predicated region
        $region57: #{tpu_custom_call.1} parent=43 // pred_check
          %p444 = pneg %p203
        $region58: #{tpu_custom_call.1} parent=43 // pred_check_branch
          %446 = sbr.rel (%p444) target = $region60
        $region59: #{tpu_custom_call.1} parent=43 // pred_region
          %448 = dma.done [#allocation10], 9216
        $region60: #{tpu_custom_call.1} parent=43 // pred_fallthru
          _
        %s449 = sand.u32 %s55, 1
        %s450 = scalar_lea.sflag [#allocation4], %s449
        %s451 = sand.u32 %s55, 1
        %s452 = smul.addr %s451, 128
        %s453 = scalar_lea.vmem [#allocation3], %s452
        %p454 = pneg %p68
        %p455 = pneg %p65
        %s456 = sand.u32 %s33, 1
        %s457 = scalar_lea.sflag [#allocation7], %s456
        %s458 = sand.u32 %s91, 1
        %s459 = smul.addr %s458, 8
        %s460 = scalar_lea.vmem [#allocation6], %s459
        %p461 = pneg %p104
        %p462 = pneg %p101
        %s463 = sand.u32 %s33, 1
        %s464 = scalar_lea.sflag [#allocation7], %s463
        %s465 = sand.u32 %s127, 1
        %s466 = smul.addr %s465, 8
        %s467 = scalar_lea.vmem [#allocation8], %s466
        %p468 = pneg %p140
        %p469 = pneg %p137
        %p470 = pneg %p161
        %p471 = pneg %p158
        %p472 = pneg %p182
        %p473 = pneg %p179
        %p474 = pneg %p203
        %p475 = pneg %p200
        %p476 = pneg %p231
        %p477 = pneg %p228
        %s478 = sand.u32 %s218, 1
        %s479 = scalar_lea.sflag [#allocation5], %s478
        %s480 = sand.u32 %s218, 1
        %s481 = smul.addr %s480, 128
        %s482 = scalar_lea.vmem [#allocation11], %s481
        %p483 = pneg %p259
        %p484 = pneg %p256
        %s485 = sand.u32 %s33, 1
        %s486 = scalar_lea.sflag [#allocation13], %s485
        %s487 = sand.u32 %s246, 1
        %s488 = scalar_lea.vmem [#allocation12], %s487
        %p489 = pneg %p287
        %p490 = pneg %p284
        %s491 = sand.u32 %s33, 1
        %s492 = scalar_lea.sflag [#allocation13], %s491
        %s493 = sand.u32 %s274, 1
        %s494 = scalar_lea.vmem [#allocation14], %s493
        %s495 = smul.u32 16, %s38
        %s496 = smul.u32 %s38, 16
        %s497 = ssub.s32 %s496, 1
        %p498 = scmp.gt.s32.totalorder %s497, 0
        %s499 = scalar_select %p498, %s497, 0
        %s500 = sadd.s32 %s38, 1
        %s501 = smul.u32 %s500, 16
        %p502 = scmp.lt.s32.totalorder %s501, 15
        %s503 = scalar_select %p502, %s501, 15
        %s504 = smul.u32 32, %s38
        %s505 = sadd.s32 %s37, %s38
        %s506 = sadd.s32 %s37, %s38
        %v507 = vld [vmem:[%s3] sm:$0x1]
        %v508 = vld [vmem:[%s4] sm:$0x1]
        %v509 = vld [vmem:[%s418] sm:$0xf]
        %v510 = vld [vmem:[%s418 + $0x4] sm:$0xf]
        %v511 = vld [vmem:[%s418 + $0x8] sm:$0xf]
        %v512 = vld [vmem:[%s418 + $0xc] sm:$0xf]
        %v513 = vld [vmem:[%s418 + $0x10] sm:$0xf]
        %v514 = vld [vmem:[%s418 + $0x14] sm:$0xf]
        %v515 = vld [vmem:[%s418 + $0x18] sm:$0xf]
        %v516 = vld [vmem:[%s418 + $0x1c] sm:$0xf]
        %v517 = vld [vmem:[%s418 + $0x20] sm:$0xf]
        %v518 = vld [vmem:[%s418 + $0x24] sm:$0xf]
        %v519 = vld [vmem:[%s418 + $0x28] sm:$0xf]
        %v520 = vld [vmem:[%s418 + $0x2c] sm:$0xf]
        %v521 = vld [vmem:[%s418 + $0x30] sm:$0xf]
        %v522 = vld [vmem:[%s418 + $0x34] sm:$0xf]
        %v523 = vld [vmem:[%s418 + $0x38] sm:$0xf]
        %v524 = vld [vmem:[%s418 + $0x3c] sm:$0xf]
        %v525 = vld [vmem:[%s418 + $0x40] sm:$0xf]
        %v526 = vld [vmem:[%s418 + $0x44] sm:$0xf]
        %v527 = vld [vmem:[%s418 + $0x48] sm:$0xf]
        %v528 = vld [vmem:[%s418 + $0x4c] sm:$0xf]
        %v529 = vld [vmem:[%s418 + $0x50] sm:$0xf]
        %v530 = vld [vmem:[%s418 + $0x54] sm:$0xf]
        %v531 = vld [vmem:[%s418 + $0x58] sm:$0xf]
        %v532 = vld [vmem:[%s418 + $0x5c] sm:$0xf]
        %v533 = vld [vmem:[%s418 + $0x60] sm:$0xf]
        %v534 = vld [vmem:[%s418 + $0x64] sm:$0xf]
        %v535 = vld [vmem:[%s418 + $0x68] sm:$0xf]
        %v536 = vld [vmem:[%s418 + $0x6c] sm:$0xf]
        %v537 = vld [vmem:[%s418 + $0x70] sm:$0xf]
        %v538 = vld [vmem:[%s418 + $0x74] sm:$0xf]
        %v539 = vld [vmem:[%s418 + $0x78] sm:$0xf]
        %v540 = vld [vmem:[%s418 + $0x7c] sm:$0xf]
        %v541 = vunpack.c.l.bf16 %v509
        %v542 = vunpack.c.l.bf16 %v510
        %v543 = vunpack.c.l.bf16 %v511
        %v544 = vunpack.c.l.bf16 %v512
        %v545 = vunpack.c.l.bf16 %v513
        %v546 = vunpack.c.l.bf16 %v514
        %v547 = vunpack.c.l.bf16 %v515
        %v548 = vunpack.c.l.bf16 %v516
        %v549 = vunpack.c.l.bf16 %v517
        %v550 = vunpack.c.l.bf16 %v518
        %v551 = vunpack.c.l.bf16 %v519
        %v552 = vunpack.c.l.bf16 %v520
        %v553 = vunpack.c.l.bf16 %v521
        %v554 = vunpack.c.l.bf16 %v522
        %v555 = vunpack.c.l.bf16 %v523
        %v556 = vunpack.c.l.bf16 %v524
        %v557 = vunpack.c.l.bf16 %v525
        %v558 = vunpack.c.l.bf16 %v526
        %v559 = vunpack.c.l.bf16 %v527
        %v560 = vunpack.c.l.bf16 %v528
        %v561 = vunpack.c.l.bf16 %v529
        %v562 = vunpack.c.l.bf16 %v530
        %v563 = vunpack.c.l.bf16 %v531
        %v564 = vunpack.c.l.bf16 %v532
        %v565 = vunpack.c.l.bf16 %v533
        %v566 = vunpack.c.l.bf16 %v534
        %v567 = vunpack.c.l.bf16 %v535
        %v568 = vunpack.c.l.bf16 %v536
        %v569 = vunpack.c.l.bf16 %v537
        %v570 = vunpack.c.l.bf16 %v538
        %v571 = vunpack.c.l.bf16 %v539
        %v572 = vunpack.c.l.bf16 %v540
        %v574 = vperm.slane %v507, 0
        %v576 = vmul.f32 %v541, %v574
        %v577 = vmul.f32 %v542, %v574
        %v578 = vmul.f32 %v543, %v574
        %v579 = vmul.f32 %v544, %v574
        %v580 = vmul.f32 %v545, %v574
        %v581 = vmul.f32 %v546, %v574
        %v582 = vmul.f32 %v547, %v574
        %v583 = vmul.f32 %v548, %v574
        %v584 = vmul.f32 %v549, %v574
        %v585 = vmul.f32 %v550, %v574
        %v586 = vmul.f32 %v551, %v574
        %v587 = vmul.f32 %v552, %v574
        %v588 = vmul.f32 %v553, %v574
        %v589 = vmul.f32 %v554, %v574
        %v590 = vmul.f32 %v555, %v574
        %v591 = vmul.f32 %v556, %v574
        %v592 = vmul.f32 %v557, %v574
        %v593 = vmul.f32 %v558, %v574
        %v594 = vmul.f32 %v559, %v574
        %v595 = vmul.f32 %v560, %v574
        %v596 = vmul.f32 %v561, %v574
        %v597 = vmul.f32 %v562, %v574
        %v598 = vmul.f32 %v563, %v574
        %v599 = vmul.f32 %v564, %v574
        %v600 = vmul.f32 %v565, %v574
        %v601 = vmul.f32 %v566, %v574
        %v602 = vmul.f32 %v567, %v574
        %v603 = vmul.f32 %v568, %v574
        %v604 = vmul.f32 %v569, %v574
        %v605 = vmul.f32 %v570, %v574
        %v606 = vmul.f32 %v571, %v574
        %v607 = vmul.f32 %v572, %v574
        %v609 = vperm.slane %v508, 0
        %v611 = vadd.f32 %v576, %v609
        %v612 = vadd.f32 %v577, %v609
        %v613 = vadd.f32 %v578, %v609
        %v614 = vadd.f32 %v579, %v609
        %v615 = vadd.f32 %v580, %v609
        %v616 = vadd.f32 %v581, %v609
        %v617 = vadd.f32 %v582, %v609
        %v618 = vadd.f32 %v583, %v609
        %v619 = vadd.f32 %v584, %v609
        %v620 = vadd.f32 %v585, %v609
        %v621 = vadd.f32 %v586, %v609
        %v622 = vadd.f32 %v587, %v609
        %v623 = vadd.f32 %v588, %v609
        %v624 = vadd.f32 %v589, %v609
        %v625 = vadd.f32 %v590, %v609
        %v626 = vadd.f32 %v591, %v609
        %v627 = vadd.f32 %v592, %v609
        %v628 = vadd.f32 %v593, %v609
        %v629 = vadd.f32 %v594, %v609
        %v630 = vadd.f32 %v595, %v609
        %v631 = vadd.f32 %v596, %v609
        %v632 = vadd.f32 %v597, %v609
        %v633 = vadd.f32 %v598, %v609
        %v634 = vadd.f32 %v599, %v609
        %v635 = vadd.f32 %v600, %v609
        %v636 = vadd.f32 %v601, %v609
        %v637 = vadd.f32 %v602, %v609
        %v638 = vadd.f32 %v603, %v609
        %v639 = vadd.f32 %v604, %v609
        %v640 = vadd.f32 %v605, %v609
        %v641 = vadd.f32 %v606, %v609
        %v642 = vadd.f32 %v607, %v609
        %p643 = scmp.gt.s32.totalorder %s38, 0
        %s644 = scalar_select %p643, 1, 0
        %s645 = scvt.s32.f32 %s644
        %p646 = scmp.lt.s32.totalorder %s38, 0
        %s647 = scalar_select %p646, 1, 0
        %s648 = scvt.s32.f32 %s647
        %v649 = vld [vmem:[%s428] sm:$0xf]
        %v650 = vld [vmem:[%s428 + $0x4] sm:$0xf]
        %v651 = vunpack.c.l.bf16 %v649
        %v652 = vunpack.c.l.bf16 %v650
        %v653 = vmul.f32 %v651, %v574
        %v654 = vmul.f32 %v652, %v574
        %v655 = vadd.f32 %v653, %v609
        %v656 = vadd.f32 %v654, %v609
        %v657 = vstv %s645
        %v658 = vmul.f32 %v655, %v657
        %v659 = vmul.f32 %v656, %v657
        %v660 = vld [vmem:[%s438] sm:$0xf]
        %v661 = vld [vmem:[%s438 + $0x4] sm:$0xf]
        %v662 = vunpack.c.l.bf16 %v660
        %v663 = vunpack.c.l.bf16 %v661
        %v664 = vmul.f32 %v662, %v574
        %v665 = vmul.f32 %v663, %v574
        %v666 = vadd.f32 %v664, %v609
        %v667 = vadd.f32 %v665, %v609
        %v668 = vstv %s648
        %v669 = vmul.f32 %v666, %v668
        %v670 = vmul.f32 %v667, %v668
        %671 = vst [vmem:[#allocation2] sm:$0x1] 0.0
        %672 = vst [vmem:[#allocation2 + $0x18] sm:$0x1] 0.0
        %673 = vst [vmem:[#allocation2 + $0x30] sm:$0x1] 0.0
        %674 = vst [vmem:[#allocation2 + $0x48] sm:$0x1] 0.0
        %675 = vst [vmem:[#allocation2 + $0x60] sm:$0x1] 0.0
        %676 = vst [vmem:[#allocation2 + $0x78] sm:$0x1] 0.0
        %677 = vst [vmem:[#allocation2 + $0x90] sm:$0x1] 0.0
        %678 = vst [vmem:[#allocation2 + $0xa8] sm:$0x1] 0.0
        %679 = vst [vmem:[#allocation2 + $0xc0] sm:$0x1] 0.0
        %680 = vst [vmem:[#allocation2 + $0xd8] sm:$0x1] 0.0
        %681 = vst [vmem:[#allocation2 + $0xf0] sm:$0x1] 0.0
        %682 = vst [vmem:[#allocation2 + $0x108] sm:$0x1] 0.0
        %683 = vst [vmem:[#allocation2 + $0x120] sm:$0x1] 0.0
        %684 = vst [vmem:[#allocation2 + $0x138] sm:$0x1] 0.0
        %685 = vst [vmem:[#allocation2 + $0x150] sm:$0x1] 0.0
        %686 = vst [vmem:[#allocation2 + $0x168] sm:$0x1] 0.0
        %687 = vst [vmem:[#allocation2 + $0x180] sm:$0x1] 0.0
        %688 = vst [vmem:[#allocation2 + $0x198] sm:$0x1] 0.0
        %689 = vst [vmem:[#allocation2 + $0x11] sm:$0x1] 0.0
        %690 = vst [vmem:[#allocation2 + $0x29] sm:$0x1] 0.0
        %691 = vst [vmem:[#allocation2 + $0x41] sm:$0x1] 0.0
        %692 = vst [vmem:[#allocation2 + $0x59] sm:$0x1] 0.0
        %693 = vst [vmem:[#allocation2 + $0x71] sm:$0x1] 0.0
        %694 = vst [vmem:[#allocation2 + $0x89] sm:$0x1] 0.0
        %695 = vst [vmem:[#allocation2 + $0xa1] sm:$0x1] 0.0
        %696 = vst [vmem:[#allocation2 + $0xb9] sm:$0x1] 0.0
        %697 = vst [vmem:[#allocation2 + $0xd1] sm:$0x1] 0.0
        %698 = vst [vmem:[#allocation2 + $0xe9] sm:$0x1] 0.0
        %699 = vst [vmem:[#allocation2 + $0x101] sm:$0x1] 0.0
        %700 = vst [vmem:[#allocation2 + $0x119] sm:$0x1] 0.0
        %701 = vst [vmem:[#allocation2 + $0x131] sm:$0x1] 0.0
        %702 = vst [vmem:[#allocation2 + $0x149] sm:$0x1] 0.0
        %703 = vst [vmem:[#allocation2 + $0x161] sm:$0x1] 0.0
        %704 = vst [vmem:[#allocation2 + $0x179] sm:$0x1] 0.0
        %705 = vst [vmem:[#allocation2 + $0x191] sm:$0x1] 0.0
        %706 = vst [vmem:[#allocation2 + $0x1a9] sm:$0x1] 0.0
        %707 = vst [vmem:[#allocation2 + $0x1] sm:$0xff] %v658
        %708 = vst [vmem:[#allocation2 + $0x9] sm:$0xff] %v659
        %s709 = scalar_lea.vmem [#allocation2], 24
        %710 = vst [vmem:[%s709 + $0x1] sm:$0xff] %v611
        %711 = vst [vmem:[%s709 + $0x9] sm:$0xff] %v612
        %712 = vst [vmem:[%s709 + $0x19] sm:$0xff] %v613
        %713 = vst [vmem:[%s709 + $0x21] sm:$0xff] %v614
        %714 = vst [vmem:[%s709 + $0x31] sm:$0xff] %v615
        %715 = vst [vmem:[%s709 + $0x39] sm:$0xff] %v616
        %716 = vst [vmem:[%s709 + $0x49] sm:$0xff] %v617
        %717 = vst [vmem:[%s709 + $0x51] sm:$0xff] %v618
        %718 = vst [vmem:[%s709 + $0x61] sm:$0xff] %v619
        %719 = vst [vmem:[%s709 + $0x69] sm:$0xff] %v620
        %720 = vst [vmem:[%s709 + $0x79] sm:$0xff] %v621
        %721 = vst [vmem:[%s709 + $0x81] sm:$0xff] %v622
        %722 = vst [vmem:[%s709 + $0x91] sm:$0xff] %v623
        %723 = vst [vmem:[%s709 + $0x99] sm:$0xff] %v624
        %724 = vst [vmem:[%s709 + $0xa9] sm:$0xff] %v625
        %725 = vst [vmem:[%s709 + $0xb1] sm:$0xff] %v626
        %726 = vst [vmem:[%s709 + $0xc1] sm:$0xff] %v627
        %727 = vst [vmem:[%s709 + $0xc9] sm:$0xff] %v628
        %728 = vst [vmem:[%s709 + $0xd9] sm:$0xff] %v629
        %729 = vst [vmem:[%s709 + $0xe1] sm:$0xff] %v630
        %730 = vst [vmem:[%s709 + $0xf1] sm:$0xff] %v631
        %731 = vst [vmem:[%s709 + $0xf9] sm:$0xff] %v632
        %732 = vst [vmem:[%s709 + $0x109] sm:$0xff] %v633
        %733 = vst [vmem:[%s709 + $0x111] sm:$0xff] %v634
        %734 = vst [vmem:[%s709 + $0x121] sm:$0xff] %v635
        %735 = vst [vmem:[%s709 + $0x129] sm:$0xff] %v636
        %736 = vst [vmem:[%s709 + $0x139] sm:$0xff] %v637
        %737 = vst [vmem:[%s709 + $0x141] sm:$0xff] %v638
        %738 = vst [vmem:[%s709 + $0x151] sm:$0xff] %v639
        %739 = vst [vmem:[%s709 + $0x159] sm:$0xff] %v640
        %740 = vst [vmem:[%s709 + $0x169] sm:$0xff] %v641
        %741 = vst [vmem:[%s709 + $0x171] sm:$0xff] %v642
        %s742 = scalar_lea.vmem [#allocation2], 408
        %743 = vst [vmem:[%s742 + $0x1] sm:$0xff] %v669
        %744 = vst [vmem:[%s742 + $0x9] sm:$0xff] %v670
        %v745 = vld [vmem:[#allocation2] sm:$0xff]
        %v746 = vld [vmem:[#allocation2 + $0x8] sm:$0xff]
        %v747 = vld [vmem:[#allocation2 + $0x10] sm:$0x3]
        %v748 = vld [vmem:[#allocation2 + $0x18] sm:$0xff]
        %v749 = vld [vmem:[#allocation2 + $0x20] sm:$0xff]
        %v750 = vld [vmem:[#allocation2 + $0x28] sm:$0x3]
        %v751 = vld [vmem:[#allocation2 + $0x30] sm:$0xff]
        %v752 = vld [vmem:[#allocation2 + $0x38] sm:$0xff]
        %v753 = vld [vmem:[#allocation2 + $0x40] sm:$0x3]
        %v754 = vld [vmem:[#allocation2 + $0x48] sm:$0xff]
        %v755 = vld [vmem:[#allocation2 + $0x50] sm:$0xff]
        %v756 = vld [vmem:[#allocation2 + $0x58] sm:$0x3]
        %v757 = vld [vmem:[#allocation2 + $0x60] sm:$0xff]
        %v758 = vld [vmem:[#allocation2 + $0x68] sm:$0xff]
        %v759 = vld [vmem:[#allocation2 + $0x70] sm:$0x3]
        %v760 = vld [vmem:[#allocation2 + $0x78] sm:$0xff]
        %v761 = vld [vmem:[#allocation2 + $0x80] sm:$0xff]
        %v762 = vld [vmem:[#allocation2 + $0x88] sm:$0x3]
        %v763 = vld [vmem:[#allocation2 + $0x90] sm:$0xff]
        %v764 = vld [vmem:[#allocation2 + $0x98] sm:$0xff]
        %v765 = vld [vmem:[#allocation2 + $0xa0] sm:$0x3]
        %v766 = vld [vmem:[#allocation2 + $0xa8] sm:$0xff]
        %v767 = vld [vmem:[#allocation2 + $0xb0] sm:$0xff]
        %v768 = vld [vmem:[#allocation2 + $0xb8] sm:$0x3]
        %v769 = vld [vmem:[#allocation2 + $0xc0] sm:$0xff]
        %v770 = vld [vmem:[#allocation2 + $0xc8] sm:$0xff]
        %v771 = vld [vmem:[#allocation2 + $0xd0] sm:$0x3]
        %v772 = vld [vmem:[#allocation2 + $0xd8] sm:$0xff]
        %v773 = vld [vmem:[#allocation2 + $0xe0] sm:$0xff]
        %v774 = vld [vmem:[#allocation2 + $0xe8] sm:$0x3]
        %v775 = vld [vmem:[#allocation2 + $0xf0] sm:$0xff]
        %v776 = vld [vmem:[#allocation2 + $0xf8] sm:$0xff]
        %v777 = vld [vmem:[#allocation2 + $0x100] sm:$0x3]
        %v778 = vld [vmem:[#allocation2 + $0x108] sm:$0xff]
        %v779 = vld [vmem:[#allocation2 + $0x110] sm:$0xff]
        %v780 = vld [vmem:[#allocation2 + $0x118] sm:$0x3]
        %v781 = vld [vmem:[#allocation2 + $0x120] sm:$0xff]
        %v782 = vld [vmem:[#allocation2 + $0x128] sm:$0xff]
        %v783 = vld [vmem:[#allocation2 + $0x130] sm:$0x3]
        %v784 = vld [vmem:[#allocation2 + $0x138] sm:$0xff]
        %v785 = vld [vmem:[#allocation2 + $0x140] sm:$0xff]
        %v786 = vld [vmem:[#allocation2 + $0x148] sm:$0x3]
        %v787 = vld [vmem:[#allocation2 + $0x150] sm:$0xff]
        %v788 = vld [vmem:[#allocation2 + $0x158] sm:$0xff]
        %v789 = vld [vmem:[#allocation2 + $0x160] sm:$0x3]
        %v790 = vld [vmem:[#allocation2 + $0x168] sm:$0xff]
        %v791 = vld [vmem:[#allocation2 + $0x170] sm:$0xff]
        %v792 = vld [vmem:[#allocation2 + $0x178] sm:$0x3]
        %v793 = vld [vmem:[#allocation2 + $0x180] sm:$0xff]
        %v794 = vld [vmem:[#allocation2 + $0x188] sm:$0xff]
        %v795 = vld [vmem:[#allocation2 + $0x190] sm:$0x3]
        %v796 = vld [vmem:[#allocation2 + $0x198] sm:$0xff]
        %v797 = vld [vmem:[#allocation2 + $0x1a0] sm:$0xff]
        %v798 = vld [vmem:[#allocation2 + $0x1a8] sm:$0x3]
        %v799 = vpack.c.bf16 %v745, %v745
        %v800 = vpack.c.bf16 %v746, %v746
        %v801 = vpack.c.bf16 %v747, %v747
        %v802 = vpack.c.bf16 %v748, %v748
        %v803 = vpack.c.bf16 %v749, %v749
        %v804 = vpack.c.bf16 %v750, %v750
        %v805 = vpack.c.bf16 %v751, %v751
        %v806 = vpack.c.bf16 %v752, %v752
        %v807 = vpack.c.bf16 %v753, %v753
        %v808 = vpack.c.bf16 %v754, %v754
        %v809 = vpack.c.bf16 %v755, %v755
        %v810 = vpack.c.bf16 %v756, %v756
        %v811 = vpack.c.bf16 %v757, %v757
        %v812 = vpack.c.bf16 %v758, %v758
        %v813 = vpack.c.bf16 %v759, %v759
        %v814 = vpack.c.bf16 %v760, %v760
        %v815 = vpack.c.bf16 %v761, %v761
        %v816 = vpack.c.bf16 %v762, %v762
        %v817 = vpack.c.bf16 %v763, %v763
        %v818 = vpack.c.bf16 %v764, %v764
        %v819 = vpack.c.bf16 %v765, %v765
        %v820 = vpack.c.bf16 %v766, %v766
        %v821 = vpack.c.bf16 %v767, %v767
        %v822 = vpack.c.bf16 %v768, %v768
        %v823 = vpack.c.bf16 %v769, %v769
        %v824 = vpack.c.bf16 %v770, %v770
        %v825 = vpack.c.bf16 %v771, %v771
        %v826 = vpack.c.bf16 %v772, %v772
        %v827 = vpack.c.bf16 %v773, %v773
        %v828 = vpack.c.bf16 %v774, %v774
        %v829 = vpack.c.bf16 %v775, %v775
        %v830 = vpack.c.bf16 %v776, %v776
        %v831 = vpack.c.bf16 %v777, %v777
        %v832 = vpack.c.bf16 %v778, %v778
        %v833 = vpack.c.bf16 %v779, %v779
        %v834 = vpack.c.bf16 %v780, %v780
        %v835 = vpack.c.bf16 %v781, %v781
        %v836 = vpack.c.bf16 %v782, %v782
        %v837 = vpack.c.bf16 %v783, %v783
        %v838 = vpack.c.bf16 %v784, %v784
        %v839 = vpack.c.bf16 %v785, %v785
        %v840 = vpack.c.bf16 %v786, %v786
        %v841 = vpack.c.bf16 %v787, %v787
        %v842 = vpack.c.bf16 %v788, %v788
        %v843 = vpack.c.bf16 %v789, %v789
        %v844 = vpack.c.bf16 %v790, %v790
        %v845 = vpack.c.bf16 %v791, %v791
        %v846 = vpack.c.bf16 %v792, %v792
        %v847 = vpack.c.bf16 %v793, %v793
        %v848 = vpack.c.bf16 %v794, %v794
        %v849 = vpack.c.bf16 %v795, %v795
        %v850 = vpack.c.bf16 %v796, %v796
        %v851 = vpack.c.bf16 %v797, %v797
        %v852 = vpack.c.bf16 %v798, %v798
        %v853 = vld [vmem:[#allocation9] sm:$0xf]
        %v854 = vld [vmem:[#allocation9 + $0x4] sm:$0xf]
        %v855 = vld [vmem:[#allocation9 + $0x8] sm:$0xf]
        %v856 = vld [vmem:[#allocation9 + $0xc] sm:$0xf]
        %v857 = vld [vmem:[#allocation9 + $0x10] sm:$0xf]
        %v858 = vld [vmem:[#allocation9 + $0x14] sm:$0xf]
        %v859 = vld [vmem:[#allocation9 + $0x18] sm:$0xf]
        %v860 = vld [vmem:[#allocation9 + $0x1c] sm:$0xf]
        %v861 = vld [vmem:[#allocation9 + $0x20] sm:$0xf]
        %v862 = vld [vmem:[#allocation9 + $0x24] sm:$0xf]
        %v863 = vld [vmem:[#allocation9 + $0x28] sm:$0xf]
        %v864 = vld [vmem:[#allocation9 + $0x2c] sm:$0xf]
        %v865 = vld [vmem:[#allocation9 + $0x30] sm:$0xf]
        %v866 = vld [vmem:[#allocation9 + $0x34] sm:$0xf]
        %v867 = vld [vmem:[#allocation9 + $0x38] sm:$0xf]
        %v868 = vld [vmem:[#allocation9 + $0x3c] sm:$0xf]
        %s869 = scalar_lea.vmem [#allocation9], 192
        %v870 = vld [vmem:[%s869] sm:$0xf]
        %v871 = vld [vmem:[%s869 + $0x4] sm:$0xf]
        %v872 = vld [vmem:[%s869 + $0x8] sm:$0xf]
        %v873 = vld [vmem:[%s869 + $0xc] sm:$0xf]
        %v874 = vld [vmem:[%s869 + $0x10] sm:$0xf]
        %v875 = vld [vmem:[%s869 + $0x14] sm:$0xf]
        %v876 = vld [vmem:[%s869 + $0x18] sm:$0xf]
        %v877 = vld [vmem:[%s869 + $0x1c] sm:$0xf]
        %v878 = vld [vmem:[%s869 + $0x20] sm:$0xf]
        %v879 = vld [vmem:[%s869 + $0x24] sm:$0xf]
        %v880 = vld [vmem:[%s869 + $0x28] sm:$0xf]
        %v881 = vld [vmem:[%s869 + $0x2c] sm:$0xf]
        %v882 = vld [vmem:[%s869 + $0x30] sm:$0xf]
        %v883 = vld [vmem:[%s869 + $0x34] sm:$0xf]
        %v884 = vld [vmem:[%s869 + $0x38] sm:$0xf]
        %v885 = vld [vmem:[%s869 + $0x3c] sm:$0xf]
        %v918 = vunpack.c.l.b16 %v802
        %v919 = vunpack.c.l.b16 %v803
        %v920 = vunpack.c.l.b16 %v805
        %v921 = vunpack.c.l.b16 %v806
        %v922 = vunpack.c.l.b16 %v808
        %v923 = vunpack.c.l.b16 %v809
        %v924 = vunpack.c.l.b16 %v811
        %v925 = vunpack.c.l.b16 %v812
        %v926 = vunpack.c.l.b16 %v814
        %v927 = vunpack.c.l.b16 %v815
        %v928 = vunpack.c.l.b16 %v817
        %v929 = vunpack.c.l.b16 %v818
        %v930 = vunpack.c.l.b16 %v820
        %v931 = vunpack.c.l.b16 %v821
        %v932 = vunpack.c.l.b16 %v823
        %v933 = vunpack.c.l.b16 %v824
        %v934 = vunpack.c.l.b16 %v826
        %v935 = vunpack.c.l.b16 %v827
        %v936 = vunpack.c.l.b16 %v829
        %v937 = vunpack.c.l.b16 %v830
        %v938 = vunpack.c.l.b16 %v832
        %v939 = vunpack.c.l.b16 %v833
        %v940 = vunpack.c.l.b16 %v835
        %v941 = vunpack.c.l.b16 %v836
        %v942 = vunpack.c.l.b16 %v838
        %v943 = vunpack.c.l.b16 %v839
        %v944 = vunpack.c.l.b16 %v841
        %v945 = vunpack.c.l.b16 %v842
        %v946 = vunpack.c.l.b16 %v844
        %v947 = vunpack.c.l.b16 %v845
        %v948 = vunpack.c.l.b16 %v847
        %v949 = vunpack.c.l.b16 %v848
        %v950 = vpack.c.b16 %v919, %v918
        %v951 = vpack.c.b16 %v921, %v920
        %v952 = vpack.c.b16 %v923, %v922
        %v953 = vpack.c.b16 %v925, %v924
        %v954 = vpack.c.b16 %v927, %v926
        %v955 = vpack.c.b16 %v929, %v928
        %v956 = vpack.c.b16 %v931, %v930
        %v957 = vpack.c.b16 %v933, %v932
        %v958 = vpack.c.b16 %v935, %v934
        %v959 = vpack.c.b16 %v937, %v936
        %v960 = vpack.c.b16 %v939, %v938
        %v961 = vpack.c.b16 %v941, %v940
        %v962 = vpack.c.b16 %v943, %v942
        %v963 = vpack.c.b16 %v945, %v944
        %v964 = vpack.c.b16 %v947, %v946
        %v965 = vpack.c.b16 %v949, %v948
        %v998 = vunpack.c.l.b16 %v870
        %v999 = vunpack.c.l.b16 %v871
        %v1000 = vunpack.c.l.b16 %v872
        %v1001 = vunpack.c.l.b16 %v873
        %v1002 = vunpack.c.l.b16 %v874
        %v1003 = vunpack.c.l.b16 %v875
        %v1004 = vunpack.c.l.b16 %v876
        %v1005 = vunpack.c.l.b16 %v877
        %v1006 = vunpack.c.l.b16 %v878
        %v1007 = vunpack.c.l.b16 %v879
        %v1008 = vunpack.c.l.b16 %v880
        %v1009 = vunpack.c.l.b16 %v881
        %v1010 = vunpack.c.l.b16 %v882
        %v1011 = vunpack.c.l.b16 %v883
        %v1012 = vunpack.c.l.b16 %v884
        %v1013 = vunpack.c.l.b16 %v885
        %v1014 = vpack.c.b16 %v999, %v998
        %v1015 = vpack.c.b16 %v1001, %v1000
        %v1016 = vpack.c.b16 %v1003, %v1002
        %v1017 = vpack.c.b16 %v1005, %v1004
        %v1018 = vpack.c.b16 %v1007, %v1006
        %v1019 = vpack.c.b16 %v1009, %v1008
        %v1020 = vpack.c.b16 %v1011, %v1010
        %v1021 = vpack.c.b16 %v1013, %v1012
        %1030 = vmatpush.bf16.msra.mxu0 %v1021
        %1031 = vmatpush.bf16.msra.mxu0 %v1020
        %1032 = vmatpush.bf16.msra.mxu0 %v1019
        %1033 = vmatpush.bf16.msra.mxu0 %v1018
        %1034 = vmatpush.bf16.msra.mxu0 %v1017
        %1035 = vmatpush.bf16.msra.mxu0 %v1016
        %1036 = vmatpush.bf16.msra.mxu0 %v1015
        %1037 = vmatpush.bf16.msra.mxu0 %v1014
        %1038 = vmatmul.bf16.gmra.mxu0 %v950
        %v1039 = vpop.f32.mrf.mxu0
        %v1040 = vadd.f32 0.0, %v1039
        %v1041 = vpop.f32.mrf.mxu0
        %v1042 = vadd.f32 0.0, %v1041
        %1043 = vmatmul.bf16.gmra.mxu0 %v951
        %v1044 = vpop.f32.mrf.mxu0
        %v1045 = vadd.f32 0.0, %v1044
        %v1046 = vpop.f32.mrf.mxu0
        %v1047 = vadd.f32 0.0, %v1046
        %1048 = vmatmul.bf16.gmra.mxu0 %v952
        %v1049 = vpop.f32.mrf.mxu0
        %v1050 = vadd.f32 0.0, %v1049
        %v1051 = vpop.f32.mrf.mxu0
        %v1052 = vadd.f32 0.0, %v1051
        %1053 = vmatmul.bf16.gmra.mxu0 %v953
        %v1054 = vpop.f32.mrf.mxu0
        %v1055 = vadd.f32 0.0, %v1054
        %v1056 = vpop.f32.mrf.mxu0
        %v1057 = vadd.f32 0.0, %v1056
        %1058 = vmatmul.bf16.gmra.mxu0 %v954
        %v1059 = vpop.f32.mrf.mxu0
        %v1060 = vadd.f32 0.0, %v1059
        %v1061 = vpop.f32.mrf.mxu0
        %v1062 = vadd.f32 0.0, %v1061
        %1063 = vmatmul.bf16.gmra.mxu0 %v955
        %v1064 = vpop.f32.mrf.mxu0
        %v1065 = vadd.f32 0.0, %v1064
        %v1066 = vpop.f32.mrf.mxu0
        %v1067 = vadd.f32 0.0, %v1066
        %1068 = vmatmul.bf16.gmra.mxu0 %v956
        %v1069 = vpop.f32.mrf.mxu0
        %v1070 = vadd.f32 0.0, %v1069
        %v1071 = vpop.f32.mrf.mxu0
        %v1072 = vadd.f32 0.0, %v1071
        %1073 = vmatmul.bf16.gmra.mxu0 %v957
        %v1074 = vpop.f32.mrf.mxu0
        %v1075 = vadd.f32 0.0, %v1074
        %v1076 = vpop.f32.mrf.mxu0
        %v1077 = vadd.f32 0.0, %v1076
        %1078 = vmatmul.bf16.gmra.mxu0 %v958
        %v1079 = vpop.f32.mrf.mxu0
        %v1080 = vadd.f32 0.0, %v1079
        %v1081 = vpop.f32.mrf.mxu0
        %v1082 = vadd.f32 0.0, %v1081
        %1083 = vmatmul.bf16.gmra.mxu0 %v959
        %v1084 = vpop.f32.mrf.mxu0
        %v1085 = vadd.f32 0.0, %v1084
        %v1086 = vpop.f32.mrf.mxu0
        %v1087 = vadd.f32 0.0, %v1086
        %1088 = vmatmul.bf16.gmra.mxu0 %v960
        %v1089 = vpop.f32.mrf.mxu0
        %v1090 = vadd.f32 0.0, %v1089
        %v1091 = vpop.f32.mrf.mxu0
        %v1092 = vadd.f32 0.0, %v1091
        %1093 = vmatmul.bf16.gmra.mxu0 %v961
        %v1094 = vpop.f32.mrf.mxu0
        %v1095 = vadd.f32 0.0, %v1094
        %v1096 = vpop.f32.mrf.mxu0
        %v1097 = vadd.f32 0.0, %v1096
        %1098 = vmatmul.bf16.gmra.mxu0 %v962
        %v1099 = vpop.f32.mrf.mxu0
        %v1100 = vadd.f32 0.0, %v1099
        %v1101 = vpop.f32.mrf.mxu0
        %v1102 = vadd.f32 0.0, %v1101
        %1103 = vmatmul.bf16.gmra.mxu0 %v963
        %v1104 = vpop.f32.mrf.mxu0
        %v1105 = vadd.f32 0.0, %v1104
        %v1106 = vpop.f32.mrf.mxu0
        %v1107 = vadd.f32 0.0, %v1106
        %1108 = vmatmul.bf16.gmra.mxu0 %v964
        %v1109 = vpop.f32.mrf.mxu0
        %v1110 = vadd.f32 0.0, %v1109
        %v1111 = vpop.f32.mrf.mxu0
        %v1112 = vadd.f32 0.0, %v1111
        %1113 = vmatmul.bf16.gmra.mxu0 %v965
        %v1114 = vpop.f32.mrf.mxu0
        %v1115 = vadd.f32 0.0, %v1114
        %v1116 = vpop.f32.mrf.mxu0
        %v1117 = vadd.f32 0.0, %v1116
        %1118 = vdwg.mxu0
        %v1121 = vunpack.c.l.b16 %v799
        %v1122 = vunpack.c.l.b16 %v800
        %v1123 = vpack.c.b16 %v1122, %v1121
        %v1141 = vunpack.c.l.b16 %v853
        %v1142 = vunpack.c.l.b16 %v854
        %v1143 = vunpack.c.l.b16 %v855
        %v1144 = vunpack.c.l.b16 %v856
        %v1145 = vunpack.c.l.b16 %v857
        %v1146 = vunpack.c.l.b16 %v858
        %v1147 = vunpack.c.l.b16 %v859
        %v1148 = vunpack.c.l.b16 %v860
        %v1149 = vunpack.c.l.b16 %v861
        %v1150 = vunpack.c.l.b16 %v862
        %v1151 = vunpack.c.l.b16 %v863
        %v1152 = vunpack.c.l.b16 %v864
        %v1153 = vunpack.c.l.b16 %v865
        %v1154 = vunpack.c.l.b16 %v866
        %v1155 = vunpack.c.l.b16 %v867
        %v1156 = vunpack.c.l.b16 %v868
        %v1157 = vpack.c.b16 %v1142, %v1141
        %v1158 = vpack.c.b16 %v1144, %v1143
        %v1159 = vpack.c.b16 %v1146, %v1145
        %v1160 = vpack.c.b16 %v1148, %v1147
        %v1161 = vpack.c.b16 %v1150, %v1149
        %v1162 = vpack.c.b16 %v1152, %v1151
        %v1163 = vpack.c.b16 %v1154, %v1153
        %v1164 = vpack.c.b16 %v1156, %v1155
        %1173 = vmatpush.bf16.msra.mxu0 %v1164
        %1174 = vmatpush.bf16.msra.mxu0 %v1163
        %1175 = vmatpush.bf16.msra.mxu0 %v1162
        %1176 = vmatpush.bf16.msra.mxu0 %v1161
        %1177 = vmatpush.bf16.msra.mxu0 %v1160
        %1178 = vmatpush.bf16.msra.mxu0 %v1159
        %1179 = vmatpush.bf16.msra.mxu0 %v1158
        %1180 = vmatpush.bf16.msra.mxu0 %v1157
        %1181 = vmatmul.bf16.gmra.mxu0 %v1123
        %v1182 = vpop.f32.mrf.mxu0
        %v1183 = vadd.f32 %v1040, %v1182
        %v1184 = vpop.f32.mrf.mxu0
        %v1185 = vadd.f32 %v1042, %v1184
        %1186 = vmatmul.bf16.gmra.mxu0 %v950
        %v1187 = vpop.f32.mrf.mxu0
        %v1188 = vadd.f32 %v1045, %v1187
        %v1189 = vpop.f32.mrf.mxu0
        %v1190 = vadd.f32 %v1047, %v1189
        %1191 = vmatmul.bf16.gmra.mxu0 %v951
        %v1192 = vpop.f32.mrf.mxu0
        %v1193 = vadd.f32 %v1050, %v1192
        %v1194 = vpop.f32.mrf.mxu0
        %v1195 = vadd.f32 %v1052, %v1194
        %1196 = vmatmul.bf16.gmra.mxu0 %v952
        %v1197 = vpop.f32.mrf.mxu0
        %v1198 = vadd.f32 %v1055, %v1197
        %v1199 = vpop.f32.mrf.mxu0
        %v1200 = vadd.f32 %v1057, %v1199
        %1201 = vmatmul.bf16.gmra.mxu0 %v953
        %v1202 = vpop.f32.mrf.mxu0
        %v1203 = vadd.f32 %v1060, %v1202
        %v1204 = vpop.f32.mrf.mxu0
        %v1205 = vadd.f32 %v1062, %v1204
        %1206 = vmatmul.bf16.gmra.mxu0 %v954
        %v1207 = vpop.f32.mrf.mxu0
        %v1208 = vadd.f32 %v1065, %v1207
        %v1209 = vpop.f32.mrf.mxu0
        %v1210 = vadd.f32 %v1067, %v1209
        %1211 = vmatmul.bf16.gmra.mxu0 %v955
        %v1212 = vpop.f32.mrf.mxu0
        %v1213 = vadd.f32 %v1070, %v1212
        %v1214 = vpop.f32.mrf.mxu0
        %v1215 = vadd.f32 %v1072, %v1214
        %1216 = vmatmul.bf16.gmra.mxu0 %v956
        %v1217 = vpop.f32.mrf.mxu0
        %v1218 = vadd.f32 %v1075, %v1217
        %v1219 = vpop.f32.mrf.mxu0
        %v1220 = vadd.f32 %v1077, %v1219
        %1221 = vmatmul.bf16.gmra.mxu0 %v957
        %v1222 = vpop.f32.mrf.mxu0
        %v1223 = vadd.f32 %v1080, %v1222
        %v1224 = vpop.f32.mrf.mxu0
        %v1225 = vadd.f32 %v1082, %v1224
        %1226 = vmatmul.bf16.gmra.mxu0 %v958
        %v1227 = vpop.f32.mrf.mxu0
        %v1228 = vadd.f32 %v1085, %v1227
        %v1229 = vpop.f32.mrf.mxu0
        %v1230 = vadd.f32 %v1087, %v1229
        %1231 = vmatmul.bf16.gmra.mxu0 %v959
        %v1232 = vpop.f32.mrf.mxu0
        %v1233 = vadd.f32 %v1090, %v1232
        %v1234 = vpop.f32.mrf.mxu0
        %v1235 = vadd.f32 %v1092, %v1234
        %1236 = vmatmul.bf16.gmra.mxu0 %v960
        %v1237 = vpop.f32.mrf.mxu0
        %v1238 = vadd.f32 %v1095, %v1237
        %v1239 = vpop.f32.mrf.mxu0
        %v1240 = vadd.f32 %v1097, %v1239
        %1241 = vmatmul.bf16.gmra.mxu0 %v961
        %v1242 = vpop.f32.mrf.mxu0
        %v1243 = vadd.f32 %v1100, %v1242
        %v1244 = vpop.f32.mrf.mxu0
        %v1245 = vadd.f32 %v1102, %v1244
        %1246 = vmatmul.bf16.gmra.mxu0 %v962
        %v1247 = vpop.f32.mrf.mxu0
        %v1248 = vadd.f32 %v1105, %v1247
        %v1249 = vpop.f32.mrf.mxu0
        %v1250 = vadd.f32 %v1107, %v1249
        %1251 = vmatmul.bf16.gmra.mxu0 %v963
        %v1252 = vpop.f32.mrf.mxu0
        %v1253 = vadd.f32 %v1110, %v1252
        %v1254 = vpop.f32.mrf.mxu0
        %v1255 = vadd.f32 %v1112, %v1254
        %1256 = vmatmul.bf16.gmra.mxu0 %v964
        %v1257 = vpop.f32.mrf.mxu0
        %v1258 = vadd.f32 %v1115, %v1257
        %v1259 = vpop.f32.mrf.mxu0
        %v1260 = vadd.f32 %v1117, %v1259
        %1261 = vdwg.mxu0
        %s1262 = scalar_lea.vmem [#allocation9], 384
        %v1263 = vld [vmem:[%s1262] sm:$0xf]
        %v1264 = vld [vmem:[%s1262 + $0x4] sm:$0xf]
        %v1265 = vld [vmem:[%s1262 + $0x8] sm:$0xf]
        %v1266 = vld [vmem:[%s1262 + $0xc] sm:$0xf]
        %v1267 = vld [vmem:[%s1262 + $0x10] sm:$0xf]
        %v1268 = vld [vmem:[%s1262 + $0x14] sm:$0xf]
        %v1269 = vld [vmem:[%s1262 + $0x18] sm:$0xf]
        %v1270 = vld [vmem:[%s1262 + $0x1c] sm:$0xf]
        %v1271 = vld [vmem:[%s1262 + $0x20] sm:$0xf]
        %v1272 = vld [vmem:[%s1262 + $0x24] sm:$0xf]
        %v1273 = vld [vmem:[%s1262 + $0x28] sm:$0xf]
        %v1274 = vld [vmem:[%s1262 + $0x2c] sm:$0xf]
        %v1275 = vld [vmem:[%s1262 + $0x30] sm:$0xf]
        %v1276 = vld [vmem:[%s1262 + $0x34] sm:$0xf]
        %v1277 = vld [vmem:[%s1262 + $0x38] sm:$0xf]
        %v1278 = vld [vmem:[%s1262 + $0x3c] sm:$0xf]
        %v1281 = vunpack.c.l.b16 %v850
        %v1282 = vunpack.c.l.b16 %v851
        %v1283 = vpack.c.b16 %v1282, %v1281
        %v1301 = vunpack.c.l.b16 %v1263
        %v1302 = vunpack.c.l.b16 %v1264
        %v1303 = vunpack.c.l.b16 %v1265
        %v1304 = vunpack.c.l.b16 %v1266
        %v1305 = vunpack.c.l.b16 %v1267
        %v1306 = vunpack.c.l.b16 %v1268
        %v1307 = vunpack.c.l.b16 %v1269
        %v1308 = vunpack.c.l.b16 %v1270
        %v1309 = vunpack.c.l.b16 %v1271
        %v1310 = vunpack.c.l.b16 %v1272
        %v1311 = vunpack.c.l.b16 %v1273
        %v1312 = vunpack.c.l.b16 %v1274
        %v1313 = vunpack.c.l.b16 %v1275
        %v1314 = vunpack.c.l.b16 %v1276
        %v1315 = vunpack.c.l.b16 %v1277
        %v1316 = vunpack.c.l.b16 %v1278
        %v1317 = vpack.c.b16 %v1302, %v1301
        %v1318 = vpack.c.b16 %v1304, %v1303
        %v1319 = vpack.c.b16 %v1306, %v1305
        %v1320 = vpack.c.b16 %v1308, %v1307
        %v1321 = vpack.c.b16 %v1310, %v1309
        %v1322 = vpack.c.b16 %v1312, %v1311
        %v1323 = vpack.c.b16 %v1314, %v1313
        %v1324 = vpack.c.b16 %v1316, %v1315
        %1333 = vmatpush.bf16.msra.mxu0 %v1324
        %1334 = vmatpush.bf16.msra.mxu0 %v1323
        %1335 = vmatpush.bf16.msra.mxu0 %v1322
        %1336 = vmatpush.bf16.msra.mxu0 %v1321
        %1337 = vmatpush.bf16.msra.mxu0 %v1320
        %1338 = vmatpush.bf16.msra.mxu0 %v1319
        %1339 = vmatpush.bf16.msra.mxu0 %v1318
        %1340 = vmatpush.bf16.msra.mxu0 %v1317
        %1341 = vmatmul.bf16.gmra.mxu0 %v951
        %v1342 = vpop.f32.mrf.mxu0
        %v1343 = vadd.f32 0.0, %v1342
        %v1344 = vpop.f32.mrf.mxu0
        %v1345 = vadd.f32 0.0, %v1344
        %1346 = vmatmul.bf16.gmra.mxu0 %v952
        %v1347 = vpop.f32.mrf.mxu0
        %v1348 = vadd.f32 0.0, %v1347
        %v1349 = vpop.f32.mrf.mxu0
        %v1350 = vadd.f32 0.0, %v1349
        %1351 = vmatmul.bf16.gmra.mxu0 %v953
        %v1352 = vpop.f32.mrf.mxu0
        %v1353 = vadd.f32 0.0, %v1352
        %v1354 = vpop.f32.mrf.mxu0
        %v1355 = vadd.f32 0.0, %v1354
        %1356 = vmatmul.bf16.gmra.mxu0 %v954
        %v1357 = vpop.f32.mrf.mxu0
        %v1358 = vadd.f32 0.0, %v1357
        %v1359 = vpop.f32.mrf.mxu0
        %v1360 = vadd.f32 0.0, %v1359
        %1361 = vmatmul.bf16.gmra.mxu0 %v955
        %v1362 = vpop.f32.mrf.mxu0
        %v1363 = vadd.f32 0.0, %v1362
        %v1364 = vpop.f32.mrf.mxu0
        %v1365 = vadd.f32 0.0, %v1364
        %1366 = vmatmul.bf16.gmra.mxu0 %v956
        %v1367 = vpop.f32.mrf.mxu0
        %v1368 = vadd.f32 0.0, %v1367
        %v1369 = vpop.f32.mrf.mxu0
        %v1370 = vadd.f32 0.0, %v1369
        %1371 = vmatmul.bf16.gmra.mxu0 %v957
        %v1372 = vpop.f32.mrf.mxu0
        %v1373 = vadd.f32 0.0, %v1372
        %v1374 = vpop.f32.mrf.mxu0
        %v1375 = vadd.f32 0.0, %v1374
        %1376 = vmatmul.bf16.gmra.mxu0 %v958
        %v1377 = vpop.f32.mrf.mxu0
        %v1378 = vadd.f32 0.0, %v1377
        %v1379 = vpop.f32.mrf.mxu0
        %v1380 = vadd.f32 0.0, %v1379
        %1381 = vmatmul.bf16.gmra.mxu0 %v959
        %v1382 = vpop.f32.mrf.mxu0
        %v1383 = vadd.f32 0.0, %v1382
        %v1384 = vpop.f32.mrf.mxu0
        %v1385 = vadd.f32 0.0, %v1384
        %1386 = vmatmul.bf16.gmra.mxu0 %v960
        %v1387 = vpop.f32.mrf.mxu0
        %v1388 = vadd.f32 0.0, %v1387
        %v1389 = vpop.f32.mrf.mxu0
        %v1390 = vadd.f32 0.0, %v1389
        %1391 = vmatmul.bf16.gmra.mxu0 %v961
        %v1392 = vpop.f32.mrf.mxu0
        %v1393 = vadd.f32 0.0, %v1392
        %v1394 = vpop.f32.mrf.mxu0
        %v1395 = vadd.f32 0.0, %v1394
        %1396 = vmatmul.bf16.gmra.mxu0 %v962
        %v1397 = vpop.f32.mrf.mxu0
        %v1398 = vadd.f32 0.0, %v1397
        %v1399 = vpop.f32.mrf.mxu0
        %v1400 = vadd.f32 0.0, %v1399
        %1401 = vmatmul.bf16.gmra.mxu0 %v963
        %v1402 = vpop.f32.mrf.mxu0
        %v1403 = vadd.f32 0.0, %v1402
        %v1404 = vpop.f32.mrf.mxu0
        %v1405 = vadd.f32 0.0, %v1404
        %1406 = vmatmul.bf16.gmra.mxu0 %v964
        %v1407 = vpop.f32.mrf.mxu0
        %v1408 = vadd.f32 0.0, %v1407
        %v1409 = vpop.f32.mrf.mxu0
        %v1410 = vadd.f32 0.0, %v1409
        %1411 = vmatmul.bf16.gmra.mxu0 %v965
        %v1412 = vpop.f32.mrf.mxu0
        %v1413 = vadd.f32 0.0, %v1412
        %v1414 = vpop.f32.mrf.mxu0
        %v1415 = vadd.f32 0.0, %v1414
        %1416 = vmatmul.bf16.gmra.mxu0 %v1283
        %v1417 = vpop.f32.mrf.mxu0
        %v1418 = vadd.f32 0.0, %v1417
        %v1419 = vpop.f32.mrf.mxu0
        %v1420 = vadd.f32 0.0, %v1419
        %1421 = vdwg.mxu0
        %v1422 = vadd.f32 %v1183, %v1343
        %v1423 = vadd.f32 %v1185, %v1345
        %v1424 = vadd.f32 %v1188, %v1348
        %v1425 = vadd.f32 %v1190, %v1350
        %v1426 = vadd.f32 %v1193, %v1353
        %v1427 = vadd.f32 %v1195, %v1355
        %v1428 = vadd.f32 %v1198, %v1358
        %v1429 = vadd.f32 %v1200, %v1360
        %v1430 = vadd.f32 %v1203, %v1363
        %v1431 = vadd.f32 %v1205, %v1365
        %v1432 = vadd.f32 %v1208, %v1368
        %v1433 = vadd.f32 %v1210, %v1370
        %v1434 = vadd.f32 %v1213, %v1373
        %v1435 = vadd.f32 %v1215, %v1375
        %v1436 = vadd.f32 %v1218, %v1378
        %v1437 = vadd.f32 %v1220, %v1380
        %v1438 = vadd.f32 %v1223, %v1383
        %v1439 = vadd.f32 %v1225, %v1385
        %v1440 = vadd.f32 %v1228, %v1388
        %v1441 = vadd.f32 %v1230, %v1390
        %v1442 = vadd.f32 %v1233, %v1393
        %v1443 = vadd.f32 %v1235, %v1395
        %v1444 = vadd.f32 %v1238, %v1398
        %v1445 = vadd.f32 %v1240, %v1400
        %v1446 = vadd.f32 %v1243, %v1403
        %v1447 = vadd.f32 %v1245, %v1405
        %v1448 = vadd.f32 %v1248, %v1408
        %v1449 = vadd.f32 %v1250, %v1410
        %v1450 = vadd.f32 %v1253, %v1413
        %v1451 = vadd.f32 %v1255, %v1415
        %v1452 = vadd.f32 %v1258, %v1418
        %v1453 = vadd.f32 %v1260, %v1420
        %vm1454 = vsmask.f32 3328
        %vm1455 = vsmask.f32 7440
        %vm1456 = vmor %vm1454, %vm1455
        %v1458 = vshrl.u32 %v799, 16
        %v1460 = vrot.slane %v1458, 4
        %v1461 = vshll.u32 %v799, 16
        %v1463 = vrot.slane %v1461, 5
        %v1464 = vor.u32 %v1460, %v1463
        %v1465 = vrot.slane %v1464, 4
        %v1467 = vshll.u32 %v800, 16
        %v1469 = vrot.slane %v1467, 5
        %v1470 = vsel %vm1456, %v1465, %v1469
        %v1471 = vshrl.u32 %v800, 16
        %v1473 = vrot.slane %v1471, 4
        %v1474 = vor.u32 %v1473, %v1469
        %v1475 = vrot.slane %v1474, 4
        %v1477 = vshll.u32 %v801, 16
        %v1479 = vrot.slane %v1477, 5
        %v1480 = vsel %vm1456, %v1475, %v1479
        %v1482 = vshrl.u32 %v802, 16
        %v1484 = vrot.slane %v1482, 4
        %v1485 = vshll.u32 %v802, 16
        %v1487 = vrot.slane %v1485, 5
        %v1488 = vor.u32 %v1484, %v1487
        %v1489 = vrot.slane %v1488, 4
        %v1491 = vshll.u32 %v803, 16
        %v1493 = vrot.slane %v1491, 5
        %v1494 = vsel %vm1456, %v1489, %v1493
        %v1495 = vshrl.u32 %v803, 16
        %v1497 = vrot.slane %v1495, 4
        %v1498 = vor.u32 %v1497, %v1493
        %v1499 = vrot.slane %v1498, 4
        %v1501 = vshll.u32 %v804, 16
        %v1503 = vrot.slane %v1501, 5
        %v1504 = vsel %vm1456, %v1499, %v1503
        %v1506 = vshrl.u32 %v805, 16
        %v1508 = vrot.slane %v1506, 4
        %v1509 = vshll.u32 %v805, 16
        %v1511 = vrot.slane %v1509, 5
        %v1512 = vor.u32 %v1508, %v1511
        %v1513 = vrot.slane %v1512, 4
        %v1515 = vshll.u32 %v806, 16
        %v1517 = vrot.slane %v1515, 5
        %v1518 = vsel %vm1456, %v1513, %v1517
        %v1519 = vshrl.u32 %v806, 16
        %v1521 = vrot.slane %v1519, 4
        %v1522 = vor.u32 %v1521, %v1517
        %v1523 = vrot.slane %v1522, 4
        %v1525 = vshll.u32 %v807, 16
        %v1527 = vrot.slane %v1525, 5
        %v1528 = vsel %vm1456, %v1523, %v1527
        %v1530 = vshrl.u32 %v808, 16
        %v1532 = vrot.slane %v1530, 4
        %v1533 = vshll.u32 %v808, 16
        %v1535 = vrot.slane %v1533, 5
        %v1536 = vor.u32 %v1532, %v1535
        %v1537 = vrot.slane %v1536, 4
        %v1539 = vshll.u32 %v809, 16
        %v1541 = vrot.slane %v1539, 5
        %v1542 = vsel %vm1456, %v1537, %v1541
        %v1543 = vshrl.u32 %v809, 16
        %v1545 = vrot.slane %v1543, 4
        %v1546 = vor.u32 %v1545, %v1541
        %v1547 = vrot.slane %v1546, 4
        %v1549 = vshll.u32 %v810, 16
        %v1551 = vrot.slane %v1549, 5
        %v1552 = vsel %vm1456, %v1547, %v1551
        %v1554 = vshrl.u32 %v811, 16
        %v1556 = vrot.slane %v1554, 4
        %v1557 = vshll.u32 %v811, 16
        %v1559 = vrot.slane %v1557, 5
        %v1560 = vor.u32 %v1556, %v1559
        %v1561 = vrot.slane %v1560, 4
        %v1563 = vshll.u32 %v812, 16
        %v1565 = vrot.slane %v1563, 5
        %v1566 = vsel %vm1456, %v1561, %v1565
        %v1567 = vshrl.u32 %v812, 16
        %v1569 = vrot.slane %v1567, 4
        %v1570 = vor.u32 %v1569, %v1565
        %v1571 = vrot.slane %v1570, 4
        %v1573 = vshll.u32 %v813, 16
        %v1575 = vrot.slane %v1573, 5
        %v1576 = vsel %vm1456, %v1571, %v1575
        %v1578 = vshrl.u32 %v814, 16
        %v1580 = vrot.slane %v1578, 4
        %v1581 = vshll.u32 %v814, 16
        %v1583 = vrot.slane %v1581, 5
        %v1584 = vor.u32 %v1580, %v1583
        %v1585 = vrot.slane %v1584, 4
        %v1587 = vshll.u32 %v815, 16
        %v1589 = vrot.slane %v1587, 5
        %v1590 = vsel %vm1456, %v1585, %v1589
        %v1591 = vshrl.u32 %v815, 16
        %v1593 = vrot.slane %v1591, 4
        %v1594 = vor.u32 %v1593, %v1589
        %v1595 = vrot.slane %v1594, 4
        %v1597 = vshll.u32 %v816, 16
        %v1599 = vrot.slane %v1597, 5
        %v1600 = vsel %vm1456, %v1595, %v1599
        %v1602 = vshrl.u32 %v817, 16
        %v1604 = vrot.slane %v1602, 4
        %v1605 = vshll.u32 %v817, 16
        %v1607 = vrot.slane %v1605, 5
        %v1608 = vor.u32 %v1604, %v1607
        %v1609 = vrot.slane %v1608, 4
        %v1611 = vshll.u32 %v818, 16
        %v1613 = vrot.slane %v1611, 5
        %v1614 = vsel %vm1456, %v1609, %v1613
        %v1615 = vshrl.u32 %v818, 16
        %v1617 = vrot.slane %v1615, 4
        %v1618 = vor.u32 %v1617, %v1613
        %v1619 = vrot.slane %v1618, 4
        %v1621 = vshll.u32 %v819, 16
        %v1623 = vrot.slane %v1621, 5
        %v1624 = vsel %vm1456, %v1619, %v1623
        %v1626 = vshrl.u32 %v820, 16
        %v1628 = vrot.slane %v1626, 4
        %v1629 = vshll.u32 %v820, 16
        %v1631 = vrot.slane %v1629, 5
        %v1632 = vor.u32 %v1628, %v1631
        %v1633 = vrot.slane %v1632, 4
        %v1635 = vshll.u32 %v821, 16
        %v1637 = vrot.slane %v1635, 5
        %v1638 = vsel %vm1456, %v1633, %v1637
        %v1639 = vshrl.u32 %v821, 16
        %v1641 = vrot.slane %v1639, 4
        %v1642 = vor.u32 %v1641, %v1637
        %v1643 = vrot.slane %v1642, 4
        %v1645 = vshll.u32 %v822, 16
        %v1647 = vrot.slane %v1645, 5
        %v1648 = vsel %vm1456, %v1643, %v1647
        %v1650 = vshrl.u32 %v823, 16
        %v1652 = vrot.slane %v1650, 4
        %v1653 = vshll.u32 %v823, 16
        %v1655 = vrot.slane %v1653, 5
        %v1656 = vor.u32 %v1652, %v1655
        %v1657 = vrot.slane %v1656, 4
        %v1659 = vshll.u32 %v824, 16
        %v1661 = vrot.slane %v1659, 5
        %v1662 = vsel %vm1456, %v1657, %v1661
        %v1663 = vshrl.u32 %v824, 16
        %v1665 = vrot.slane %v1663, 4
        %v1666 = vor.u32 %v1665, %v1661
        %v1667 = vrot.slane %v1666, 4
        %v1669 = vshll.u32 %v825, 16
        %v1671 = vrot.slane %v1669, 5
        %v1672 = vsel %vm1456, %v1667, %v1671
        %v1674 = vshrl.u32 %v826, 16
        %v1676 = vrot.slane %v1674, 4
        %v1677 = vshll.u32 %v826, 16
        %v1679 = vrot.slane %v1677, 5
        %v1680 = vor.u32 %v1676, %v1679
        %v1681 = vrot.slane %v1680, 4
        %v1683 = vshll.u32 %v827, 16
        %v1685 = vrot.slane %v1683, 5
        %v1686 = vsel %vm1456, %v1681, %v1685
        %v1687 = vshrl.u32 %v827, 16
        %v1689 = vrot.slane %v1687, 4
        %v1690 = vor.u32 %v1689, %v1685
        %v1691 = vrot.slane %v1690, 4
        %v1693 = vshll.u32 %v828, 16
        %v1695 = vrot.slane %v1693, 5
        %v1696 = vsel %vm1456, %v1691, %v1695
        %v1698 = vshrl.u32 %v829, 16
        %v1700 = vrot.slane %v1698, 4
        %v1701 = vshll.u32 %v829, 16
        %v1703 = vrot.slane %v1701, 5
        %v1704 = vor.u32 %v1700, %v1703
        %v1705 = vrot.slane %v1704, 4
        %v1707 = vshll.u32 %v830, 16
        %v1709 = vrot.slane %v1707, 5
        %v1710 = vsel %vm1456, %v1705, %v1709
        %v1711 = vshrl.u32 %v830, 16
        %v1713 = vrot.slane %v1711, 4
        %v1714 = vor.u32 %v1713, %v1709
        %v1715 = vrot.slane %v1714, 4
        %v1717 = vshll.u32 %v831, 16
        %v1719 = vrot.slane %v1717, 5
        %v1720 = vsel %vm1456, %v1715, %v1719
        %v1722 = vshrl.u32 %v832, 16
        %v1724 = vrot.slane %v1722, 4
        %v1725 = vshll.u32 %v832, 16
        %v1727 = vrot.slane %v1725, 5
        %v1728 = vor.u32 %v1724, %v1727
        %v1729 = vrot.slane %v1728, 4
        %v1731 = vshll.u32 %v833, 16
        %v1733 = vrot.slane %v1731, 5
        %v1734 = vsel %vm1456, %v1729, %v1733
        %v1735 = vshrl.u32 %v833, 16
        %v1737 = vrot.slane %v1735, 4
        %v1738 = vor.u32 %v1737, %v1733
        %v1739 = vrot.slane %v1738, 4
        %v1741 = vshll.u32 %v834, 16
        %v1743 = vrot.slane %v1741, 5
        %v1744 = vsel %vm1456, %v1739, %v1743
        %v1746 = vshrl.u32 %v835, 16
        %v1748 = vrot.slane %v1746, 4
        %v1749 = vshll.u32 %v835, 16
        %v1751 = vrot.slane %v1749, 5
        %v1752 = vor.u32 %v1748, %v1751
        %v1753 = vrot.slane %v1752, 4
        %v1755 = vshll.u32 %v836, 16
        %v1757 = vrot.slane %v1755, 5
        %v1758 = vsel %vm1456, %v1753, %v1757
        %v1759 = vshrl.u32 %v836, 16
        %v1761 = vrot.slane %v1759, 4
        %v1762 = vor.u32 %v1761, %v1757
        %v1763 = vrot.slane %v1762, 4
        %v1765 = vshll.u32 %v837, 16
        %v1767 = vrot.slane %v1765, 5
        %v1768 = vsel %vm1456, %v1763, %v1767
        %v1770 = vshrl.u32 %v838, 16
        %v1772 = vrot.slane %v1770, 4
        %v1773 = vshll.u32 %v838, 16
        %v1775 = vrot.slane %v1773, 5
        %v1776 = vor.u32 %v1772, %v1775
        %v1777 = vrot.slane %v1776, 4
        %v1779 = vshll.u32 %v839, 16
        %v1781 = vrot.slane %v1779, 5
        %v1782 = vsel %vm1456, %v1777, %v1781
        %v1783 = vshrl.u32 %v839, 16
        %v1785 = vrot.slane %v1783, 4
        %v1786 = vor.u32 %v1785, %v1781
        %v1787 = vrot.slane %v1786, 4
        %v1789 = vshll.u32 %v840, 16
        %v1791 = vrot.slane %v1789, 5
        %v1792 = vsel %vm1456, %v1787, %v1791
        %v1794 = vshrl.u32 %v841, 16
        %v1796 = vrot.slane %v1794, 4
        %v1797 = vshll.u32 %v841, 16
        %v1799 = vrot.slane %v1797, 5
        %v1800 = vor.u32 %v1796, %v1799
        %v1801 = vrot.slane %v1800, 4
        %v1803 = vshll.u32 %v842, 16
        %v1805 = vrot.slane %v1803, 5
        %v1806 = vsel %vm1456, %v1801, %v1805
        %v1807 = vshrl.u32 %v842, 16
        %v1809 = vrot.slane %v1807, 4
        %v1810 = vor.u32 %v1809, %v1805
        %v1811 = vrot.slane %v1810, 4
        %v1813 = vshll.u32 %v843, 16
        %v1815 = vrot.slane %v1813, 5
        %v1816 = vsel %vm1456, %v1811, %v1815
        %v1818 = vshrl.u32 %v844, 16
        %v1820 = vrot.slane %v1818, 4
        %v1821 = vshll.u32 %v844, 16
        %v1823 = vrot.slane %v1821, 5
        %v1824 = vor.u32 %v1820, %v1823
        %v1825 = vrot.slane %v1824, 4
        %v1827 = vshll.u32 %v845, 16
        %v1829 = vrot.slane %v1827, 5
        %v1830 = vsel %vm1456, %v1825, %v1829
        %v1831 = vshrl.u32 %v845, 16
        %v1833 = vrot.slane %v1831, 4
        %v1834 = vor.u32 %v1833, %v1829
        %v1835 = vrot.slane %v1834, 4
        %v1837 = vshll.u32 %v846, 16
        %v1839 = vrot.slane %v1837, 5
        %v1840 = vsel %vm1456, %v1835, %v1839
        %s1841 = scalar_lea.vmem [#allocation9], 64
        %v1842 = vld [vmem:[%s1841] sm:$0xf]
        %v1843 = vld [vmem:[%s1841 + $0x4] sm:$0xf]
        %v1844 = vld [vmem:[%s1841 + $0x8] sm:$0xf]
        %v1845 = vld [vmem:[%s1841 + $0xc] sm:$0xf]
        %v1846 = vld [vmem:[%s1841 + $0x10] sm:$0xf]
        %v1847 = vld [vmem:[%s1841 + $0x14] sm:$0xf]
        %v1848 = vld [vmem:[%s1841 + $0x18] sm:$0xf]
        %v1849 = vld [vmem:[%s1841 + $0x1c] sm:$0xf]
        %v1850 = vld [vmem:[%s1841 + $0x20] sm:$0xf]
        %v1851 = vld [vmem:[%s1841 + $0x24] sm:$0xf]
        %v1852 = vld [vmem:[%s1841 + $0x28] sm:$0xf]
        %v1853 = vld [vmem:[%s1841 + $0x2c] sm:$0xf]
        %v1854 = vld [vmem:[%s1841 + $0x30] sm:$0xf]
        %v1855 = vld [vmem:[%s1841 + $0x34] sm:$0xf]
        %v1856 = vld [vmem:[%s1841 + $0x38] sm:$0xf]
        %v1857 = vld [vmem:[%s1841 + $0x3c] sm:$0xf]
        %v1858 = vunpack.c.l.b16 %v1470
        %v1859 = vunpack.c.l.b16 %v1480
        %v1860 = vunpack.c.l.b16 %v1494
        %v1861 = vunpack.c.l.b16 %v1504
        %v1862 = vunpack.c.l.b16 %v1518
        %v1863 = vunpack.c.l.b16 %v1528
        %v1864 = vunpack.c.l.b16 %v1542
        %v1865 = vunpack.c.l.b16 %v1552
        %v1866 = vunpack.c.l.b16 %v1566
        %v1867 = vunpack.c.l.b16 %v1576
        %v1868 = vunpack.c.l.b16 %v1590
        %v1869 = vunpack.c.l.b16 %v1600
        %v1870 = vunpack.c.l.b16 %v1614
        %v1871 = vunpack.c.l.b16 %v1624
        %v1872 = vunpack.c.l.b16 %v1638
        %v1873 = vunpack.c.l.b16 %v1648
        %v1874 = vunpack.c.l.b16 %v1662
        %v1875 = vunpack.c.l.b16 %v1672
        %v1876 = vunpack.c.l.b16 %v1686
        %v1877 = vunpack.c.l.b16 %v1696
        %v1878 = vunpack.c.l.b16 %v1710
        %v1879 = vunpack.c.l.b16 %v1720
        %v1880 = vunpack.c.l.b16 %v1734
        %v1881 = vunpack.c.l.b16 %v1744
        %v1882 = vunpack.c.l.b16 %v1758
        %v1883 = vunpack.c.l.b16 %v1768
        %v1884 = vunpack.c.l.b16 %v1782
        %v1885 = vunpack.c.l.b16 %v1792
        %v1886 = vunpack.c.l.b16 %v1806
        %v1887 = vunpack.c.l.b16 %v1816
        %v1888 = vunpack.c.l.b16 %v1830
        %v1889 = vunpack.c.l.b16 %v1840
        %v1890 = vpack.c.b16 %v1859, %v1858
        %v1891 = vpack.c.b16 %v1861, %v1860
        %v1892 = vpack.c.b16 %v1863, %v1862
        %v1893 = vpack.c.b16 %v1865, %v1864
        %v1894 = vpack.c.b16 %v1867, %v1866
        %v1895 = vpack.c.b16 %v1869, %v1868
        %v1896 = vpack.c.b16 %v1871, %v1870
        %v1897 = vpack.c.b16 %v1873, %v1872
        %v1898 = vpack.c.b16 %v1875, %v1874
        %v1899 = vpack.c.b16 %v1877, %v1876
        %v1900 = vpack.c.b16 %v1879, %v1878
        %v1901 = vpack.c.b16 %v1881, %v1880
        %v1902 = vpack.c.b16 %v1883, %v1882
        %v1903 = vpack.c.b16 %v1885, %v1884
        %v1904 = vpack.c.b16 %v1887, %v1886
        %v1905 = vpack.c.b16 %v1889, %v1888
        %v1938 = vunpack.c.l.b16 %v1842
        %v1939 = vunpack.c.l.b16 %v1843
        %v1940 = vunpack.c.l.b16 %v1844
        %v1941 = vunpack.c.l.b16 %v1845
        %v1942 = vunpack.c.l.b16 %v1846
        %v1943 = vunpack.c.l.b16 %v1847
        %v1944 = vunpack.c.l.b16 %v1848
        %v1945 = vunpack.c.l.b16 %v1849
        %v1946 = vunpack.c.l.b16 %v1850
        %v1947 = vunpack.c.l.b16 %v1851
        %v1948 = vunpack.c.l.b16 %v1852
        %v1949 = vunpack.c.l.b16 %v1853
        %v1950 = vunpack.c.l.b16 %v1854
        %v1951 = vunpack.c.l.b16 %v1855
        %v1952 = vunpack.c.l.b16 %v1856
        %v1953 = vunpack.c.l.b16 %v1857
        %v1954 = vpack.c.b16 %v1939, %v1938
        %v1955 = vpack.c.b16 %v1941, %v1940
        %v1956 = vpack.c.b16 %v1943, %v1942
        %v1957 = vpack.c.b16 %v1945, %v1944
        %v1958 = vpack.c.b16 %v1947, %v1946
        %v1959 = vpack.c.b16 %v1949, %v1948
        %v1960 = vpack.c.b16 %v1951, %v1950
        %v1961 = vpack.c.b16 %v1953, %v1952
        %1970 = vmatpush.bf16.msra.mxu0 %v1961
        %1971 = vmatpush.bf16.msra.mxu0 %v1960
        %1972 = vmatpush.bf16.msra.mxu0 %v1959
        %1973 = vmatpush.bf16.msra.mxu0 %v1958
        %1974 = vmatpush.bf16.msra.mxu0 %v1957
        %1975 = vmatpush.bf16.msra.mxu0 %v1956
        %1976 = vmatpush.bf16.msra.mxu0 %v1955
        %1977 = vmatpush.bf16.msra.mxu0 %v1954
        %1978 = vmatmul.bf16.gmra.mxu0 %v1890
        %v1979 = vpop.f32.mrf.mxu0
        %v1980 = vadd.f32 0.0, %v1979
        %v1981 = vpop.f32.mrf.mxu0
        %v1982 = vadd.f32 0.0, %v1981
        %1983 = vmatmul.bf16.gmra.mxu0 %v1891
        %v1984 = vpop.f32.mrf.mxu0
        %v1985 = vadd.f32 0.0, %v1984
        %v1986 = vpop.f32.mrf.mxu0
        %v1987 = vadd.f32 0.0, %v1986
        %1988 = vmatmul.bf16.gmra.mxu0 %v1892
        %v1989 = vpop.f32.mrf.mxu0
        %v1990 = vadd.f32 0.0, %v1989
        %v1991 = vpop.f32.mrf.mxu0
        %v1992 = vadd.f32 0.0, %v1991
        %1993 = vmatmul.bf16.gmra.mxu0 %v1893
        %v1994 = vpop.f32.mrf.mxu0
        %v1995 = vadd.f32 0.0, %v1994
        %v1996 = vpop.f32.mrf.mxu0
        %v1997 = vadd.f32 0.0, %v1996
        %1998 = vmatmul.bf16.gmra.mxu0 %v1894
        %v1999 = vpop.f32.mrf.mxu0
        %v2000 = vadd.f32 0.0, %v1999
        %v2001 = vpop.f32.mrf.mxu0
        %v2002 = vadd.f32 0.0, %v2001
        %2003 = vmatmul.bf16.gmra.mxu0 %v1895
        %v2004 = vpop.f32.mrf.mxu0
        %v2005 = vadd.f32 0.0, %v2004
        %v2006 = vpop.f32.mrf.mxu0
        %v2007 = vadd.f32 0.0, %v2006
        %2008 = vmatmul.bf16.gmra.mxu0 %v1896
        %v2009 = vpop.f32.mrf.mxu0
        %v2010 = vadd.f32 0.0, %v2009
        %v2011 = vpop.f32.mrf.mxu0
        %v2012 = vadd.f32 0.0, %v2011
        %2013 = vmatmul.bf16.gmra.mxu0 %v1897
        %v2014 = vpop.f32.mrf.mxu0
        %v2015 = vadd.f32 0.0, %v2014
        %v2016 = vpop.f32.mrf.mxu0
        %v2017 = vadd.f32 0.0, %v2016
        %2018 = vmatmul.bf16.gmra.mxu0 %v1898
        %v2019 = vpop.f32.mrf.mxu0
        %v2020 = vadd.f32 0.0, %v2019
        %v2021 = vpop.f32.mrf.mxu0
        %v2022 = vadd.f32 0.0, %v2021
        %2023 = vmatmul.bf16.gmra.mxu0 %v1899
        %v2024 = vpop.f32.mrf.mxu0
        %v2025 = vadd.f32 0.0, %v2024
        %v2026 = vpop.f32.mrf.mxu0
        %v2027 = vadd.f32 0.0, %v2026
        %2028 = vmatmul.bf16.gmra.mxu0 %v1900
        %v2029 = vpop.f32.mrf.mxu0
        %v2030 = vadd.f32 0.0, %v2029
        %v2031 = vpop.f32.mrf.mxu0
        %v2032 = vadd.f32 0.0, %v2031
        %2033 = vmatmul.bf16.gmra.mxu0 %v1901
        %v2034 = vpop.f32.mrf.mxu0
        %v2035 = vadd.f32 0.0, %v2034
        %v2036 = vpop.f32.mrf.mxu0
        %v2037 = vadd.f32 0.0, %v2036
        %2038 = vmatmul.bf16.gmra.mxu0 %v1902
        %v2039 = vpop.f32.mrf.mxu0
        %v2040 = vadd.f32 0.0, %v2039
        %v2041 = vpop.f32.mrf.mxu0
        %v2042 = vadd.f32 0.0, %v2041
        %2043 = vmatmul.bf16.gmra.mxu0 %v1903
        %v2044 = vpop.f32.mrf.mxu0
        %v2045 = vadd.f32 0.0, %v2044
        %v2046 = vpop.f32.mrf.mxu0
        %v2047 = vadd.f32 0.0, %v2046
        %2048 = vmatmul.bf16.gmra.mxu0 %v1904
        %v2049 = vpop.f32.mrf.mxu0
        %v2050 = vadd.f32 0.0, %v2049
        %v2051 = vpop.f32.mrf.mxu0
        %v2052 = vadd.f32 0.0, %v2051
        %2053 = vmatmul.bf16.gmra.mxu0 %v1905
        %v2054 = vpop.f32.mrf.mxu0
        %v2055 = vadd.f32 0.0, %v2054
        %v2056 = vpop.f32.mrf.mxu0
        %v2057 = vadd.f32 0.0, %v2056
        %2058 = vdwg.mxu0
        %v2059 = vadd.f32 %v1422, %v1980
        %v2060 = vadd.f32 %v1423, %v1982
        %v2061 = vadd.f32 %v1424, %v1985
        %v2062 = vadd.f32 %v1425, %v1987
        %v2063 = vadd.f32 %v1426, %v1990
        %v2064 = vadd.f32 %v1427, %v1992
        %v2065 = vadd.f32 %v1428, %v1995
        %v2066 = vadd.f32 %v1429, %v1997
        %v2067 = vadd.f32 %v1430, %v2000
        %v2068 = vadd.f32 %v1431, %v2002
        %v2069 = vadd.f32 %v1432, %v2005
        %v2070 = vadd.f32 %v1433, %v2007
        %v2071 = vadd.f32 %v1434, %v2010
        %v2072 = vadd.f32 %v1435, %v2012
        %v2073 = vadd.f32 %v1436, %v2015
        %v2074 = vadd.f32 %v1437, %v2017
        %v2075 = vadd.f32 %v1438, %v2020
        %v2076 = vadd.f32 %v1439, %v2022
        %v2077 = vadd.f32 %v1440, %v2025
        %v2078 = vadd.f32 %v1441, %v2027
        %v2079 = vadd.f32 %v1442, %v2030
        %v2080 = vadd.f32 %v1443, %v2032
        %v2081 = vadd.f32 %v1444, %v2035
        %v2082 = vadd.f32 %v1445, %v2037
        %v2083 = vadd.f32 %v1446, %v2040
        %v2084 = vadd.f32 %v1447, %v2042
        %v2085 = vadd.f32 %v1448, %v2045
        %v2086 = vadd.f32 %v1449, %v2047
        %v2087 = vadd.f32 %v1450, %v2050
        %v2088 = vadd.f32 %v1451, %v2052
        %v2089 = vadd.f32 %v1452, %v2055
        %v2090 = vadd.f32 %v1453, %v2057
        %v2092 = vshrl.u32 %v847, 16
        %v2094 = vrot.slane %v2092, 4
        %v2095 = vshll.u32 %v847, 16
        %v2097 = vrot.slane %v2095, 5
        %v2098 = vor.u32 %v2094, %v2097
        %v2099 = vrot.slane %v2098, 4
        %v2101 = vshll.u32 %v848, 16
        %v2103 = vrot.slane %v2101, 5
        %v2104 = vsel %vm1456, %v2099, %v2103
        %v2105 = vshrl.u32 %v848, 16
        %v2107 = vrot.slane %v2105, 4
        %v2108 = vor.u32 %v2107, %v2103
        %v2109 = vrot.slane %v2108, 4
        %v2111 = vshll.u32 %v849, 16
        %v2113 = vrot.slane %v2111, 5
        %v2114 = vsel %vm1456, %v2109, %v2113
        %s2115 = scalar_lea.vmem [#allocation9], 256
        %v2116 = vld [vmem:[%s2115] sm:$0xf]
        %v2117 = vld [vmem:[%s2115 + $0x4] sm:$0xf]
        %v2118 = vld [vmem:[%s2115 + $0x8] sm:$0xf]
        %v2119 = vld [vmem:[%s2115 + $0xc] sm:$0xf]
        %v2120 = vld [vmem:[%s2115 + $0x10] sm:$0xf]
        %v2121 = vld [vmem:[%s2115 + $0x14] sm:$0xf]
        %v2122 = vld [vmem:[%s2115 + $0x18] sm:$0xf]
        %v2123 = vld [vmem:[%s2115 + $0x1c] sm:$0xf]
        %v2124 = vld [vmem:[%s2115 + $0x20] sm:$0xf]
        %v2125 = vld [vmem:[%s2115 + $0x24] sm:$0xf]
        %v2126 = vld [vmem:[%s2115 + $0x28] sm:$0xf]
        %v2127 = vld [vmem:[%s2115 + $0x2c] sm:$0xf]
        %v2128 = vld [vmem:[%s2115 + $0x30] sm:$0xf]
        %v2129 = vld [vmem:[%s2115 + $0x34] sm:$0xf]
        %v2130 = vld [vmem:[%s2115 + $0x38] sm:$0xf]
        %v2131 = vld [vmem:[%s2115 + $0x3c] sm:$0xf]
        %v2132 = vunpack.c.l.b16 %v2104
        %v2133 = vunpack.c.l.b16 %v2114
        %v2134 = vpack.c.b16 %v2133, %v2132
        %v2152 = vunpack.c.l.b16 %v2116
        %v2153 = vunpack.c.l.b16 %v2117
        %v2154 = vunpack.c.l.b16 %v2118
        %v2155 = vunpack.c.l.b16 %v2119
        %v2156 = vunpack.c.l.b16 %v2120
        %v2157 = vunpack.c.l.b16 %v2121
        %v2158 = vunpack.c.l.b16 %v2122
        %v2159 = vunpack.c.l.b16 %v2123
        %v2160 = vunpack.c.l.b16 %v2124
        %v2161 = vunpack.c.l.b16 %v2125
        %v2162 = vunpack.c.l.b16 %v2126
        %v2163 = vunpack.c.l.b16 %v2127
        %v2164 = vunpack.c.l.b16 %v2128
        %v2165 = vunpack.c.l.b16 %v2129
        %v2166 = vunpack.c.l.b16 %v2130
        %v2167 = vunpack.c.l.b16 %v2131
        %v2168 = vpack.c.b16 %v2153, %v2152
        %v2169 = vpack.c.b16 %v2155, %v2154
        %v2170 = vpack.c.b16 %v2157, %v2156
        %v2171 = vpack.c.b16 %v2159, %v2158
        %v2172 = vpack.c.b16 %v2161, %v2160
        %v2173 = vpack.c.b16 %v2163, %v2162
        %v2174 = vpack.c.b16 %v2165, %v2164
        %v2175 = vpack.c.b16 %v2167, %v2166
        %2184 = vmatpush.bf16.msra.mxu0 %v2175
        %2185 = vmatpush.bf16.msra.mxu0 %v2174
        %2186 = vmatpush.bf16.msra.mxu0 %v2173
        %2187 = vmatpush.bf16.msra.mxu0 %v2172
        %2188 = vmatpush.bf16.msra.mxu0 %v2171
        %2189 = vmatpush.bf16.msra.mxu0 %v2170
        %2190 = vmatpush.bf16.msra.mxu0 %v2169
        %2191 = vmatpush.bf16.msra.mxu0 %v2168
        %2192 = vmatmul.bf16.gmra.mxu0 %v1891
        %v2193 = vpop.f32.mrf.mxu0
        %v2194 = vadd.f32 0.0, %v2193
        %v2195 = vpop.f32.mrf.mxu0
        %v2196 = vadd.f32 0.0, %v2195
        %2197 = vmatmul.bf16.gmra.mxu0 %v1892
        %v2198 = vpop.f32.mrf.mxu0
        %v2199 = vadd.f32 0.0, %v2198
        %v2200 = vpop.f32.mrf.mxu0
        %v2201 = vadd.f32 0.0, %v2200
        %2202 = vmatmul.bf16.gmra.mxu0 %v1893
        %v2203 = vpop.f32.mrf.mxu0
        %v2204 = vadd.f32 0.0, %v2203
        %v2205 = vpop.f32.mrf.mxu0
        %v2206 = vadd.f32 0.0, %v2205
        %2207 = vmatmul.bf16.gmra.mxu0 %v1894
        %v2208 = vpop.f32.mrf.mxu0
        %v2209 = vadd.f32 0.0, %v2208
        %v2210 = vpop.f32.mrf.mxu0
        %v2211 = vadd.f32 0.0, %v2210
        %2212 = vmatmul.bf16.gmra.mxu0 %v1895
        %v2213 = vpop.f32.mrf.mxu0
        %v2214 = vadd.f32 0.0, %v2213
        %v2215 = vpop.f32.mrf.mxu0
        %v2216 = vadd.f32 0.0, %v2215
        %2217 = vmatmul.bf16.gmra.mxu0 %v1896
        %v2218 = vpop.f32.mrf.mxu0
        %v2219 = vadd.f32 0.0, %v2218
        %v2220 = vpop.f32.mrf.mxu0
        %v2221 = vadd.f32 0.0, %v2220
        %2222 = vmatmul.bf16.gmra.mxu0 %v1897
        %v2223 = vpop.f32.mrf.mxu0
        %v2224 = vadd.f32 0.0, %v2223
        %v2225 = vpop.f32.mrf.mxu0
        %v2226 = vadd.f32 0.0, %v2225
        %2227 = vmatmul.bf16.gmra.mxu0 %v1898
        %v2228 = vpop.f32.mrf.mxu0
        %v2229 = vadd.f32 0.0, %v2228
        %v2230 = vpop.f32.mrf.mxu0
        %v2231 = vadd.f32 0.0, %v2230
        %2232 = vmatmul.bf16.gmra.mxu0 %v1899
        %v2233 = vpop.f32.mrf.mxu0
        %v2234 = vadd.f32 0.0, %v2233
        %v2235 = vpop.f32.mrf.mxu0
        %v2236 = vadd.f32 0.0, %v2235
        %2237 = vmatmul.bf16.gmra.mxu0 %v1900
        %v2238 = vpop.f32.mrf.mxu0
        %v2239 = vadd.f32 0.0, %v2238
        %v2240 = vpop.f32.mrf.mxu0
        %v2241 = vadd.f32 0.0, %v2240
        %2242 = vmatmul.bf16.gmra.mxu0 %v1901
        %v2243 = vpop.f32.mrf.mxu0
        %v2244 = vadd.f32 0.0, %v2243
        %v2245 = vpop.f32.mrf.mxu0
        %v2246 = vadd.f32 0.0, %v2245
        %2247 = vmatmul.bf16.gmra.mxu0 %v1902
        %v2248 = vpop.f32.mrf.mxu0
        %v2249 = vadd.f32 0.0, %v2248
        %v2250 = vpop.f32.mrf.mxu0
        %v2251 = vadd.f32 0.0, %v2250
        %2252 = vmatmul.bf16.gmra.mxu0 %v1903
        %v2253 = vpop.f32.mrf.mxu0
        %v2254 = vadd.f32 0.0, %v2253
        %v2255 = vpop.f32.mrf.mxu0
        %v2256 = vadd.f32 0.0, %v2255
        %2257 = vmatmul.bf16.gmra.mxu0 %v1904
        %v2258 = vpop.f32.mrf.mxu0
        %v2259 = vadd.f32 0.0, %v2258
        %v2260 = vpop.f32.mrf.mxu0
        %v2261 = vadd.f32 0.0, %v2260
        %2262 = vmatmul.bf16.gmra.mxu0 %v1905
        %v2263 = vpop.f32.mrf.mxu0
        %v2264 = vadd.f32 0.0, %v2263
        %v2265 = vpop.f32.mrf.mxu0
        %v2266 = vadd.f32 0.0, %v2265
        %2267 = vmatmul.bf16.gmra.mxu0 %v2134
        %v2268 = vpop.f32.mrf.mxu0
        %v2269 = vadd.f32 0.0, %v2268
        %v2270 = vpop.f32.mrf.mxu0
        %v2271 = vadd.f32 0.0, %v2270
        %2272 = vdwg.mxu0
        %v2273 = vadd.f32 %v2059, %v2194
        %v2274 = vadd.f32 %v2060, %v2196
        %v2275 = vadd.f32 %v2061, %v2199
        %v2276 = vadd.f32 %v2062, %v2201
        %v2277 = vadd.f32 %v2063, %v2204
        %v2278 = vadd.f32 %v2064, %v2206
        %v2279 = vadd.f32 %v2065, %v2209
        %v2280 = vadd.f32 %v2066, %v2211
        %v2281 = vadd.f32 %v2067, %v2214
        %v2282 = vadd.f32 %v2068, %v2216
        %v2283 = vadd.f32 %v2069, %v2219
        %v2284 = vadd.f32 %v2070, %v2221
        %v2285 = vadd.f32 %v2071, %v2224
        %v2286 = vadd.f32 %v2072, %v2226
        %v2287 = vadd.f32 %v2073, %v2229
        %v2288 = vadd.f32 %v2074, %v2231
        %v2289 = vadd.f32 %v2075, %v2234
        %v2290 = vadd.f32 %v2076, %v2236
        %v2291 = vadd.f32 %v2077, %v2239
        %v2292 = vadd.f32 %v2078, %v2241
        %v2293 = vadd.f32 %v2079, %v2244
        %v2294 = vadd.f32 %v2080, %v2246
        %v2295 = vadd.f32 %v2081, %v2249
        %v2296 = vadd.f32 %v2082, %v2251
        %v2297 = vadd.f32 %v2083, %v2254
        %v2298 = vadd.f32 %v2084, %v2256
        %v2299 = vadd.f32 %v2085, %v2259
        %v2300 = vadd.f32 %v2086, %v2261
        %v2301 = vadd.f32 %v2087, %v2264
        %v2302 = vadd.f32 %v2088, %v2266
        %v2303 = vadd.f32 %v2089, %v2269
        %v2304 = vadd.f32 %v2090, %v2271
        %v2306 = vshrl.u32 %v850, 16
        %v2308 = vrot.slane %v2306, 4
        %v2309 = vshll.u32 %v850, 16
        %v2311 = vrot.slane %v2309, 5
        %v2312 = vor.u32 %v2308, %v2311
        %v2313 = vrot.slane %v2312, 4
        %v2315 = vshll.u32 %v851, 16
        %v2317 = vrot.slane %v2315, 5
        %v2318 = vsel %vm1456, %v2313, %v2317
        %v2319 = vshrl.u32 %v851, 16
        %v2321 = vrot.slane %v2319, 4
        %v2322 = vor.u32 %v2321, %v2317
        %v2323 = vrot.slane %v2322, 4
        %v2325 = vshll.u32 %v852, 16
        %v2327 = vrot.slane %v2325, 5
        %v2328 = vsel %vm1456, %v2323, %v2327
        %s2329 = scalar_lea.vmem [#allocation9], 448
        %v2330 = vld [vmem:[%s2329] sm:$0xf]
        %v2331 = vld [vmem:[%s2329 + $0x4] sm:$0xf]
        %v2332 = vld [vmem:[%s2329 + $0x8] sm:$0xf]
        %v2333 = vld [vmem:[%s2329 + $0xc] sm:$0xf]
        %v2334 = vld [vmem:[%s2329 + $0x10] sm:$0xf]
        %v2335 = vld [vmem:[%s2329 + $0x14] sm:$0xf]
        %v2336 = vld [vmem:[%s2329 + $0x18] sm:$0xf]
        %v2337 = vld [vmem:[%s2329 + $0x1c] sm:$0xf]
        %v2338 = vld [vmem:[%s2329 + $0x20] sm:$0xf]
        %v2339 = vld [vmem:[%s2329 + $0x24] sm:$0xf]
        %v2340 = vld [vmem:[%s2329 + $0x28] sm:$0xf]
        %v2341 = vld [vmem:[%s2329 + $0x2c] sm:$0xf]
        %v2342 = vld [vmem:[%s2329 + $0x30] sm:$0xf]
        %v2343 = vld [vmem:[%s2329 + $0x34] sm:$0xf]
        %v2344 = vld [vmem:[%s2329 + $0x38] sm:$0xf]
        %v2345 = vld [vmem:[%s2329 + $0x3c] sm:$0xf]
        %v2346 = vunpack.c.l.b16 %v2318
        %v2347 = vunpack.c.l.b16 %v2328
        %v2348 = vpack.c.b16 %v2347, %v2346
        %v2366 = vunpack.c.l.b16 %v2330
        %v2367 = vunpack.c.l.b16 %v2331
        %v2368 = vunpack.c.l.b16 %v2332
        %v2369 = vunpack.c.l.b16 %v2333
        %v2370 = vunpack.c.l.b16 %v2334
        %v2371 = vunpack.c.l.b16 %v2335
        %v2372 = vunpack.c.l.b16 %v2336
        %v2373 = vunpack.c.l.b16 %v2337
        %v2374 = vunpack.c.l.b16 %v2338
        %v2375 = vunpack.c.l.b16 %v2339
        %v2376 = vunpack.c.l.b16 %v2340
        %v2377 = vunpack.c.l.b16 %v2341
        %v2378 = vunpack.c.l.b16 %v2342
        %v2379 = vunpack.c.l.b16 %v2343
        %v2380 = vunpack.c.l.b16 %v2344
        %v2381 = vunpack.c.l.b16 %v2345
        %v2382 = vpack.c.b16 %v2367, %v2366
        %v2383 = vpack.c.b16 %v2369, %v2368
        %v2384 = vpack.c.b16 %v2371, %v2370
        %v2385 = vpack.c.b16 %v2373, %v2372
        %v2386 = vpack.c.b16 %v2375, %v2374
        %v2387 = vpack.c.b16 %v2377, %v2376
        %v2388 = vpack.c.b16 %v2379, %v2378
        %v2389 = vpack.c.b16 %v2381, %v2380
        %2398 = vmatpush.bf16.msra.mxu0 %v2389
        %2399 = vmatpush.bf16.msra.mxu0 %v2388
        %2400 = vmatpush.bf16.msra.mxu0 %v2387
        %2401 = vmatpush.bf16.msra.mxu0 %v2386
        %2402 = vmatpush.bf16.msra.mxu0 %v2385
        %2403 = vmatpush.bf16.msra.mxu0 %v2384
        %2404 = vmatpush.bf16.msra.mxu0 %v2383
        %2405 = vmatpush.bf16.msra.mxu0 %v2382
        %2406 = vmatmul.bf16.gmra.mxu0 %v1892
        %v2407 = vpop.f32.mrf.mxu0
        %v2408 = vadd.f32 0.0, %v2407
        %v2409 = vpop.f32.mrf.mxu0
        %v2410 = vadd.f32 0.0, %v2409
        %2411 = vmatmul.bf16.gmra.mxu0 %v1893
        %v2412 = vpop.f32.mrf.mxu0
        %v2413 = vadd.f32 0.0, %v2412
        %v2414 = vpop.f32.mrf.mxu0
        %v2415 = vadd.f32 0.0, %v2414
        %2416 = vmatmul.bf16.gmra.mxu0 %v1894
        %v2417 = vpop.f32.mrf.mxu0
        %v2418 = vadd.f32 0.0, %v2417
        %v2419 = vpop.f32.mrf.mxu0
        %v2420 = vadd.f32 0.0, %v2419
        %2421 = vmatmul.bf16.gmra.mxu0 %v1895
        %v2422 = vpop.f32.mrf.mxu0
        %v2423 = vadd.f32 0.0, %v2422
        %v2424 = vpop.f32.mrf.mxu0
        %v2425 = vadd.f32 0.0, %v2424
        %2426 = vmatmul.bf16.gmra.mxu0 %v1896
        %v2427 = vpop.f32.mrf.mxu0
        %v2428 = vadd.f32 0.0, %v2427
        %v2429 = vpop.f32.mrf.mxu0
        %v2430 = vadd.f32 0.0, %v2429
        %2431 = vmatmul.bf16.gmra.mxu0 %v1897
        %v2432 = vpop.f32.mrf.mxu0
        %v2433 = vadd.f32 0.0, %v2432
        %v2434 = vpop.f32.mrf.mxu0
        %v2435 = vadd.f32 0.0, %v2434
        %2436 = vmatmul.bf16.gmra.mxu0 %v1898
        %v2437 = vpop.f32.mrf.mxu0
        %v2438 = vadd.f32 0.0, %v2437
        %v2439 = vpop.f32.mrf.mxu0
        %v2440 = vadd.f32 0.0, %v2439
        %2441 = vmatmul.bf16.gmra.mxu0 %v1899
        %v2442 = vpop.f32.mrf.mxu0
        %v2443 = vadd.f32 0.0, %v2442
        %v2444 = vpop.f32.mrf.mxu0
        %v2445 = vadd.f32 0.0, %v2444
        %2446 = vmatmul.bf16.gmra.mxu0 %v1900
        %v2447 = vpop.f32.mrf.mxu0
        %v2448 = vadd.f32 0.0, %v2447
        %v2449 = vpop.f32.mrf.mxu0
        %v2450 = vadd.f32 0.0, %v2449
        %2451 = vmatmul.bf16.gmra.mxu0 %v1901
        %v2452 = vpop.f32.mrf.mxu0
        %v2453 = vadd.f32 0.0, %v2452
        %v2454 = vpop.f32.mrf.mxu0
        %v2455 = vadd.f32 0.0, %v2454
        %2456 = vmatmul.bf16.gmra.mxu0 %v1902
        %v2457 = vpop.f32.mrf.mxu0
        %v2458 = vadd.f32 0.0, %v2457
        %v2459 = vpop.f32.mrf.mxu0
        %v2460 = vadd.f32 0.0, %v2459
        %2461 = vmatmul.bf16.gmra.mxu0 %v1903
        %v2462 = vpop.f32.mrf.mxu0
        %v2463 = vadd.f32 0.0, %v2462
        %v2464 = vpop.f32.mrf.mxu0
        %v2465 = vadd.f32 0.0, %v2464
        %2466 = vmatmul.bf16.gmra.mxu0 %v1904
        %v2467 = vpop.f32.mrf.mxu0
        %v2468 = vadd.f32 0.0, %v2467
        %v2469 = vpop.f32.mrf.mxu0
        %v2470 = vadd.f32 0.0, %v2469
        %2471 = vmatmul.bf16.gmra.mxu0 %v1905
        %v2472 = vpop.f32.mrf.mxu0
        %v2473 = vadd.f32 0.0, %v2472
        %v2474 = vpop.f32.mrf.mxu0
        %v2475 = vadd.f32 0.0, %v2474
        %2476 = vmatmul.bf16.gmra.mxu0 %v2134
        %v2477 = vpop.f32.mrf.mxu0
        %v2478 = vadd.f32 0.0, %v2477
        %v2479 = vpop.f32.mrf.mxu0
        %v2480 = vadd.f32 0.0, %v2479
        %2481 = vmatmul.bf16.gmra.mxu0 %v2348
        %v2482 = vpop.f32.mrf.mxu0
        %v2483 = vadd.f32 0.0, %v2482
        %v2484 = vpop.f32.mrf.mxu0
        %v2485 = vadd.f32 0.0, %v2484
        %2486 = vdwg.mxu0
        %v2487 = vadd.f32 %v2273, %v2408
        %v2488 = vadd.f32 %v2274, %v2410
        %v2489 = vadd.f32 %v2275, %v2413
        %v2490 = vadd.f32 %v2276, %v2415
        %v2491 = vadd.f32 %v2277, %v2418
        %v2492 = vadd.f32 %v2278, %v2420
        %v2493 = vadd.f32 %v2279, %v2423
        %v2494 = vadd.f32 %v2280, %v2425
        %v2495 = vadd.f32 %v2281, %v2428
        %v2496 = vadd.f32 %v2282, %v2430
        %v2497 = vadd.f32 %v2283, %v2433
        %v2498 = vadd.f32 %v2284, %v2435
        %v2499 = vadd.f32 %v2285, %v2438
        %v2500 = vadd.f32 %v2286, %v2440
        %v2501 = vadd.f32 %v2287, %v2443
        %v2502 = vadd.f32 %v2288, %v2445
        %v2503 = vadd.f32 %v2289, %v2448
        %v2504 = vadd.f32 %v2290, %v2450
        %v2505 = vadd.f32 %v2291, %v2453
        %v2506 = vadd.f32 %v2292, %v2455
        %v2507 = vadd.f32 %v2293, %v2458
        %v2508 = vadd.f32 %v2294, %v2460
        %v2509 = vadd.f32 %v2295, %v2463
        %v2510 = vadd.f32 %v2296, %v2465
        %v2511 = vadd.f32 %v2297, %v2468
        %v2512 = vadd.f32 %v2298, %v2470
        %v2513 = vadd.f32 %v2299, %v2473
        %v2514 = vadd.f32 %v2300, %v2475
        %v2515 = vadd.f32 %v2301, %v2478
        %v2516 = vadd.f32 %v2302, %v2480
        %v2517 = vadd.f32 %v2303, %v2483
        %v2518 = vadd.f32 %v2304, %v2485
        %vm2535 = vcmask 1042432
        %vm2536 = vcmask 1046532
        %vm2537 = vmor %vm2535, %vm2536
        %v2538 = vrot.slane %v799, 5
        %v2539 = vrot.slane %v2538, 4
        %v2540 = vrot.slane %v800, 5
        %v2541 = vsel %vm2537, %v2539, %v2540
        %v2542 = vrot.slane %v2540, 4
        %v2543 = vrot.slane %v801, 5
        %v2544 = vsel %vm2537, %v2542, %v2543
        %v2545 = vrot.slane %v802, 5
        %v2546 = vrot.slane %v2545, 4
        %v2547 = vrot.slane %v803, 5
        %v2548 = vsel %vm2537, %v2546, %v2547
        %v2549 = vrot.slane %v2547, 4
        %v2550 = vrot.slane %v804, 5
        %v2551 = vsel %vm2537, %v2549, %v2550
        %v2552 = vrot.slane %v805, 5
        %v2553 = vrot.slane %v2552, 4
        %v2554 = vrot.slane %v806, 5
        %v2555 = vsel %vm2537, %v2553, %v2554
        %v2556 = vrot.slane %v2554, 4
        %v2557 = vrot.slane %v807, 5
        %v2558 = vsel %vm2537, %v2556, %v2557
        %v2559 = vrot.slane %v808, 5
        %v2560 = vrot.slane %v2559, 4
        %v2561 = vrot.slane %v809, 5
        %v2562 = vsel %vm2537, %v2560, %v2561
        %v2563 = vrot.slane %v2561, 4
        %v2564 = vrot.slane %v810, 5
        %v2565 = vsel %vm2537, %v2563, %v2564
        %v2566 = vrot.slane %v811, 5
        %v2567 = vrot.slane %v2566, 4
        %v2568 = vrot.slane %v812, 5
        %v2569 = vsel %vm2537, %v2567, %v2568
        %v2570 = vrot.slane %v2568, 4
        %v2571 = vrot.slane %v813, 5
        %v2572 = vsel %vm2537, %v2570, %v2571
        %v2573 = vrot.slane %v814, 5
        %v2574 = vrot.slane %v2573, 4
        %v2575 = vrot.slane %v815, 5
        %v2576 = vsel %vm2537, %v2574, %v2575
        %v2577 = vrot.slane %v2575, 4
        %v2578 = vrot.slane %v816, 5
        %v2579 = vsel %vm2537, %v2577, %v2578
        %v2580 = vrot.slane %v817, 5
        %v2581 = vrot.slane %v2580, 4
        %v2582 = vrot.slane %v818, 5
        %v2583 = vsel %vm2537, %v2581, %v2582
        %v2584 = vrot.slane %v2582, 4
        %v2585 = vrot.slane %v819, 5
        %v2586 = vsel %vm2537, %v2584, %v2585
        %v2587 = vrot.slane %v820, 5
        %v2588 = vrot.slane %v2587, 4
        %v2589 = vrot.slane %v821, 5
        %v2590 = vsel %vm2537, %v2588, %v2589
        %v2591 = vrot.slane %v2589, 4
        %v2592 = vrot.slane %v822, 5
        %v2593 = vsel %vm2537, %v2591, %v2592
        %v2594 = vrot.slane %v823, 5
        %v2595 = vrot.slane %v2594, 4
        %v2596 = vrot.slane %v824, 5
        %v2597 = vsel %vm2537, %v2595, %v2596
        %v2598 = vrot.slane %v2596, 4
        %v2599 = vrot.slane %v825, 5
        %v2600 = vsel %vm2537, %v2598, %v2599
        %v2601 = vrot.slane %v826, 5
        %v2602 = vrot.slane %v2601, 4
        %v2603 = vrot.slane %v827, 5
        %v2604 = vsel %vm2537, %v2602, %v2603
        %v2605 = vrot.slane %v2603, 4
        %v2606 = vrot.slane %v828, 5
        %v2607 = vsel %vm2537, %v2605, %v2606
        %v2608 = vrot.slane %v829, 5
        %v2609 = vrot.slane %v2608, 4
        %v2610 = vrot.slane %v830, 5
        %v2611 = vsel %vm2537, %v2609, %v2610
        %v2612 = vrot.slane %v2610, 4
        %v2613 = vrot.slane %v831, 5
        %v2614 = vsel %vm2537, %v2612, %v2613
        %v2615 = vrot.slane %v832, 5
        %v2616 = vrot.slane %v2615, 4
        %v2617 = vrot.slane %v833, 5
        %v2618 = vsel %vm2537, %v2616, %v2617
        %v2619 = vrot.slane %v2617, 4
        %v2620 = vrot.slane %v834, 5
        %v2621 = vsel %vm2537, %v2619, %v2620
        %v2622 = vrot.slane %v835, 5
        %v2623 = vrot.slane %v2622, 4
        %v2624 = vrot.slane %v836, 5
        %v2625 = vsel %vm2537, %v2623, %v2624
        %v2626 = vrot.slane %v2624, 4
        %v2627 = vrot.slane %v837, 5
        %v2628 = vsel %vm2537, %v2626, %v2627
        %v2629 = vrot.slane %v838, 5
        %v2630 = vrot.slane %v2629, 4
        %v2631 = vrot.slane %v839, 5
        %v2632 = vsel %vm2537, %v2630, %v2631
        %v2633 = vrot.slane %v2631, 4
        %v2634 = vrot.slane %v840, 5
        %v2635 = vsel %vm2537, %v2633, %v2634
        %v2636 = vrot.slane %v841, 5
        %v2637 = vrot.slane %v2636, 4
        %v2638 = vrot.slane %v842, 5
        %v2639 = vsel %vm2537, %v2637, %v2638
        %v2640 = vrot.slane %v2638, 4
        %v2641 = vrot.slane %v843, 5
        %v2642 = vsel %vm2537, %v2640, %v2641
        %v2643 = vrot.slane %v844, 5
        %v2644 = vrot.slane %v2643, 4
        %v2645 = vrot.slane %v845, 5
        %v2646 = vsel %vm2537, %v2644, %v2645
        %v2647 = vrot.slane %v2645, 4
        %v2648 = vrot.slane %v846, 5
        %v2649 = vsel %vm2537, %v2647, %v2648
        %s2650 = scalar_lea.vmem [#allocation9], 128
        %v2651 = vld [vmem:[%s2650] sm:$0xf]
        %v2652 = vld [vmem:[%s2650 + $0x4] sm:$0xf]
        %v2653 = vld [vmem:[%s2650 + $0x8] sm:$0xf]
        %v2654 = vld [vmem:[%s2650 + $0xc] sm:$0xf]
        %v2655 = vld [vmem:[%s2650 + $0x10] sm:$0xf]
        %v2656 = vld [vmem:[%s2650 + $0x14] sm:$0xf]
        %v2657 = vld [vmem:[%s2650 + $0x18] sm:$0xf]
        %v2658 = vld [vmem:[%s2650 + $0x1c] sm:$0xf]
        %v2659 = vld [vmem:[%s2650 + $0x20] sm:$0xf]
        %v2660 = vld [vmem:[%s2650 + $0x24] sm:$0xf]
        %v2661 = vld [vmem:[%s2650 + $0x28] sm:$0xf]
        %v2662 = vld [vmem:[%s2650 + $0x2c] sm:$0xf]
        %v2663 = vld [vmem:[%s2650 + $0x30] sm:$0xf]
        %v2664 = vld [vmem:[%s2650 + $0x34] sm:$0xf]
        %v2665 = vld [vmem:[%s2650 + $0x38] sm:$0xf]
        %v2666 = vld [vmem:[%s2650 + $0x3c] sm:$0xf]
        %v2667 = vunpack.c.l.b16 %v2541
        %v2668 = vunpack.c.l.b16 %v2544
        %v2669 = vunpack.c.l.b16 %v2548
        %v2670 = vunpack.c.l.b16 %v2551
        %v2671 = vunpack.c.l.b16 %v2555
        %v2672 = vunpack.c.l.b16 %v2558
        %v2673 = vunpack.c.l.b16 %v2562
        %v2674 = vunpack.c.l.b16 %v2565
        %v2675 = vunpack.c.l.b16 %v2569
        %v2676 = vunpack.c.l.b16 %v2572
        %v2677 = vunpack.c.l.b16 %v2576
        %v2678 = vunpack.c.l.b16 %v2579
        %v2679 = vunpack.c.l.b16 %v2583
        %v2680 = vunpack.c.l.b16 %v2586
        %v2681 = vunpack.c.l.b16 %v2590
        %v2682 = vunpack.c.l.b16 %v2593
        %v2683 = vunpack.c.l.b16 %v2597
        %v2684 = vunpack.c.l.b16 %v2600
        %v2685 = vunpack.c.l.b16 %v2604
        %v2686 = vunpack.c.l.b16 %v2607
        %v2687 = vunpack.c.l.b16 %v2611
        %v2688 = vunpack.c.l.b16 %v2614
        %v2689 = vunpack.c.l.b16 %v2618
        %v2690 = vunpack.c.l.b16 %v2621
        %v2691 = vunpack.c.l.b16 %v2625
        %v2692 = vunpack.c.l.b16 %v2628
        %v2693 = vunpack.c.l.b16 %v2632
        %v2694 = vunpack.c.l.b16 %v2635
        %v2695 = vunpack.c.l.b16 %v2639
        %v2696 = vunpack.c.l.b16 %v2642
        %v2697 = vunpack.c.l.b16 %v2646
        %v2698 = vunpack.c.l.b16 %v2649
        %v2699 = vpack.c.b16 %v2668, %v2667
        %v2700 = vpack.c.b16 %v2670, %v2669
        %v2701 = vpack.c.b16 %v2672, %v2671
        %v2702 = vpack.c.b16 %v2674, %v2673
        %v2703 = vpack.c.b16 %v2676, %v2675
        %v2704 = vpack.c.b16 %v2678, %v2677
        %v2705 = vpack.c.b16 %v2680, %v2679
        %v2706 = vpack.c.b16 %v2682, %v2681
        %v2707 = vpack.c.b16 %v2684, %v2683
        %v2708 = vpack.c.b16 %v2686, %v2685
        %v2709 = vpack.c.b16 %v2688, %v2687
        %v2710 = vpack.c.b16 %v2690, %v2689
        %v2711 = vpack.c.b16 %v2692, %v2691
        %v2712 = vpack.c.b16 %v2694, %v2693
        %v2713 = vpack.c.b16 %v2696, %v2695
        %v2714 = vpack.c.b16 %v2698, %v2697
        %v2747 = vunpack.c.l.b16 %v2651
        %v2748 = vunpack.c.l.b16 %v2652
        %v2749 = vunpack.c.l.b16 %v2653
        %v2750 = vunpack.c.l.b16 %v2654
        %v2751 = vunpack.c.l.b16 %v2655
        %v2752 = vunpack.c.l.b16 %v2656
        %v2753 = vunpack.c.l.b16 %v2657
        %v2754 = vunpack.c.l.b16 %v2658
        %v2755 = vunpack.c.l.b16 %v2659
        %v2756 = vunpack.c.l.b16 %v2660
        %v2757 = vunpack.c.l.b16 %v2661
        %v2758 = vunpack.c.l.b16 %v2662
        %v2759 = vunpack.c.l.b16 %v2663
        %v2760 = vunpack.c.l.b16 %v2664
        %v2761 = vunpack.c.l.b16 %v2665
        %v2762 = vunpack.c.l.b16 %v2666
        %v2763 = vpack.c.b16 %v2748, %v2747
        %v2764 = vpack.c.b16 %v2750, %v2749
        %v2765 = vpack.c.b16 %v2752, %v2751
        %v2766 = vpack.c.b16 %v2754, %v2753
        %v2767 = vpack.c.b16 %v2756, %v2755
        %v2768 = vpack.c.b16 %v2758, %v2757
        %v2769 = vpack.c.b16 %v2760, %v2759
        %v2770 = vpack.c.b16 %v2762, %v2761
        %2779 = vmatpush.bf16.msra.mxu0 %v2770
        %2780 = vmatpush.bf16.msra.mxu0 %v2769
        %2781 = vmatpush.bf16.msra.mxu0 %v2768
        %2782 = vmatpush.bf16.msra.mxu0 %v2767
        %2783 = vmatpush.bf16.msra.mxu0 %v2766
        %2784 = vmatpush.bf16.msra.mxu0 %v2765
        %2785 = vmatpush.bf16.msra.mxu0 %v2764
        %2786 = vmatpush.bf16.msra.mxu0 %v2763
        %2787 = vmatmul.bf16.gmra.mxu0 %v2699
        %v2788 = vpop.f32.mrf.mxu0
        %v2789 = vadd.f32 0.0, %v2788
        %v2790 = vpop.f32.mrf.mxu0
        %v2791 = vadd.f32 0.0, %v2790
        %2792 = vmatmul.bf16.gmra.mxu0 %v2700
        %v2793 = vpop.f32.mrf.mxu0
        %v2794 = vadd.f32 0.0, %v2793
        %v2795 = vpop.f32.mrf.mxu0
        %v2796 = vadd.f32 0.0, %v2795
        %2797 = vmatmul.bf16.gmra.mxu0 %v2701
        %v2798 = vpop.f32.mrf.mxu0
        %v2799 = vadd.f32 0.0, %v2798
        %v2800 = vpop.f32.mrf.mxu0
        %v2801 = vadd.f32 0.0, %v2800
        %2802 = vmatmul.bf16.gmra.mxu0 %v2702
        %v2803 = vpop.f32.mrf.mxu0
        %v2804 = vadd.f32 0.0, %v2803
        %v2805 = vpop.f32.mrf.mxu0
        %v2806 = vadd.f32 0.0, %v2805
        %2807 = vmatmul.bf16.gmra.mxu0 %v2703
        %v2808 = vpop.f32.mrf.mxu0
        %v2809 = vadd.f32 0.0, %v2808
        %v2810 = vpop.f32.mrf.mxu0
        %v2811 = vadd.f32 0.0, %v2810
        %2812 = vmatmul.bf16.gmra.mxu0 %v2704
        %v2813 = vpop.f32.mrf.mxu0
        %v2814 = vadd.f32 0.0, %v2813
        %v2815 = vpop.f32.mrf.mxu0
        %v2816 = vadd.f32 0.0, %v2815
        %2817 = vmatmul.bf16.gmra.mxu0 %v2705
        %v2818 = vpop.f32.mrf.mxu0
        %v2819 = vadd.f32 0.0, %v2818
        %v2820 = vpop.f32.mrf.mxu0
        %v2821 = vadd.f32 0.0, %v2820
        %2822 = vmatmul.bf16.gmra.mxu0 %v2706
        %v2823 = vpop.f32.mrf.mxu0
        %v2824 = vadd.f32 0.0, %v2823
        %v2825 = vpop.f32.mrf.mxu0
        %v2826 = vadd.f32 0.0, %v2825
        %2827 = vmatmul.bf16.gmra.mxu0 %v2707
        %v2828 = vpop.f32.mrf.mxu0
        %v2829 = vadd.f32 0.0, %v2828
        %v2830 = vpop.f32.mrf.mxu0
        %v2831 = vadd.f32 0.0, %v2830
        %2832 = vmatmul.bf16.gmra.mxu0 %v2708
        %v2833 = vpop.f32.mrf.mxu0
        %v2834 = vadd.f32 0.0, %v2833
        %v2835 = vpop.f32.mrf.mxu0
        %v2836 = vadd.f32 0.0, %v2835
        %2837 = vmatmul.bf16.gmra.mxu0 %v2709
        %v2838 = vpop.f32.mrf.mxu0
        %v2839 = vadd.f32 0.0, %v2838
        %v2840 = vpop.f32.mrf.mxu0
        %v2841 = vadd.f32 0.0, %v2840
        %2842 = vmatmul.bf16.gmra.mxu0 %v2710
        %v2843 = vpop.f32.mrf.mxu0
        %v2844 = vadd.f32 0.0, %v2843
        %v2845 = vpop.f32.mrf.mxu0
        %v2846 = vadd.f32 0.0, %v2845
        %2847 = vmatmul.bf16.gmra.mxu0 %v2711
        %v2848 = vpop.f32.mrf.mxu0
        %v2849 = vadd.f32 0.0, %v2848
        %v2850 = vpop.f32.mrf.mxu0
        %v2851 = vadd.f32 0.0, %v2850
        %2852 = vmatmul.bf16.gmra.mxu0 %v2712
        %v2853 = vpop.f32.mrf.mxu0
        %v2854 = vadd.f32 0.0, %v2853
        %v2855 = vpop.f32.mrf.mxu0
        %v2856 = vadd.f32 0.0, %v2855
        %2857 = vmatmul.bf16.gmra.mxu0 %v2713
        %v2858 = vpop.f32.mrf.mxu0
        %v2859 = vadd.f32 0.0, %v2858
        %v2860 = vpop.f32.mrf.mxu0
        %v2861 = vadd.f32 0.0, %v2860
        %2862 = vmatmul.bf16.gmra.mxu0 %v2714
        %v2863 = vpop.f32.mrf.mxu0
        %v2864 = vadd.f32 0.0, %v2863
        %v2865 = vpop.f32.mrf.mxu0
        %v2866 = vadd.f32 0.0, %v2865
        %2867 = vdwg.mxu0
        %v2868 = vadd.f32 %v2487, %v2789
        %v2869 = vadd.f32 %v2488, %v2791
        %v2870 = vadd.f32 %v2489, %v2794
        %v2871 = vadd.f32 %v2490, %v2796
        %v2872 = vadd.f32 %v2491, %v2799
        %v2873 = vadd.f32 %v2492, %v2801
        %v2874 = vadd.f32 %v2493, %v2804
        %v2875 = vadd.f32 %v2494, %v2806
        %v2876 = vadd.f32 %v2495, %v2809
        %v2877 = vadd.f32 %v2496, %v2811
        %v2878 = vadd.f32 %v2497, %v2814
        %v2879 = vadd.f32 %v2498, %v2816
        %v2880 = vadd.f32 %v2499, %v2819
        %v2881 = vadd.f32 %v2500, %v2821
        %v2882 = vadd.f32 %v2501, %v2824
        %v2883 = vadd.f32 %v2502, %v2826
        %v2884 = vadd.f32 %v2503, %v2829
        %v2885 = vadd.f32 %v2504, %v2831
        %v2886 = vadd.f32 %v2505, %v2834
        %v2887 = vadd.f32 %v2506, %v2836
        %v2888 = vadd.f32 %v2507, %v2839
        %v2889 = vadd.f32 %v2508, %v2841
        %v2890 = vadd.f32 %v2509, %v2844
        %v2891 = vadd.f32 %v2510, %v2846
        %v2892 = vadd.f32 %v2511, %v2849
        %v2893 = vadd.f32 %v2512, %v2851
        %v2894 = vadd.f32 %v2513, %v2854
        %v2895 = vadd.f32 %v2514, %v2856
        %v2896 = vadd.f32 %v2515, %v2859
        %v2897 = vadd.f32 %v2516, %v2861
        %v2898 = vadd.f32 %v2517, %v2864
        %v2899 = vadd.f32 %v2518, %v2866
        %v2901 = vrot.slane %v847, 5
        %v2902 = vrot.slane %v2901, 4
        %v2903 = vrot.slane %v848, 5
        %v2904 = vsel %vm2537, %v2902, %v2903
        %v2905 = vrot.slane %v2903, 4
        %v2906 = vrot.slane %v849, 5
        %v2907 = vsel %vm2537, %v2905, %v2906
        %s2908 = scalar_lea.vmem [#allocation9], 320
        %v2909 = vld [vmem:[%s2908] sm:$0xf]
        %v2910 = vld [vmem:[%s2908 + $0x4] sm:$0xf]
        %v2911 = vld [vmem:[%s2908 + $0x8] sm:$0xf]
        %v2912 = vld [vmem:[%s2908 + $0xc] sm:$0xf]
        %v2913 = vld [vmem:[%s2908 + $0x10] sm:$0xf]
        %v2914 = vld [vmem:[%s2908 + $0x14] sm:$0xf]
        %v2915 = vld [vmem:[%s2908 + $0x18] sm:$0xf]
        %v2916 = vld [vmem:[%s2908 + $0x1c] sm:$0xf]
        %v2917 = vld [vmem:[%s2908 + $0x20] sm:$0xf]
        %v2918 = vld [vmem:[%s2908 + $0x24] sm:$0xf]
        %v2919 = vld [vmem:[%s2908 + $0x28] sm:$0xf]
        %v2920 = vld [vmem:[%s2908 + $0x2c] sm:$0xf]
        %v2921 = vld [vmem:[%s2908 + $0x30] sm:$0xf]
        %v2922 = vld [vmem:[%s2908 + $0x34] sm:$0xf]
        %v2923 = vld [vmem:[%s2908 + $0x38] sm:$0xf]
        %v2924 = vld [vmem:[%s2908 + $0x3c] sm:$0xf]
        %v2925 = vunpack.c.l.b16 %v2904
        %v2926 = vunpack.c.l.b16 %v2907
        %v2927 = vpack.c.b16 %v2926, %v2925
        %v2945 = vunpack.c.l.b16 %v2909
        %v2946 = vunpack.c.l.b16 %v2910
        %v2947 = vunpack.c.l.b16 %v2911
        %v2948 = vunpack.c.l.b16 %v2912
        %v2949 = vunpack.c.l.b16 %v2913
        %v2950 = vunpack.c.l.b16 %v2914
        %v2951 = vunpack.c.l.b16 %v2915
        %v2952 = vunpack.c.l.b16 %v2916
        %v2953 = vunpack.c.l.b16 %v2917
        %v2954 = vunpack.c.l.b16 %v2918
        %v2955 = vunpack.c.l.b16 %v2919
        %v2956 = vunpack.c.l.b16 %v2920
        %v2957 = vunpack.c.l.b16 %v2921
        %v2958 = vunpack.c.l.b16 %v2922
        %v2959 = vunpack.c.l.b16 %v2923
        %v2960 = vunpack.c.l.b16 %v2924
        %v2961 = vpack.c.b16 %v2946, %v2945
        %v2962 = vpack.c.b16 %v2948, %v2947
        %v2963 = vpack.c.b16 %v2950, %v2949
        %v2964 = vpack.c.b16 %v2952, %v2951
        %v2965 = vpack.c.b16 %v2954, %v2953
        %v2966 = vpack.c.b16 %v2956, %v2955
        %v2967 = vpack.c.b16 %v2958, %v2957
        %v2968 = vpack.c.b16 %v2960, %v2959
        %2977 = vmatpush.bf16.msra.mxu0 %v2968
        %2978 = vmatpush.bf16.msra.mxu0 %v2967
        %2979 = vmatpush.bf16.msra.mxu0 %v2966
        %2980 = vmatpush.bf16.msra.mxu0 %v2965
        %2981 = vmatpush.bf16.msra.mxu0 %v2964
        %2982 = vmatpush.bf16.msra.mxu0 %v2963
        %2983 = vmatpush.bf16.msra.mxu0 %v2962
        %2984 = vmatpush.bf16.msra.mxu0 %v2961
        %2985 = vmatmul.bf16.gmra.mxu0 %v2700
        %v2986 = vpop.f32.mrf.mxu0
        %v2987 = vadd.f32 0.0, %v2986
        %v2988 = vpop.f32.mrf.mxu0
        %v2989 = vadd.f32 0.0, %v2988
        %2990 = vmatmul.bf16.gmra.mxu0 %v2701
        %v2991 = vpop.f32.mrf.mxu0
        %v2992 = vadd.f32 0.0, %v2991
        %v2993 = vpop.f32.mrf.mxu0
        %v2994 = vadd.f32 0.0, %v2993
        %2995 = vmatmul.bf16.gmra.mxu0 %v2702
        %v2996 = vpop.f32.mrf.mxu0
        %v2997 = vadd.f32 0.0, %v2996
        %v2998 = vpop.f32.mrf.mxu0
        %v2999 = vadd.f32 0.0, %v2998
        %3000 = vmatmul.bf16.gmra.mxu0 %v2703
        %v3001 = vpop.f32.mrf.mxu0
        %v3002 = vadd.f32 0.0, %v3001
        %v3003 = vpop.f32.mrf.mxu0
        %v3004 = vadd.f32 0.0, %v3003
        %3005 = vmatmul.bf16.gmra.mxu0 %v2704
        %v3006 = vpop.f32.mrf.mxu0
        %v3007 = vadd.f32 0.0, %v3006
        %v3008 = vpop.f32.mrf.mxu0
        %v3009 = vadd.f32 0.0, %v3008
        %3010 = vmatmul.bf16.gmra.mxu0 %v2705
        %v3011 = vpop.f32.mrf.mxu0
        %v3012 = vadd.f32 0.0, %v3011
        %v3013 = vpop.f32.mrf.mxu0
        %v3014 = vadd.f32 0.0, %v3013
        %3015 = vmatmul.bf16.gmra.mxu0 %v2706
        %v3016 = vpop.f32.mrf.mxu0
        %v3017 = vadd.f32 0.0, %v3016
        %v3018 = vpop.f32.mrf.mxu0
        %v3019 = vadd.f32 0.0, %v3018
        %3020 = vmatmul.bf16.gmra.mxu0 %v2707
        %v3021 = vpop.f32.mrf.mxu0
        %v3022 = vadd.f32 0.0, %v3021
        %v3023 = vpop.f32.mrf.mxu0
        %v3024 = vadd.f32 0.0, %v3023
        %3025 = vmatmul.bf16.gmra.mxu0 %v2708
        %v3026 = vpop.f32.mrf.mxu0
        %v3027 = vadd.f32 0.0, %v3026
        %v3028 = vpop.f32.mrf.mxu0
        %v3029 = vadd.f32 0.0, %v3028
        %3030 = vmatmul.bf16.gmra.mxu0 %v2709
        %v3031 = vpop.f32.mrf.mxu0
        %v3032 = vadd.f32 0.0, %v3031
        %v3033 = vpop.f32.mrf.mxu0
        %v3034 = vadd.f32 0.0, %v3033
        %3035 = vmatmul.bf16.gmra.mxu0 %v2710
        %v3036 = vpop.f32.mrf.mxu0
        %v3037 = vadd.f32 0.0, %v3036
        %v3038 = vpop.f32.mrf.mxu0
        %v3039 = vadd.f32 0.0, %v3038
        %3040 = vmatmul.bf16.gmra.mxu0 %v2711
        %v3041 = vpop.f32.mrf.mxu0
        %v3042 = vadd.f32 0.0, %v3041
        %v3043 = vpop.f32.mrf.mxu0
        %v3044 = vadd.f32 0.0, %v3043
        %3045 = vmatmul.bf16.gmra.mxu0 %v2712
        %v3046 = vpop.f32.mrf.mxu0
        %v3047 = vadd.f32 0.0, %v3046
        %v3048 = vpop.f32.mrf.mxu0
        %v3049 = vadd.f32 0.0, %v3048
        %3050 = vmatmul.bf16.gmra.mxu0 %v2713
        %v3051 = vpop.f32.mrf.mxu0
        %v3052 = vadd.f32 0.0, %v3051
        %v3053 = vpop.f32.mrf.mxu0
        %v3054 = vadd.f32 0.0, %v3053
        %3055 = vmatmul.bf16.gmra.mxu0 %v2714
        %v3056 = vpop.f32.mrf.mxu0
        %v3057 = vadd.f32 0.0, %v3056
        %v3058 = vpop.f32.mrf.mxu0
        %v3059 = vadd.f32 0.0, %v3058
        %3060 = vmatmul.bf16.gmra.mxu0 %v2927
        %v3061 = vpop.f32.mrf.mxu0
        %v3062 = vadd.f32 0.0, %v3061
        %v3063 = vpop.f32.mrf.mxu0
        %v3064 = vadd.f32 0.0, %v3063
        %3065 = vdwg.mxu0
        %v3066 = vadd.f32 %v2868, %v2987
        %v3067 = vadd.f32 %v2869, %v2989
        %v3068 = vadd.f32 %v2870, %v2992
        %v3069 = vadd.f32 %v2871, %v2994
        %v3070 = vadd.f32 %v2872, %v2997
        %v3071 = vadd.f32 %v2873, %v2999
        %v3072 = vadd.f32 %v2874, %v3002
        %v3073 = vadd.f32 %v2875, %v3004
        %v3074 = vadd.f32 %v2876, %v3007
        %v3075 = vadd.f32 %v2877, %v3009
        %v3076 = vadd.f32 %v2878, %v3012
        %v3077 = vadd.f32 %v2879, %v3014
        %v3078 = vadd.f32 %v2880, %v3017
        %v3079 = vadd.f32 %v2881, %v3019
        %v3080 = vadd.f32 %v2882, %v3022
        %v3081 = vadd.f32 %v2883, %v3024
        %v3082 = vadd.f32 %v2884, %v3027
        %v3083 = vadd.f32 %v2885, %v3029
        %v3084 = vadd.f32 %v2886, %v3032
        %v3085 = vadd.f32 %v2887, %v3034
        %v3086 = vadd.f32 %v2888, %v3037
        %v3087 = vadd.f32 %v2889, %v3039
        %v3088 = vadd.f32 %v2890, %v3042
        %v3089 = vadd.f32 %v2891, %v3044
        %v3090 = vadd.f32 %v2892, %v3047
        %v3091 = vadd.f32 %v2893, %v3049
        %v3092 = vadd.f32 %v2894, %v3052
        %v3093 = vadd.f32 %v2895, %v3054
        %v3094 = vadd.f32 %v2896, %v3057
        %v3095 = vadd.f32 %v2897, %v3059
        %v3096 = vadd.f32 %v2898, %v3062
        %v3097 = vadd.f32 %v2899, %v3064
        %v3099 = vrot.slane %v850, 5
        %v3100 = vrot.slane %v3099, 4
        %v3101 = vrot.slane %v851, 5
        %v3102 = vsel %vm2537, %v3100, %v3101
        %v3103 = vrot.slane %v3101, 4
        %v3104 = vrot.slane %v852, 5
        %v3105 = vsel %vm2537, %v3103, %v3104
        %s3106 = scalar_lea.vmem [#allocation9], 512
        %v3107 = vld [vmem:[%s3106] sm:$0xf]
        %v3108 = vld [vmem:[%s3106 + $0x4] sm:$0xf]
        %v3109 = vld [vmem:[%s3106 + $0x8] sm:$0xf]
        %v3110 = vld [vmem:[%s3106 + $0xc] sm:$0xf]
        %v3111 = vld [vmem:[%s3106 + $0x10] sm:$0xf]
        %v3112 = vld [vmem:[%s3106 + $0x14] sm:$0xf]
        %v3113 = vld [vmem:[%s3106 + $0x18] sm:$0xf]
        %v3114 = vld [vmem:[%s3106 + $0x1c] sm:$0xf]
        %v3115 = vld [vmem:[%s3106 + $0x20] sm:$0xf]
        %v3116 = vld [vmem:[%s3106 + $0x24] sm:$0xf]
        %v3117 = vld [vmem:[%s3106 + $0x28] sm:$0xf]
        %v3118 = vld [vmem:[%s3106 + $0x2c] sm:$0xf]
        %v3119 = vld [vmem:[%s3106 + $0x30] sm:$0xf]
        %v3120 = vld [vmem:[%s3106 + $0x34] sm:$0xf]
        %v3121 = vld [vmem:[%s3106 + $0x38] sm:$0xf]
        %v3122 = vld [vmem:[%s3106 + $0x3c] sm:$0xf]
        %v3123 = vunpack.c.l.b16 %v3102
        %v3124 = vunpack.c.l.b16 %v3105
        %v3125 = vpack.c.b16 %v3124, %v3123
        %v3143 = vunpack.c.l.b16 %v3107
        %v3144 = vunpack.c.l.b16 %v3108
        %v3145 = vunpack.c.l.b16 %v3109
        %v3146 = vunpack.c.l.b16 %v3110
        %v3147 = vunpack.c.l.b16 %v3111
        %v3148 = vunpack.c.l.b16 %v3112
        %v3149 = vunpack.c.l.b16 %v3113
        %v3150 = vunpack.c.l.b16 %v3114
        %v3151 = vunpack.c.l.b16 %v3115
        %v3152 = vunpack.c.l.b16 %v3116
        %v3153 = vunpack.c.l.b16 %v3117
        %v3154 = vunpack.c.l.b16 %v3118
        %v3155 = vunpack.c.l.b16 %v3119
        %v3156 = vunpack.c.l.b16 %v3120
        %v3157 = vunpack.c.l.b16 %v3121
        %v3158 = vunpack.c.l.b16 %v3122
        %v3159 = vpack.c.b16 %v3144, %v3143
        %v3160 = vpack.c.b16 %v3146, %v3145
        %v3161 = vpack.c.b16 %v3148, %v3147
        %v3162 = vpack.c.b16 %v3150, %v3149
        %v3163 = vpack.c.b16 %v3152, %v3151
        %v3164 = vpack.c.b16 %v3154, %v3153
        %v3165 = vpack.c.b16 %v3156, %v3155
        %v3166 = vpack.c.b16 %v3158, %v3157
        %3175 = vmatpush.bf16.msra.mxu0 %v3166
        %3176 = vmatpush.bf16.msra.mxu0 %v3165
        %3177 = vmatpush.bf16.msra.mxu0 %v3164
        %3178 = vmatpush.bf16.msra.mxu0 %v3163
        %3179 = vmatpush.bf16.msra.mxu0 %v3162
        %3180 = vmatpush.bf16.msra.mxu0 %v3161
        %3181 = vmatpush.bf16.msra.mxu0 %v3160
        %3182 = vmatpush.bf16.msra.mxu0 %v3159
        %3183 = vmatmul.bf16.gmra.mxu0 %v2701
        %v3184 = vpop.f32.mrf.mxu0
        %v3185 = vadd.f32 0.0, %v3184
        %v3186 = vpop.f32.mrf.mxu0
        %v3187 = vadd.f32 0.0, %v3186
        %3188 = vmatmul.bf16.gmra.mxu0 %v2702
        %v3189 = vpop.f32.mrf.mxu0
        %v3190 = vadd.f32 0.0, %v3189
        %v3191 = vpop.f32.mrf.mxu0
        %v3192 = vadd.f32 0.0, %v3191
        %3193 = vmatmul.bf16.gmra.mxu0 %v2703
        %v3194 = vpop.f32.mrf.mxu0
        %v3195 = vadd.f32 0.0, %v3194
        %v3196 = vpop.f32.mrf.mxu0
        %v3197 = vadd.f32 0.0, %v3196
        %3198 = vmatmul.bf16.gmra.mxu0 %v2704
        %v3199 = vpop.f32.mrf.mxu0
        %v3200 = vadd.f32 0.0, %v3199
        %v3201 = vpop.f32.mrf.mxu0
        %v3202 = vadd.f32 0.0, %v3201
        %3203 = vmatmul.bf16.gmra.mxu0 %v2705
        %v3204 = vpop.f32.mrf.mxu0
        %v3205 = vadd.f32 0.0, %v3204
        %v3206 = vpop.f32.mrf.mxu0
        %v3207 = vadd.f32 0.0, %v3206
        %3208 = vmatmul.bf16.gmra.mxu0 %v2706
        %v3209 = vpop.f32.mrf.mxu0
        %v3210 = vadd.f32 0.0, %v3209
        %v3211 = vpop.f32.mrf.mxu0
        %v3212 = vadd.f32 0.0, %v3211
        %3213 = vmatmul.bf16.gmra.mxu0 %v2707
        %v3214 = vpop.f32.mrf.mxu0
        %v3215 = vadd.f32 0.0, %v3214
        %v3216 = vpop.f32.mrf.mxu0
        %v3217 = vadd.f32 0.0, %v3216
        %3218 = vmatmul.bf16.gmra.mxu0 %v2708
        %v3219 = vpop.f32.mrf.mxu0
        %v3220 = vadd.f32 0.0, %v3219
        %v3221 = vpop.f32.mrf.mxu0
        %v3222 = vadd.f32 0.0, %v3221
        %3223 = vmatmul.bf16.gmra.mxu0 %v2709
        %v3224 = vpop.f32.mrf.mxu0
        %v3225 = vadd.f32 0.0, %v3224
        %v3226 = vpop.f32.mrf.mxu0
        %v3227 = vadd.f32 0.0, %v3226
        %3228 = vmatmul.bf16.gmra.mxu0 %v2710
        %v3229 = vpop.f32.mrf.mxu0
        %v3230 = vadd.f32 0.0, %v3229
        %v3231 = vpop.f32.mrf.mxu0
        %v3232 = vadd.f32 0.0, %v3231
        %3233 = vmatmul.bf16.gmra.mxu0 %v2711
        %v3234 = vpop.f32.mrf.mxu0
        %v3235 = vadd.f32 0.0, %v3234
        %v3236 = vpop.f32.mrf.mxu0
        %v3237 = vadd.f32 0.0, %v3236
        %3238 = vmatmul.bf16.gmra.mxu0 %v2712
        %v3239 = vpop.f32.mrf.mxu0
        %v3240 = vadd.f32 0.0, %v3239
        %v3241 = vpop.f32.mrf.mxu0
        %v3242 = vadd.f32 0.0, %v3241
        %3243 = vmatmul.bf16.gmra.mxu0 %v2713
        %v3244 = vpop.f32.mrf.mxu0
        %v3245 = vadd.f32 0.0, %v3244
        %v3246 = vpop.f32.mrf.mxu0
        %v3247 = vadd.f32 0.0, %v3246
        %3248 = vmatmul.bf16.gmra.mxu0 %v2714
        %v3249 = vpop.f32.mrf.mxu0
        %v3250 = vadd.f32 0.0, %v3249
        %v3251 = vpop.f32.mrf.mxu0
        %v3252 = vadd.f32 0.0, %v3251
        %3253 = vmatmul.bf16.gmra.mxu0 %v2927
        %v3254 = vpop.f32.mrf.mxu0
        %v3255 = vadd.f32 0.0, %v3254
        %v3256 = vpop.f32.mrf.mxu0
        %v3257 = vadd.f32 0.0, %v3256
        %3258 = vmatmul.bf16.gmra.mxu0 %v3125
        %v3259 = vpop.f32.mrf.mxu0
        %v3260 = vadd.f32 0.0, %v3259
        %v3261 = vpop.f32.mrf.mxu0
        %v3262 = vadd.f32 0.0, %v3261
        %3263 = vdwg.mxu0
        %v3264 = vadd.f32 %v3066, %v3185
        %v3265 = vadd.f32 %v3067, %v3187
        %v3266 = vadd.f32 %v3068, %v3190
        %v3267 = vadd.f32 %v3069, %v3192
        %v3268 = vadd.f32 %v3070, %v3195
        %v3269 = vadd.f32 %v3071, %v3197
        %v3270 = vadd.f32 %v3072, %v3200
        %v3271 = vadd.f32 %v3073, %v3202
        %v3272 = vadd.f32 %v3074, %v3205
        %v3273 = vadd.f32 %v3075, %v3207
        %v3274 = vadd.f32 %v3076, %v3210
        %v3275 = vadd.f32 %v3077, %v3212
        %v3276 = vadd.f32 %v3078, %v3215
        %v3277 = vadd.f32 %v3079, %v3217
        %v3278 = vadd.f32 %v3080, %v3220
        %v3279 = vadd.f32 %v3081, %v3222
        %v3280 = vadd.f32 %v3082, %v3225
        %v3281 = vadd.f32 %v3083, %v3227
        %v3282 = vadd.f32 %v3084, %v3230
        %v3283 = vadd.f32 %v3085, %v3232
        %v3284 = vadd.f32 %v3086, %v3235
        %v3285 = vadd.f32 %v3087, %v3237
        %v3286 = vadd.f32 %v3088, %v3240
        %v3287 = vadd.f32 %v3089, %v3242
        %v3288 = vadd.f32 %v3090, %v3245
        %v3289 = vadd.f32 %v3091, %v3247
        %v3290 = vadd.f32 %v3092, %v3250
        %v3291 = vadd.f32 %v3093, %v3252
        %v3292 = vadd.f32 %v3094, %v3255
        %v3293 = vadd.f32 %v3095, %v3257
        %v3294 = vadd.f32 %v3096, %v3260
        %v3295 = vadd.f32 %v3097, %v3262
        %v3296 = vpack.c.bf16 %v3264, %v3264
        %v3297 = vpack.c.bf16 %v3265, %v3265
        %v3298 = vpack.c.bf16 %v3266, %v3266
        %v3299 = vpack.c.bf16 %v3267, %v3267
        %v3300 = vpack.c.bf16 %v3268, %v3268
        %v3301 = vpack.c.bf16 %v3269, %v3269
        %v3302 = vpack.c.bf16 %v3270, %v3270
        %v3303 = vpack.c.bf16 %v3271, %v3271
        %v3304 = vpack.c.bf16 %v3272, %v3272
        %v3305 = vpack.c.bf16 %v3273, %v3273
        %v3306 = vpack.c.bf16 %v3274, %v3274
        %v3307 = vpack.c.bf16 %v3275, %v3275
        %v3308 = vpack.c.bf16 %v3276, %v3276
        %v3309 = vpack.c.bf16 %v3277, %v3277
        %v3310 = vpack.c.bf16 %v3278, %v3278
        %v3311 = vpack.c.bf16 %v3279, %v3279
        %v3312 = vpack.c.bf16 %v3280, %v3280
        %v3313 = vpack.c.bf16 %v3281, %v3281
        %v3314 = vpack.c.bf16 %v3282, %v3282
        %v3315 = vpack.c.bf16 %v3283, %v3283
        %v3316 = vpack.c.bf16 %v3284, %v3284
        %v3317 = vpack.c.bf16 %v3285, %v3285
        %v3318 = vpack.c.bf16 %v3286, %v3286
        %v3319 = vpack.c.bf16 %v3287, %v3287
        %v3320 = vpack.c.bf16 %v3288, %v3288
        %v3321 = vpack.c.bf16 %v3289, %v3289
        %v3322 = vpack.c.bf16 %v3290, %v3290
        %v3323 = vpack.c.bf16 %v3291, %v3291
        %v3324 = vpack.c.bf16 %v3292, %v3292
        %v3325 = vpack.c.bf16 %v3293, %v3293
        %v3326 = vpack.c.bf16 %v3294, %v3294
        %v3327 = vpack.c.bf16 %v3295, %v3295
        %3328 = vst [vmem:[%s482] sm:$0xf] %v3296
        %3329 = vst [vmem:[%s482 + $0x4] sm:$0xf] %v3297
        %3330 = vst [vmem:[%s482 + $0x8] sm:$0xf] %v3298
        %3331 = vst [vmem:[%s482 + $0xc] sm:$0xf] %v3299
        %3332 = vst [vmem:[%s482 + $0x10] sm:$0xf] %v3300
        %3333 = vst [vmem:[%s482 + $0x14] sm:$0xf] %v3301
        %3334 = vst [vmem:[%s482 + $0x18] sm:$0xf] %v3302
        %3335 = vst [vmem:[%s482 + $0x1c] sm:$0xf] %v3303
        %3336 = vst [vmem:[%s482 + $0x20] sm:$0xf] %v3304
        %3337 = vst [vmem:[%s482 + $0x24] sm:$0xf] %v3305
        %3338 = vst [vmem:[%s482 + $0x28] sm:$0xf] %v3306
        %3339 = vst [vmem:[%s482 + $0x2c] sm:$0xf] %v3307
        %3340 = vst [vmem:[%s482 + $0x30] sm:$0xf] %v3308
        %3341 = vst [vmem:[%s482 + $0x34] sm:$0xf] %v3309
        %3342 = vst [vmem:[%s482 + $0x38] sm:$0xf] %v3310
        %3343 = vst [vmem:[%s482 + $0x3c] sm:$0xf] %v3311
        %3344 = vst [vmem:[%s482 + $0x40] sm:$0xf] %v3312
        %3345 = vst [vmem:[%s482 + $0x44] sm:$0xf] %v3313
        %3346 = vst [vmem:[%s482 + $0x48] sm:$0xf] %v3314
        %3347 = vst [vmem:[%s482 + $0x4c] sm:$0xf] %v3315
        %3348 = vst [vmem:[%s482 + $0x50] sm:$0xf] %v3316
        %3349 = vst [vmem:[%s482 + $0x54] sm:$0xf] %v3317
        %3350 = vst [vmem:[%s482 + $0x58] sm:$0xf] %v3318
        %3351 = vst [vmem:[%s482 + $0x5c] sm:$0xf] %v3319
        %3352 = vst [vmem:[%s482 + $0x60] sm:$0xf] %v3320
        %3353 = vst [vmem:[%s482 + $0x64] sm:$0xf] %v3321
        %3354 = vst [vmem:[%s482 + $0x68] sm:$0xf] %v3322
        %3355 = vst [vmem:[%s482 + $0x6c] sm:$0xf] %v3323
        %3356 = vst [vmem:[%s482 + $0x70] sm:$0xf] %v3324
        %3357 = vst [vmem:[%s482 + $0x74] sm:$0xf] %v3325
        %3358 = vst [vmem:[%s482 + $0x78] sm:$0xf] %v3326
        %3359 = vst [vmem:[%s482 + $0x7c] sm:$0xf] %v3327
        %v3360 = vadd.f32 %v3264, %v3265
        %v3361 = vadd.f32 %v3360, %v3266
        %v3362 = vadd.f32 %v3361, %v3267
        %v3363 = vadd.f32 %v3362, %v3268
        %v3364 = vadd.f32 %v3363, %v3269
        %v3365 = vadd.f32 %v3364, %v3270
        %v3366 = vadd.f32 %v3365, %v3271
        %v3367 = vadd.f32 %v3366, %v3272
        %v3368 = vadd.f32 %v3367, %v3273
        %v3369 = vadd.f32 %v3368, %v3274
        %v3370 = vadd.f32 %v3369, %v3275
        %v3371 = vadd.f32 %v3370, %v3276
        %v3372 = vadd.f32 %v3371, %v3277
        %v3373 = vadd.f32 %v3372, %v3278
        %v3374 = vadd.f32 %v3373, %v3279
        %v3375 = vadd.f32 %v3374, %v3280
        %v3376 = vadd.f32 %v3375, %v3281
        %v3377 = vadd.f32 %v3376, %v3282
        %v3378 = vadd.f32 %v3377, %v3283
        %v3379 = vadd.f32 %v3378, %v3284
        %v3380 = vadd.f32 %v3379, %v3285
        %v3381 = vadd.f32 %v3380, %v3286
        %v3382 = vadd.f32 %v3381, %v3287
        %v3383 = vadd.f32 %v3382, %v3288
        %v3384 = vadd.f32 %v3383, %v3289
        %v3385 = vadd.f32 %v3384, %v3290
        %v3386 = vadd.f32 %v3385, %v3291
        %v3387 = vadd.f32 %v3386, %v3292
        %v3388 = vadd.f32 %v3387, %v3293
        %v3389 = vadd.f32 %v3388, %v3294
        %v3390 = vadd.f32 %v3389, %v3295
        %v3391 = vrot.slane %v3390, 4
        %v3392 = vadd.f32 %v3390, %v3391
        %v3393 = vrot.slane %v3392, 2
        %v3394 = vadd.f32 %v3392, %v3393
        %v3395 = vrot.slane %v3394, 1
        %v3396 = vadd.f32 %v3394, %v3395
        %3397 = vst [vmem:[%s488] sm:$0x1] %v3396
        %v3398 = vmul.f32 %v3264, %v3264
        %v3399 = vmul.f32 %v3265, %v3265
        %v3400 = vmul.f32 %v3266, %v3266
        %v3401 = vmul.f32 %v3267, %v3267
        %v3402 = vmul.f32 %v3268, %v3268
        %v3403 = vmul.f32 %v3269, %v3269
        %v3404 = vmul.f32 %v3270, %v3270
        %v3405 = vmul.f32 %v3271, %v3271
        %v3406 = vmul.f32 %v3272, %v3272
        %v3407 = vmul.f32 %v3273, %v3273
        %v3408 = vmul.f32 %v3274, %v3274
        %v3409 = vmul.f32 %v3275, %v3275
        %v3410 = vmul.f32 %v3276, %v3276
        %v3411 = vmul.f32 %v3277, %v3277
        %v3412 = vmul.f32 %v3278, %v3278
        %v3413 = vmul.f32 %v3279, %v3279
        %v3414 = vmul.f32 %v3280, %v3280
        %v3415 = vmul.f32 %v3281, %v3281
        %v3416 = vmul.f32 %v3282, %v3282
        %v3417 = vmul.f32 %v3283, %v3283
        %v3418 = vmul.f32 %v3284, %v3284
        %v3419 = vmul.f32 %v3285, %v3285
        %v3420 = vmul.f32 %v3286, %v3286
        %v3421 = vmul.f32 %v3287, %v3287
        %v3422 = vmul.f32 %v3288, %v3288
        %v3423 = vmul.f32 %v3289, %v3289
        %v3424 = vmul.f32 %v3290, %v3290
        %v3425 = vmul.f32 %v3291, %v3291
        %v3426 = vmul.f32 %v3292, %v3292
        %v3427 = vmul.f32 %v3293, %v3293
        %v3428 = vmul.f32 %v3294, %v3294
        %v3429 = vmul.f32 %v3295, %v3295
        %v3430 = vadd.f32 %v3398, %v3399
        %v3431 = vadd.f32 %v3430, %v3400
        %v3432 = vadd.f32 %v3431, %v3401
        %v3433 = vadd.f32 %v3432, %v3402
        %v3434 = vadd.f32 %v3433, %v3403
        %v3435 = vadd.f32 %v3434, %v3404
        %v3436 = vadd.f32 %v3435, %v3405
        %v3437 = vadd.f32 %v3436, %v3406
        %v3438 = vadd.f32 %v3437, %v3407
        %v3439 = vadd.f32 %v3438, %v3408
        %v3440 = vadd.f32 %v3439, %v3409
        %v3441 = vadd.f32 %v3440, %v3410
        %v3442 = vadd.f32 %v3441, %v3411
        %v3443 = vadd.f32 %v3442, %v3412
        %v3444 = vadd.f32 %v3443, %v3413
        %v3445 = vadd.f32 %v3444, %v3414
        %v3446 = vadd.f32 %v3445, %v3415
        %v3447 = vadd.f32 %v3446, %v3416
        %v3448 = vadd.f32 %v3447, %v3417
        %v3449 = vadd.f32 %v3448, %v3418
        %v3450 = vadd.f32 %v3449, %v3419
        %v3451 = vadd.f32 %v3450, %v3420
        %v3452 = vadd.f32 %v3451, %v3421
        %v3453 = vadd.f32 %v3452, %v3422
        %v3454 = vadd.f32 %v3453, %v3423
        %v3455 = vadd.f32 %v3454, %v3424
        %v3456 = vadd.f32 %v3455, %v3425
        %v3457 = vadd.f32 %v3456, %v3426
        %v3458 = vadd.f32 %v3457, %v3427
        %v3459 = vadd.f32 %v3458, %v3428
        %v3460 = vadd.f32 %v3459, %v3429
        %v3461 = vrot.slane %v3460, 4
        %v3462 = vadd.f32 %v3460, %v3461
        %v3463 = vrot.slane %v3462, 2
        %v3464 = vadd.f32 %v3462, %v3463
        %v3465 = vrot.slane %v3464, 1
        %v3466 = vadd.f32 %v3464, %v3465
        %3467 = vst [vmem:[%s494] sm:$0x1] %v3466
        %s3468 = sand.u32 %s218, 1
        %s3469 = scalar_lea.sflag [#allocation5], %s3468
        %s3470 = sand.u32 %s218, 1
        %s3471 = smul.addr %s3470, 128
        %s3472 = scalar_lea.vmem [#allocation11], %s3471
        %s3473 = sand.u32 %s33, 1
        %s3474 = scalar_lea.sflag [#allocation13], %s3473
        %s3475 = sand.u32 %s246, 1
        %s3476 = scalar_lea.vmem [#allocation12], %s3475
        %s3477 = sand.u32 %s33, 1
        %s3478 = scalar_lea.sflag [#allocation13], %s3477
        %s3479 = sand.u32 %s274, 1
        %s3480 = scalar_lea.vmem [#allocation14], %s3479
        // Predicated region
        $region61: #{tpu_custom_call.1} parent=43 // pred_check
          %p3481 = pneg %p228
        $region62: #{tpu_custom_call.1} parent=43 // pred_check_branch
          %3483 = sbr.rel (%p3481) target = $region64
        $region63: #{tpu_custom_call.1} parent=43 // pred_region
          %s3484 = smul.u32 32, %s38
          %3486 = vsyncadd %s3469, 0
          %s3487 = smul.addr %s37, 32
          %s3488 = sadd.s32 %s3484, %s3487
          %s3489 = smul.addr %s3488, 4
          %s3490 = scalar_lea.hbm %s6, %s3489
          %s3491 = sshll.u32 %s3472, 4
          %s3492 = int_to_ptr.vmem [resolvable:$true] %s3491
          %s3493 = sshll.u32 %s3490, 4
          %s3494 = int_to_ptr.hbm [resolvable:$true] %s3493
          %3499 = dma.vmem_to_hbm [thread:$0]  %s3492, 2048, %s3494, %s3469, 64, 64, 4
        $region64: #{tpu_custom_call.1} parent=43 // pred_fallthru
          _
        // Predicated region
        $region65: #{tpu_custom_call.1} parent=43 // pred_check
          %p3500 = pneg %p256
        $region66: #{tpu_custom_call.1} parent=43 // pred_check_branch
          %3502 = sbr.rel (%p3500) target = $region68
        $region67: #{tpu_custom_call.1} parent=43 // pred_region
          %s3503 = sadd.s32 %s37, %s38
          %3505 = vsyncadd %s3474, 0
          %s3506 = scalar_lea.hbm %s7, %s3503
          %s3508 = sshll.u32 %s3476, 4
          %s3509 = int_to_ptr.vmem [resolvable:$true] %s3508
          %s3510 = sshll.u32 %s3506, 4
          %s3511 = int_to_ptr.hbm [resolvable:$true] %s3510
          %3513 = dma.vmem_to_hbm [thread:$0]  %s3509, 16, %s3511, %s3474
        $region68: #{tpu_custom_call.1} parent=43 // pred_fallthru
          _
        // Predicated region
        $region69: #{tpu_custom_call.1} parent=43 // pred_check
          %p3514 = pneg %p284
        $region70: #{tpu_custom_call.1} parent=43 // pred_check_branch
          %3516 = sbr.rel (%p3514) target = $region72
        $region71: #{tpu_custom_call.1} parent=43 // pred_region
          %s3517 = sadd.s32 %s37, %s38
          %3519 = vsyncadd %s3478, 0
          %s3520 = scalar_lea.hbm %s8, %s3517
          %s3522 = sshll.u32 %s3480, 4
          %s3523 = int_to_ptr.vmem [resolvable:$true] %s3522
          %s3524 = sshll.u32 %s3520, 4
          %s3525 = int_to_ptr.hbm [resolvable:$true] %s3524
          %3527 = dma.vmem_to_hbm [thread:$0]  %s3523, 16, %s3525, %s3478
        $region72: #{tpu_custom_call.1} parent=43 // pred_fallthru
          _
      $region44: #{tpu_custom_call.1} parent=5 // pred_fallthru
        _
      %p3528 = scmp.le.s32.totalorder 2, %s28
      // Predicated region
      $region73: #{tpu_custom_call.1} parent=5 // pred_check
        %p3529 = pneg %p3528
      $region74: #{tpu_custom_call.1} parent=5 // pred_check_branch
        %3531 = sbr.rel (%p3529) target = $region76
      $region75: #{tpu_custom_call.1} parent=5 // pred_region
        %s3532 = ssub.s32 %s28, 2
        // Predicated region
        $region77: #{tpu_custom_call.1} parent=75 // pred_check
          %p3533 = pneg %p234
        $region78: #{tpu_custom_call.1} parent=75 // pred_check_branch
          %3535 = sbr.rel (%p3533) target = $region80
        $region79: #{tpu_custom_call.1} parent=75 // pred_region
          %s3536 = sand.u32 %s219, 1
          %s3537 = scalar_lea.sflag [#allocation5], %s3536
          %s3538 = sand.u32 %s219, 1
          %s3539 = smul.addr %s3538, 128
          %s3540 = scalar_lea.vmem [#allocation11], %s3539
          %3542 = dma.done %s3537, 2048
        $region80: #{tpu_custom_call.1} parent=75 // pred_fallthru
          _
        // Predicated region
        $region81: #{tpu_custom_call.1} parent=75 // pred_check
          %p3543 = pneg %p262
        $region82: #{tpu_custom_call.1} parent=75 // pred_check_branch
          %3545 = sbr.rel (%p3543) target = $region84
        $region83: #{tpu_custom_call.1} parent=75 // pred_region
          %s3546 = sand.u32 %s34, 1
          %s3547 = scalar_lea.sflag [#allocation13], %s3546
          %s3548 = sand.u32 %s247, 1
          %s3549 = scalar_lea.vmem [#allocation12], %s3548
          %3551 = dma.done %s3547, 16
        $region84: #{tpu_custom_call.1} parent=75 // pred_fallthru
          _
        // Predicated region
        $region85: #{tpu_custom_call.1} parent=75 // pred_check
          %p3552 = pneg %p290
        $region86: #{tpu_custom_call.1} parent=75 // pred_check_branch
          %3554 = sbr.rel (%p3552) target = $region88
        $region87: #{tpu_custom_call.1} parent=75 // pred_region
          %s3555 = sand.u32 %s34, 1
          %s3556 = scalar_lea.sflag [#allocation13], %s3555
          %s3557 = sand.u32 %s275, 1
          %s3558 = scalar_lea.vmem [#allocation14], %s3557
          %3560 = dma.done %s3556, 16
        $region88: #{tpu_custom_call.1} parent=75 // pred_fallthru
          _
      $region76: #{tpu_custom_call.1} parent=5 // pred_fallthru
        _
    $region6: #{tpu_custom_call.1} parent=1 // loop_footer
      %s32 = sadd.s32 1, %s28
    $region7: #{tpu_custom_call.1} parent=1 // loop_footer_branch
      %27 = sbr.rel target = $region3
    $region8: #{tpu_custom_call.1} parent=1 // loop_exit
      _
    %3561 = vsyncpa [#allocation4], 1
    %s3562 = scalar_lea.sflag [#allocation4], 1
    %3563 = vsyncpa %s3562, 1
    %3564 = vsyncpa [#allocation7], 1
    %s3565 = scalar_lea.sflag [#allocation7], 1
    %3566 = vsyncpa %s3565, 1
    %3567 = vsyncpa [#allocation10], 1
    %3568 = vsyncpa [#allocation5], 1
    %s3569 = scalar_lea.sflag [#allocation5], 1
    %3570 = vsyncpa %s3569, 1
    %3571 = vsyncpa [#allocation13], 1
    %s3572 = scalar_lea.sflag [#allocation13], 1
    %3573 = vsyncpa %s3572, 1

</llo_original>
